<compile_context>
chip_gen: v7x
topology: tpu7x:2x2x1
jax: 0.10.0
libtpu: 0.0.40
codegen_flags: <defaults>
</compile_context>

<pallas_src>
import functools

import jax
import jax.numpy as jnp
from jax.experimental import pallas as pl
from jax.experimental.pallas import tpu as pltpu


def _cross_attention_kernel(xqk_ref, xv_ref, wqk_ref, wv_ref, wp_ref, bp_ref,
                            o_ref, *, n_heads, head_dim, batch_block, seq_len):
    D = n_heads * head_dim
    rows = batch_block * seq_len

    # Fold (batch_block, N) into one row dimension so the projection matmuls
    # present as many rows as possible to the MXU; bf16 operands, f32 accum.
    x_qk = xqk_ref[...].reshape(rows, D).astype(jnp.bfloat16)
    x_v = xv_ref[...].reshape(rows, D).astype(jnp.bfloat16)

    # Fused Q/K projection: one (rows, D) x (D, 2D) matmul. Scale is already
    # folded into the Q half of the weight. V projection separately.
    qk_all = jnp.dot(x_qk, wqk_ref[...], preferred_element_type=jnp.float32)
    v_all = jnp.dot(x_v, wv_ref[...], preferred_element_type=jnp.float32)

    q_all = qk_all[:, :D].astype(jnp.bfloat16)          # (rows, D)
    # Single transpose for all heads/batches so QK^T sees K as (Dh, N) and no
    # per-head cross-lane relayout is needed.
    kT_all = qk_all[:, D:].T.astype(jnp.bfloat16)       # (D, rows)
    v_all = v_all.astype(jnp.bfloat16)                  # (rows, D)

    bias = bp_ref[...]                                  # (1, D) f32

    # TODO(synk): attn_dropout / proj_dropout omitted (eval / inference mode).
    # NOTE: full (N, N) scores per head; for long sequences (N >~ 2k,
    # especially on v7x with 64 MiB VMEM) add flash-style KV tiling here.
    for b in range(batch_block):
        rs = slice(b * seq_len, (b + 1) * seq_len)
        acc = jnp.zeros((seq_len, D), jnp.float32)      # output-proj accumulator
        for h in range(n_heads):
            cs = slice(h * head_dim, (h + 1) * head_dim)
            q_h = q_all[rs, cs]                         # (N, Dh) bf16 (pre-scaled)
            kT_h = kT_all[cs, rs]                       # (Dh, N) bf16
            v_h = v_all[rs, cs]                         # (N, Dh) bf16

            s = jnp.dot(q_h, kT_h, preferred_element_type=jnp.float32)   # (N, N)
            s_max = jnp.max(s, axis=-1, keepdims=True)
            p = jnp.exp(s - s_max)                      # f32, unnormalized
            denom = jnp.sum(p, axis=-1, keepdims=True)  # (N, 1)

            y_h = jnp.dot(p.astype(jnp.bfloat16), v_h,
                          preferred_element_type=jnp.float32)            # (N, Dh)
            # Deferred softmax normalization on the small (N, Dh) tensor;
            # approx reciprocal runs on the otherwise idle EUP slot.
            y_h = y_h * pl.reciprocal(denom, approx=True)

            # Per-head output-projection accumulation (lane-dense, no masked
            # head_dim-wide scratch stores).
            acc = acc + jnp.dot(y_h.astype(jnp.bfloat16), wp_ref[cs, :],
                                preferred_element_type=jnp.float32)

        o_ref[b] = (acc + bias).astype(o_ref.dtype)


def _head_major_rows(w_rows: jax.Array, n_heads: int) -> jax.Array:
    """Permute rows from feature index f = d*n_heads + h ('(d h)') to h*head_dim + d."""
    d_total, c = w_rows.shape
    head_dim = d_total // n_heads
    return w_rows.reshape(head_dim, n_heads, c).transpose(1, 0, 2).reshape(
        d_total, c)


def _pick_batch_block(B: int, N: int, max_rows: int = 1024) -> int:
    """Largest divisor of B with Bb*N rows per grid step kept modest."""
    best = 1
    for cand in range(1, B + 1):
        if B % cand == 0 and cand * N <= max(max_rows, N):
            best = cand
    return best


@functools.partial(jax.jit, static_argnames=("n_heads",))
def cross_attention(qk: jax.Array, v: jax.Array, w_qk: jax.Array,
                    w_v: jax.Array, w_proj: jax.Array, b_proj: jax.Array,
                    *, n_heads: int) -> jax.Array:
    """CrossAttention forward.

    Args:
      qk:     (B, N, D) query/key source sequence.
      v:      (B, N, D) value source sequence.
      w_qk:   (2D, D) proj_qk weight (PyTorch Linear layout, no bias).
      w_v:    (D, D)  proj_v weight (no bias).
      w_proj: (D, D)  output proj weight.
      b_proj: (D,)    output proj bias.
    """
    B, N, D = qk.shape
    head_dim = D // n_heads
    scale = float(head_dim) ** -0.5

    # One-time weight prep (tiny (D, D) tensors): fold the 'b n (d h) -> b h n d'
    # head interleave into the projections, fold the 1/sqrt(head_dim) scale into
    # Wq, fuse Wq|Wk into one (D, 2D) matrix, and pre-cast weights to bf16.
    wq = _head_major_rows(w_qk[:D], n_heads).T * scale          # (D, D)
    wk = _head_major_rows(w_qk[D:], n_heads).T                  # (D, D)
    wqk_mat = jnp.concatenate([wq, wk], axis=1).astype(jnp.bfloat16)   # (D, 2D)
    wv_mat = _head_major_rows(w_v, n_heads).T.astype(jnp.bfloat16)     # (D, D)
    wp_mat = w_proj.T.astype(jnp.bfloat16)                             # (D, D)
    bp_mat = b_proj.reshape(1, D).astype(jnp.float32)

    Bb = _pick_batch_block(B, N)
    grid = (B // Bb,)

    kernel = functools.partial(_cross_attention_kernel, n_heads=n_heads,
                               head_dim=head_dim, batch_block=Bb, seq_len=N)

    flops = B * (8 * N * D * D + 4 * N * N * D)
    transcendentals = B * n_heads * N * N
    bytes_accessed = (4 * 3 * B * N * D          # f32 activations in/out
                      + 2 * (4 * D * D)          # bf16 weights
                      + 4 * D)                   # f32 bias

    return pl.pallas_call(
        kernel,
        out_shape=jax.ShapeDtypeStruct((B, N, D), qk.dtype),
        grid=grid,
        in_specs=[
            pl.BlockSpec((Bb, N, D), lambda b: (b, 0, 0)),     # qk activations
            pl.BlockSpec((Bb, N, D), lambda b: (b, 0, 0)),     # v activations
            pl.BlockSpec((D, 2 * D), lambda b: (0, 0)),        # fused Wq|Wk (resident)
            pl.BlockSpec((D, D), lambda b: (0, 0)),            # Wv (resident)
            pl.BlockSpec((D, D), lambda b: (0, 0)),            # Wproj (resident)
            pl.BlockSpec((1, D), lambda b: (0, 0)),            # bias (resident)
        ],
        out_specs=pl.BlockSpec((Bb, N, D), lambda b: (b, 0, 0)),
        compiler_params=pltpu.CompilerParams(
            dimension_semantics=("parallel",)),
        cost_estimate=pl.CostEstimate(flops=flops,
                                      transcendentals=transcendentals,
                                      bytes_accessed=bytes_accessed),
    )(qk, v, wqk_mat, wv_mat, wp_mat, bp_mat)


def _reference(qk, v, w_qk, w_v, w_proj, b_proj, n_heads):
    """Plain-JAX (f32) replica of the intended PyTorch forward."""
    B, N, D = qk.shape
    head_dim = D // n_heads
    qkp = qk @ w_qk.T                                   # (B, N, 2D)
    q, k = qkp[..., :D], qkp[..., D:]
    vp = v @ w_v.T

    def split_heads(x):  # 'b n (d h) -> b h n d'
        return x.reshape(B, N, head_dim, n_heads).transpose(0, 3, 1, 2)

    qh, kh, vh = split_heads(q), split_heads(k), split_heads(vp)
    scale = head_dim ** -0.5
    a = jnp.einsum("bhnd,bhmd->bhnm", qh, kh * scale)
    a = jax.nn.softmax(a, axis=-1)
    y = jnp.einsum("bhnm,bhmd->bhnd", a, vh)
    y = y.transpose(0, 2, 1, 3).reshape(B, N, D)        # 'b h n d -> b n (h d)'
    return y @ w_proj.T + b_proj


if __name__ == "__main__":
    key = jax.random.PRNGKey(0)
    k_qk, k_v, k_wqk, k_wv, k_wp, k_bp = jax.random.split(key, 6)

    # Small shapes consistent with the module: batch=2, seq=16,
    # embed_dim=128, n_heads=8 (head_dim=16).
    B, N, D, H = 2, 16, 128, 8

    qk = jax.random.normal(k_qk, (B, N, D), dtype=jnp.float32)
    v = jax.random.normal(k_v, (B, N, D), dtype=jnp.float32)

    w_scale = 1.0 / (D ** 0.5)
    w_qk = jax.random.normal(k_wqk, (2 * D, D), dtype=jnp.float32) * w_scale
    w_v = jax.random.normal(k_wv, (D, D), dtype=jnp.float32) * w_scale
    w_proj = jax.random.normal(k_wp, (D, D), dtype=jnp.float32) * w_scale
    b_proj = jax.random.normal(k_bp, (D,), dtype=jnp.float32) * 0.1

    out = cross_attention(qk, v, w_qk, w_v, w_proj, b_proj, n_heads=H)
    out = jax.block_until_ready(out)

    ref = _reference(qk, v, w_qk, w_v, w_proj, b_proj, H)
    assert out.shape == (B, N, D)
    # bf16 MXU operands (f32 accumulation) + approx reciprocal -> compare with
    # a bf16-appropriate tolerance against the f32 reference.
    max_err = float(jnp.max(jnp.abs(out - ref)))
    assert jnp.allclose(out, ref, atol=1e-1, rtol=1e-1), max_err

    print("KERNEL_OK")
</pallas_src>

<mosaic_0001>
module attributes {stable_mosaic.version = 11 : i64} {
  func.func @_cross_attention_kernel(%arg0: i32, %arg1: memref<2x16x128xf32, #tpu.memory_space<vmem>>, %arg2: memref<2x16x128xf32, #tpu.memory_space<vmem>>, %arg3: memref<128x256xbf16, #tpu.memory_space<vmem>>, %arg4: memref<128x128xbf16, #tpu.memory_space<vmem>>, %arg5: memref<128x128xbf16, #tpu.memory_space<vmem>>, %arg6: memref<1x128xf32, #tpu.memory_space<vmem>>, %arg7: memref<2x16x128xf32, #tpu.memory_space<vmem>>) attributes {dimension_semantics = [#tpu.dimension_semantics<parallel>], iteration_bounds = array<i64: 1>, scalar_prefetch = 0 : i64, scratch_operands = 0 : i64, tpu.core_type = #tpu.core_type<tc>, window_params = [{transform_indices = @transform_0, window_bounds = array<i64: 2, 16, 128>}, {transform_indices = @transform_1, window_bounds = array<i64: 2, 16, 128>}, {pipeline_mode = #tpu.pipeline_mode<synchronous>, transform_indices = @transform_2, window_bounds = array<i64: 128, 256>}, {pipeline_mode = #tpu.pipeline_mode<synchronous>, transform_indices = @transform_3, window_bounds = array<i64: 128, 128>}, {pipeline_mode = #tpu.pipeline_mode<synchronous>, transform_indices = @transform_4, window_bounds = array<i64: 128, 128>}, {pipeline_mode = #tpu.pipeline_mode<synchronous>, transform_indices = @transform_5, window_bounds = array<i64: 1, 128>}, {transform_indices = @transform_6, window_bounds = array<i64: 2, 16, 128>}]} {
    %c0 = arith.constant 0 : index
    %c0_0 = arith.constant 0 : index
    %c0_1 = arith.constant 0 : index
    %0 = vector.load %arg1[%c0, %c0_0, %c0_1] : memref<2x16x128xf32, #tpu.memory_space<vmem>>, vector<2x16x128xf32>
    %1 = vector.shape_cast %0 : vector<2x16x128xf32> to vector<32x128xf32>
    %2 = arith.truncf %1 : vector<32x128xf32> to vector<32x128xbf16>
    %c0_2 = arith.constant 0 : index
    %c0_3 = arith.constant 0 : index
    %c0_4 = arith.constant 0 : index
    %3 = vector.load %arg2[%c0_2, %c0_3, %c0_4] : memref<2x16x128xf32, #tpu.memory_space<vmem>>, vector<2x16x128xf32>
    %4 = vector.shape_cast %3 : vector<2x16x128xf32> to vector<32x128xf32>
    %5 = arith.truncf %4 : vector<32x128xf32> to vector<32x128xbf16>
    %c0_5 = arith.constant 0 : index
    %c0_6 = arith.constant 0 : index
    %6 = vector.load %arg3[%c0_5, %c0_6] : memref<128x256xbf16, #tpu.memory_space<vmem>>, vector<128x256xbf16>
    %cst = arith.constant dense<0.000000e+00> : vector<32x256xf32>
    %7 = tpu.matmul %2, %6, %cst {dimension_numbers = #tpu.dot_dimension_numbers<[1], [0], [0], [1], [0, 0, 1, 1], [], []>} : vector<32x128xbf16>, vector<128x256xbf16>, vector<32x256xf32> -> vector<32x256xf32>
    %c0_7 = arith.constant 0 : index
    %c0_8 = arith.constant 0 : index
    %8 = vector.load %arg4[%c0_7, %c0_8] : memref<128x128xbf16, #tpu.memory_space<vmem>>, vector<128x128xbf16>
    %cst_9 = arith.constant dense<0.000000e+00> : vector<32x128xf32>
    %9 = tpu.matmul %5, %8, %cst_9 {dimension_numbers = #tpu.dot_dimension_numbers<[1], [0], [0], [1], [0, 0, 1, 1], [], []>} : vector<32x128xbf16>, vector<128x128xbf16>, vector<32x128xf32> -> vector<32x128xf32>
    %10 = vector.extract_strided_slice %7 {offsets = [0, 0], sizes = [32, 128], strides = [1, 1]} : vector<32x256xf32> to vector<32x128xf32>
    %11 = arith.truncf %10 : vector<32x128xf32> to vector<32x128xbf16>
    %12 = vector.extract_strided_slice %7 {offsets = [0, 128], sizes = [32, 128], strides = [1, 1]} : vector<32x256xf32> to vector<32x128xf32>
    %13 = tpu.transpose %12, [1, 0] : vector<32x128xf32> -> vector<128x32xf32>
    %14 = arith.truncf %13 : vector<128x32xf32> to vector<128x32xbf16>
    %15 = arith.truncf %9 : vector<32x128xf32> to vector<32x128xbf16>
    %c0_10 = arith.constant 0 : index
    %c0_11 = arith.constant 0 : index
    %16 = vector.load %arg6[%c0_10, %c0_11] : memref<1x128xf32, #tpu.memory_space<vmem>>, vector<1x128xf32>
    %cst_12 = arith.constant 0.000000e+00 : f32
    %17 = vector.broadcast %cst_12 : f32 to vector<16x128xf32>
    %18 = vector.extract_strided_slice %11 {offsets = [0, 0], sizes = [16, 16], strides = [1, 1]} : vector<32x128xbf16> to vector<16x16xbf16>
    %19 = vector.extract_strided_slice %14 {offsets = [0, 0], sizes = [16, 16], strides = [1, 1]} : vector<128x32xbf16> to vector<16x16xbf16>
    %20 = vector.extract_strided_slice %15 {offsets = [0, 0], sizes = [16, 16], strides = [1, 1]} : vector<32x128xbf16> to vector<16x16xbf16>
    %cst_13 = arith.constant dense<0.000000e+00> : vector<16x16xf32>
    %21 = tpu.matmul %18, %19, %cst_13 {dimension_numbers = #tpu.dot_dimension_numbers<[1], [0], [0], [1], [0, 0, 1, 1], [], []>} : vector<16x16xbf16>, vector<16x16xbf16>, vector<16x16xf32> -> vector<16x16xf32>
    %cst_14 = arith.constant dense<0xFF800000> : vector<16xf32>
    %22 = vector.multi_reduction <maximumf>, %21, %cst_14 [1] : vector<16x16xf32> to vector<16xf32>
    %23 = vector.shape_cast %22 : vector<16xf32> to vector<16x1xf32>
    %24 = vector.broadcast %23 : vector<16x1xf32> to vector<16x16xf32>
    %25 = arith.subf %21, %24 : vector<16x16xf32>
    %26 = math.exp %25 : vector<16x16xf32>
    %cst_15 = arith.constant dense<0.000000e+00> : vector<16xf32>
    %27 = vector.multi_reduction <add>, %26, %cst_15 [1] : vector<16x16xf32> to vector<16xf32>
    %28 = vector.shape_cast %27 : vector<16xf32> to vector<16x1xf32>
    %29 = arith.truncf %26 : vector<16x16xf32> to vector<16x16xbf16>
    %cst_16 = arith.constant dense<0.000000e+00> : vector<16x16xf32>
    %30 = tpu.matmul %29, %20, %cst_16 {dimension_numbers = #tpu.dot_dimension_numbers<[1], [0], [0], [1], [0, 0, 1, 1], [], []>} : vector<16x16xbf16>, vector<16x16xbf16>, vector<16x16xf32> -> vector<16x16xf32>
    %31 = tpu.reciprocal %28 {approx = true} : vector<16x1xf32> -> vector<16x1xf32>
    %32 = vector.broadcast %31 : vector<16x1xf32> to vector<16x16xf32>
    %33 = arith.mulf %30, %32 : vector<16x16xf32>
    %34 = arith.truncf %33 : vector<16x16xf32> to vector<16x16xbf16>
    %c0_17 = arith.constant 0 : index
    %c0_18 = arith.constant 0 : index
    %35 = vector.load %arg5[%c0_17, %c0_18] : memref<128x128xbf16, #tpu.memory_space<vmem>>, vector<16x128xbf16>
    %cst_19 = arith.constant dense<0.000000e+00> : vector<16x128xf32>
    %36 = tpu.matmul %34, %35, %cst_19 {dimension_numbers = #tpu.dot_dimension_numbers<[1], [0], [0], [1], [0, 0, 1, 1], [], []>} : vector<16x16xbf16>, vector<16x128xbf16>, vector<16x128xf32> -> vector<16x128xf32>
    %37 = arith.addf %17, %36 : vector<16x128xf32>
    %38 = vector.extract_strided_slice %11 {offsets = [0, 16], sizes = [16, 16], strides = [1, 1]} : vector<32x128xbf16> to vector<16x16xbf16>
    %39 = vector.extract_strided_slice %14 {offsets = [16, 0], sizes = [16, 16], strides = [1, 1]} : vector<128x32xbf16> to vector<16x16xbf16>
    %40 = vector.extract_strided_slice %15 {offsets = [0, 16], sizes = [16, 16], strides = [1, 1]} : vector<32x128xbf16> to vector<16x16xbf16>
    %cst_20 = arith.constant dense<0.000000e+00> : vector<16x16xf32>
    %41 = tpu.matmul %38, %39, %cst_20 {dimension_numbers = #tpu.dot_dimension_numbers<[1], [0], [0], [1], [0, 0, 1, 1], [], []>} : vector<16x16xbf16>, vector<16x16xbf16>, vector<16x16xf32> -> vector<16x16xf32>
    %cst_21 = arith.constant dense<0xFF800000> : vector<16xf32>
    %42 = vector.multi_reduction <maximumf>, %41, %cst_21 [1] : vector<16x16xf32> to vector<16xf32>
    %43 = vector.shape_cast %42 : vector<16xf32> to vector<16x1xf32>
    %44 = vector.broadcast %43 : vector<16x1xf32> to vector<16x16xf32>
    %45 = arith.subf %41, %44 : vector<16x16xf32>
    %46 = math.exp %45 : vector<16x16xf32>
    %cst_22 = arith.constant dense<0.000000e+00> : vector<16xf32>
    %47 = vector.multi_reduction <add>, %46, %cst_22 [1] : vector<16x16xf32> to vector<16xf32>
    %48 = vector.shape_cast %47 : vector<16xf32> to vector<16x1xf32>
    %49 = arith.truncf %46 : vector<16x16xf32> to vector<16x16xbf16>
    %cst_23 = arith.constant dense<0.000000e+00> : vector<16x16xf32>
    %50 = tpu.matmul %49, %40, %cst_23 {dimension_numbers = #tpu.dot_dimension_numbers<[1], [0], [0], [1], [0, 0, 1, 1], [], []>} : vector<16x16xbf16>, vector<16x16xbf16>, vector<16x16xf32> -> vector<16x16xf32>
    %51 = tpu.reciprocal %48 {approx = true} : vector<16x1xf32> -> vector<16x1xf32>
    %52 = vector.broadcast %51 : vector<16x1xf32> to vector<16x16xf32>
    %53 = arith.mulf %50, %52 : vector<16x16xf32>
    %54 = arith.truncf %53 : vector<16x16xf32> to vector<16x16xbf16>
    %c16 = arith.constant 16 : index
    %c0_24 = arith.constant 0 : index
    %55 = vector.load %arg5[%c16, %c0_24] : memref<128x128xbf16, #tpu.memory_space<vmem>>, vector<16x128xbf16>
    %cst_25 = arith.constant dense<0.000000e+00> : vector<16x128xf32>
    %56 = tpu.matmul %54, %55, %cst_25 {dimension_numbers = #tpu.dot_dimension_numbers<[1], [0], [0], [1], [0, 0, 1, 1], [], []>} : vector<16x16xbf16>, vector<16x128xbf16>, vector<16x128xf32> -> vector<16x128xf32>
    %57 = arith.addf %37, %56 : vector<16x128xf32>
    %58 = vector.extract_strided_slice %11 {offsets = [0, 32], sizes = [16, 16], strides = [1, 1]} : vector<32x128xbf16> to vector<16x16xbf16>
    %59 = vector.extract_strided_slice %14 {offsets = [32, 0], sizes = [16, 16], strides = [1, 1]} : vector<128x32xbf16> to vector<16x16xbf16>
    %60 = vector.extract_strided_slice %15 {offsets = [0, 32], sizes = [16, 16], strides = [1, 1]} : vector<32x128xbf16> to vector<16x16xbf16>
    %cst_26 = arith.constant dense<0.000000e+00> : vector<16x16xf32>
    %61 = tpu.matmul %58, %59, %cst_26 {dimension_numbers = #tpu.dot_dimension_numbers<[1], [0], [0], [1], [0, 0, 1, 1], [], []>} : vector<16x16xbf16>, vector<16x16xbf16>, vector<16x16xf32> -> vector<16x16xf32>
    %cst_27 = arith.constant dense<0xFF800000> : vector<16xf32>
    %62 = vector.multi_reduction <maximumf>, %61, %cst_27 [1] : vector<16x16xf32> to vector<16xf32>
    %63 = vector.shape_cast %62 : vector<16xf32> to vector<16x1xf32>
    %64 = vector.broadcast %63 : vector<16x1xf32> to vector<16x16xf32>
    %65 = arith.subf %61, %64 : vector<16x16xf32>
    %66 = math.exp %65 : vector<16x16xf32>
    %cst_28 = arith.constant dense<0.000000e+00> : vector<16xf32>
    %67 = vector.multi_reduction <add>, %66, %cst_28 [1] : vector<16x16xf32> to vector<16xf32>
    %68 = vector.shape_cast %67 : vector<16xf32> to vector<16x1xf32>
    %69 = arith.truncf %66 : vector<16x16xf32> to vector<16x16xbf16>
    %cst_29 = arith.constant dense<0.000000e+00> : vector<16x16xf32>
    %70 = tpu.matmul %69, %60, %cst_29 {dimension_numbers = #tpu.dot_dimension_numbers<[1], [0], [0], [1], [0, 0, 1, 1], [], []>} : vector<16x16xbf16>, vector<16x16xbf16>, vector<16x16xf32> -> vector<16x16xf32>
    %71 = tpu.reciprocal %68 {approx = true} : vector<16x1xf32> -> vector<16x1xf32>
    %72 = vector.broadcast %71 : vector<16x1xf32> to vector<16x16xf32>
    %73 = arith.mulf %70, %72 : vector<16x16xf32>
    %74 = arith.truncf %73 : vector<16x16xf32> to vector<16x16xbf16>
    %c32 = arith.constant 32 : index
    %c0_30 = arith.constant 0 : index
    %75 = vector.load %arg5[%c32, %c0_30] : memref<128x128xbf16, #tpu.memory_space<vmem>>, vector<16x128xbf16>
    %cst_31 = arith.constant dense<0.000000e+00> : vector<16x128xf32>
    %76 = tpu.matmul %74, %75, %cst_31 {dimension_numbers = #tpu.dot_dimension_numbers<[1], [0], [0], [1], [0, 0, 1, 1], [], []>} : vector<16x16xbf16>, vector<16x128xbf16>, vector<16x128xf32> -> vector<16x128xf32>
    %77 = arith.addf %57, %76 : vector<16x128xf32>
    %78 = vector.extract_strided_slice %11 {offsets = [0, 48], sizes = [16, 16], strides = [1, 1]} : vector<32x128xbf16> to vector<16x16xbf16>
    %79 = vector.extract_strided_slice %14 {offsets = [48, 0], sizes = [16, 16], strides = [1, 1]} : vector<128x32xbf16> to vector<16x16xbf16>
    %80 = vector.extract_strided_slice %15 {offsets = [0, 48], sizes = [16, 16], strides = [1, 1]} : vector<32x128xbf16> to vector<16x16xbf16>
    %cst_32 = arith.constant dense<0.000000e+00> : vector<16x16xf32>
    %81 = tpu.matmul %78, %79, %cst_32 {dimension_numbers = #tpu.dot_dimension_numbers<[1], [0], [0], [1], [0, 0, 1, 1], [], []>} : vector<16x16xbf16>, vector<16x16xbf16>, vector<16x16xf32> -> vector<16x16xf32>
    %cst_33 = arith.constant dense<0xFF800000> : vector<16xf32>
    %82 = vector.multi_reduction <maximumf>, %81, %cst_33 [1] : vector<16x16xf32> to vector<16xf32>
    %83 = vector.shape_cast %82 : vector<16xf32> to vector<16x1xf32>
    %84 = vector.broadcast %83 : vector<16x1xf32> to vector<16x16xf32>
    %85 = arith.subf %81, %84 : vector<16x16xf32>
    %86 = math.exp %85 : vector<16x16xf32>
    %cst_34 = arith.constant dense<0.000000e+00> : vector<16xf32>
    %87 = vector.multi_reduction <add>, %86, %cst_34 [1] : vector<16x16xf32> to vector<16xf32>
    %88 = vector.shape_cast %87 : vector<16xf32> to vector<16x1xf32>
    %89 = arith.truncf %86 : vector<16x16xf32> to vector<16x16xbf16>
    %cst_35 = arith.constant dense<0.000000e+00> : vector<16x16xf32>
    %90 = tpu.matmul %89, %80, %cst_35 {dimension_numbers = #tpu.dot_dimension_numbers<[1], [0], [0], [1], [0, 0, 1, 1], [], []>} : vector<16x16xbf16>, vector<16x16xbf16>, vector<16x16xf32> -> vector<16x16xf32>
    %91 = tpu.reciprocal %88 {approx = true} : vector<16x1xf32> -> vector<16x1xf32>
    %92 = vector.broadcast %91 : vector<16x1xf32> to vector<16x16xf32>
    %93 = arith.mulf %90, %92 : vector<16x16xf32>
    %94 = arith.truncf %93 : vector<16x16xf32> to vector<16x16xbf16>
    %c48 = arith.constant 48 : index
    %c0_36 = arith.constant 0 : index
    %95 = vector.load %arg5[%c48, %c0_36] : memref<128x128xbf16, #tpu.memory_space<vmem>>, vector<16x128xbf16>
    %cst_37 = arith.constant dense<0.000000e+00> : vector<16x128xf32>
    %96 = tpu.matmul %94, %95, %cst_37 {dimension_numbers = #tpu.dot_dimension_numbers<[1], [0], [0], [1], [0, 0, 1, 1], [], []>} : vector<16x16xbf16>, vector<16x128xbf16>, vector<16x128xf32> -> vector<16x128xf32>
    %97 = arith.addf %77, %96 : vector<16x128xf32>
    %98 = vector.extract_strided_slice %11 {offsets = [0, 64], sizes = [16, 16], strides = [1, 1]} : vector<32x128xbf16> to vector<16x16xbf16>
    %99 = vector.extract_strided_slice %14 {offsets = [64, 0], sizes = [16, 16], strides = [1, 1]} : vector<128x32xbf16> to vector<16x16xbf16>
    %100 = vector.extract_strided_slice %15 {offsets = [0, 64], sizes = [16, 16], strides = [1, 1]} : vector<32x128xbf16> to vector<16x16xbf16>
    %cst_38 = arith.constant dense<0.000000e+00> : vector<16x16xf32>
    %101 = tpu.matmul %98, %99, %cst_38 {dimension_numbers = #tpu.dot_dimension_numbers<[1], [0], [0], [1], [0, 0, 1, 1], [], []>} : vector<16x16xbf16>, vector<16x16xbf16>, vector<16x16xf32> -> vector<16x16xf32>
    %cst_39 = arith.constant dense<0xFF800000> : vector<16xf32>
    %102 = vector.multi_reduction <maximumf>, %101, %cst_39 [1] : vector<16x16xf32> to vector<16xf32>
    %103 = vector.shape_cast %102 : vector<16xf32> to vector<16x1xf32>
    %104 = vector.broadcast %103 : vector<16x1xf32> to vector<16x16xf32>
    %105 = arith.subf %101, %104 : vector<16x16xf32>
    %106 = math.exp %105 : vector<16x16xf32>
    %cst_40 = arith.constant dense<0.000000e+00> : vector<16xf32>
    %107 = vector.multi_reduction <add>, %106, %cst_40 [1] : vector<16x16xf32> to vector<16xf32>
    %108 = vector.shape_cast %107 : vector<16xf32> to vector<16x1xf32>
    %109 = arith.truncf %106 : vector<16x16xf32> to vector<16x16xbf16>
    %cst_41 = arith.constant dense<0.000000e+00> : vector<16x16xf32>
    %110 = tpu.matmul %109, %100, %cst_41 {dimension_numbers = #tpu.dot_dimension_numbers<[1], [0], [0], [1], [0, 0, 1, 1], [], []>} : vector<16x16xbf16>, vector<16x16xbf16>, vector<16x16xf32> -> vector<16x16xf32>
    %111 = tpu.reciprocal %108 {approx = true} : vector<16x1xf32> -> vector<16x1xf32>
    %112 = vector.broadcast %111 : vector<16x1xf32> to vector<16x16xf32>
    %113 = arith.mulf %110, %112 : vector<16x16xf32>
    %114 = arith.truncf %113 : vector<16x16xf32> to vector<16x16xbf16>
    %c64 = arith.constant 64 : index
    %c0_42 = arith.constant 0 : index
    %115 = vector.load %arg5[%c64, %c0_42] : memref<128x128xbf16, #tpu.memory_space<vmem>>, vector<16x128xbf16>
    %cst_43 = arith.constant dense<0.000000e+00> : vector<16x128xf32>
    %116 = tpu.matmul %114, %115, %cst_43 {dimension_numbers = #tpu.dot_dimension_numbers<[1], [0], [0], [1], [0, 0, 1, 1], [], []>} : vector<16x16xbf16>, vector<16x128xbf16>, vector<16x128xf32> -> vector<16x128xf32>
    %117 = arith.addf %97, %116 : vector<16x128xf32>
    %118 = vector.extract_strided_slice %11 {offsets = [0, 80], sizes = [16, 16], strides = [1, 1]} : vector<32x128xbf16> to vector<16x16xbf16>
    %119 = vector.extract_strided_slice %14 {offsets = [80, 0], sizes = [16, 16], strides = [1, 1]} : vector<128x32xbf16> to vector<16x16xbf16>
    %120 = vector.extract_strided_slice %15 {offsets = [0, 80], sizes = [16, 16], strides = [1, 1]} : vector<32x128xbf16> to vector<16x16xbf16>
    %cst_44 = arith.constant dense<0.000000e+00> : vector<16x16xf32>
    %121 = tpu.matmul %118, %119, %cst_44 {dimension_numbers = #tpu.dot_dimension_numbers<[1], [0], [0], [1], [0, 0, 1, 1], [], []>} : vector<16x16xbf16>, vector<16x16xbf16>, vector<16x16xf32> -> vector<16x16xf32>
    %cst_45 = arith.constant dense<0xFF800000> : vector<16xf32>
    %122 = vector.multi_reduction <maximumf>, %121, %cst_45 [1] : vector<16x16xf32> to vector<16xf32>
    %123 = vector.shape_cast %122 : vector<16xf32> to vector<16x1xf32>
    %124 = vector.broadcast %123 : vector<16x1xf32> to vector<16x16xf32>
    %125 = arith.subf %121, %124 : vector<16x16xf32>
    %126 = math.exp %125 : vector<16x16xf32>
    %cst_46 = arith.constant dense<0.000000e+00> : vector<16xf32>
    %127 = vector.multi_reduction <add>, %126, %cst_46 [1] : vector<16x16xf32> to vector<16xf32>
    %128 = vector.shape_cast %127 : vector<16xf32> to vector<16x1xf32>
    %129 = arith.truncf %126 : vector<16x16xf32> to vector<16x16xbf16>
    %cst_47 = arith.constant dense<0.000000e+00> : vector<16x16xf32>
    %130 = tpu.matmul %129, %120, %cst_47 {dimension_numbers = #tpu.dot_dimension_numbers<[1], [0], [0], [1], [0, 0, 1, 1], [], []>} : vector<16x16xbf16>, vector<16x16xbf16>, vector<16x16xf32> -> vector<16x16xf32>
    %131 = tpu.reciprocal %128 {approx = true} : vector<16x1xf32> -> vector<16x1xf32>
    %132 = vector.broadcast %131 : vector<16x1xf32> to vector<16x16xf32>
    %133 = arith.mulf %130, %132 : vector<16x16xf32>
    %134 = arith.truncf %133 : vector<16x16xf32> to vector<16x16xbf16>
    %c80 = arith.constant 80 : index
    %c0_48 = arith.constant 0 : index
    %135 = vector.load %arg5[%c80, %c0_48] : memref<128x128xbf16, #tpu.memory_space<vmem>>, vector<16x128xbf16>
    %cst_49 = arith.constant dense<0.000000e+00> : vector<16x128xf32>
    %136 = tpu.matmul %134, %135, %cst_49 {dimension_numbers = #tpu.dot_dimension_numbers<[1], [0], [0], [1], [0, 0, 1, 1], [], []>} : vector<16x16xbf16>, vector<16x128xbf16>, vector<16x128xf32> -> vector<16x128xf32>
    %137 = arith.addf %117, %136 : vector<16x128xf32>
    %138 = vector.extract_strided_slice %11 {offsets = [0, 96], sizes = [16, 16], strides = [1, 1]} : vector<32x128xbf16> to vector<16x16xbf16>
    %139 = vector.extract_strided_slice %14 {offsets = [96, 0], sizes = [16, 16], strides = [1, 1]} : vector<128x32xbf16> to vector<16x16xbf16>
    %140 = vector.extract_strided_slice %15 {offsets = [0, 96], sizes = [16, 16], strides = [1, 1]} : vector<32x128xbf16> to vector<16x16xbf16>
    %cst_50 = arith.constant dense<0.000000e+00> : vector<16x16xf32>
    %141 = tpu.matmul %138, %139, %cst_50 {dimension_numbers = #tpu.dot_dimension_numbers<[1], [0], [0], [1], [0, 0, 1, 1], [], []>} : vector<16x16xbf16>, vector<16x16xbf16>, vector<16x16xf32> -> vector<16x16xf32>
    %cst_51 = arith.constant dense<0xFF800000> : vector<16xf32>
    %142 = vector.multi_reduction <maximumf>, %141, %cst_51 [1] : vector<16x16xf32> to vector<16xf32>
    %143 = vector.shape_cast %142 : vector<16xf32> to vector<16x1xf32>
    %144 = vector.broadcast %143 : vector<16x1xf32> to vector<16x16xf32>
    %145 = arith.subf %141, %144 : vector<16x16xf32>
    %146 = math.exp %145 : vector<16x16xf32>
    %cst_52 = arith.constant dense<0.000000e+00> : vector<16xf32>
    %147 = vector.multi_reduction <add>, %146, %cst_52 [1] : vector<16x16xf32> to vector<16xf32>
    %148 = vector.shape_cast %147 : vector<16xf32> to vector<16x1xf32>
    %149 = arith.truncf %146 : vector<16x16xf32> to vector<16x16xbf16>
    %cst_53 = arith.constant dense<0.000000e+00> : vector<16x16xf32>
    %150 = tpu.matmul %149, %140, %cst_53 {dimension_numbers = #tpu.dot_dimension_numbers<[1], [0], [0], [1], [0, 0, 1, 1], [], []>} : vector<16x16xbf16>, vector<16x16xbf16>, vector<16x16xf32> -> vector<16x16xf32>
    %151 = tpu.reciprocal %148 {approx = true} : vector<16x1xf32> -> vector<16x1xf32>
    %152 = vector.broadcast %151 : vector<16x1xf32> to vector<16x16xf32>
    %153 = arith.mulf %150, %152 : vector<16x16xf32>
    %154 = arith.truncf %153 : vector<16x16xf32> to vector<16x16xbf16>
    %c96 = arith.constant 96 : index
    %c0_54 = arith.constant 0 : index
    %155 = vector.load %arg5[%c96, %c0_54] : memref<128x128xbf16, #tpu.memory_space<vmem>>, vector<16x128xbf16>
    %cst_55 = arith.constant dense<0.000000e+00> : vector<16x128xf32>
    %156 = tpu.matmul %154, %155, %cst_55 {dimension_numbers = #tpu.dot_dimension_numbers<[1], [0], [0], [1], [0, 0, 1, 1], [], []>} : vector<16x16xbf16>, vector<16x128xbf16>, vector<16x128xf32> -> vector<16x128xf32>
    %157 = arith.addf %137, %156 : vector<16x128xf32>
    %158 = vector.extract_strided_slice %11 {offsets = [0, 112], sizes = [16, 16], strides = [1, 1]} : vector<32x128xbf16> to vector<16x16xbf16>
    %159 = vector.extract_strided_slice %14 {offsets = [112, 0], sizes = [16, 16], strides = [1, 1]} : vector<128x32xbf16> to vector<16x16xbf16>
    %160 = vector.extract_strided_slice %15 {offsets = [0, 112], sizes = [16, 16], strides = [1, 1]} : vector<32x128xbf16> to vector<16x16xbf16>
    %cst_56 = arith.constant dense<0.000000e+00> : vector<16x16xf32>
    %161 = tpu.matmul %158, %159, %cst_56 {dimension_numbers = #tpu.dot_dimension_numbers<[1], [0], [0], [1], [0, 0, 1, 1], [], []>} : vector<16x16xbf16>, vector<16x16xbf16>, vector<16x16xf32> -> vector<16x16xf32>
    %cst_57 = arith.constant dense<0xFF800000> : vector<16xf32>
    %162 = vector.multi_reduction <maximumf>, %161, %cst_57 [1] : vector<16x16xf32> to vector<16xf32>
    %163 = vector.shape_cast %162 : vector<16xf32> to vector<16x1xf32>
    %164 = vector.broadcast %163 : vector<16x1xf32> to vector<16x16xf32>
    %165 = arith.subf %161, %164 : vector<16x16xf32>
    %166 = math.exp %165 : vector<16x16xf32>
    %cst_58 = arith.constant dense<0.000000e+00> : vector<16xf32>
    %167 = vector.multi_reduction <add>, %166, %cst_58 [1] : vector<16x16xf32> to vector<16xf32>
    %168 = vector.shape_cast %167 : vector<16xf32> to vector<16x1xf32>
    %169 = arith.truncf %166 : vector<16x16xf32> to vector<16x16xbf16>
    %cst_59 = arith.constant dense<0.000000e+00> : vector<16x16xf32>
    %170 = tpu.matmul %169, %160, %cst_59 {dimension_numbers = #tpu.dot_dimension_numbers<[1], [0], [0], [1], [0, 0, 1, 1], [], []>} : vector<16x16xbf16>, vector<16x16xbf16>, vector<16x16xf32> -> vector<16x16xf32>
    %171 = tpu.reciprocal %168 {approx = true} : vector<16x1xf32> -> vector<16x1xf32>
    %172 = vector.broadcast %171 : vector<16x1xf32> to vector<16x16xf32>
    %173 = arith.mulf %170, %172 : vector<16x16xf32>
    %174 = arith.truncf %173 : vector<16x16xf32> to vector<16x16xbf16>
    %c112 = arith.constant 112 : index
    %c0_60 = arith.constant 0 : index
    %175 = vector.load %arg5[%c112, %c0_60] : memref<128x128xbf16, #tpu.memory_space<vmem>>, vector<16x128xbf16>
    %cst_61 = arith.constant dense<0.000000e+00> : vector<16x128xf32>
    %176 = tpu.matmul %174, %175, %cst_61 {dimension_numbers = #tpu.dot_dimension_numbers<[1], [0], [0], [1], [0, 0, 1, 1], [], []>} : vector<16x16xbf16>, vector<16x128xbf16>, vector<16x128xf32> -> vector<16x128xf32>
    %177 = arith.addf %157, %176 : vector<16x128xf32>
    %178 = vector.broadcast %16 : vector<1x128xf32> to vector<16x128xf32>
    %179 = arith.addf %177, %178 : vector<16x128xf32>
    %c0_62 = arith.constant 0 : index
    %c0_63 = arith.constant 0 : index
    %c0_64 = arith.constant 0 : index
    %180 = vector.load %arg7[%c0_62, %c0_63, %c0_64] : memref<2x16x128xf32, #tpu.memory_space<vmem>>, vector<1x16x128xf32>
    %181 = vector.shape_cast %180 : vector<1x16x128xf32> to vector<16x128xf32>
    %182 = vector.shape_cast %179 : vector<16x128xf32> to vector<1x16x128xf32>
    tpu.vector_store %arg7[%c0_62, %c0_63, %c0_64], %182 {strides = array<i32>} : memref<2x16x128xf32, #tpu.memory_space<vmem>>, vector<1x16x128xf32>,
    %cst_65 = arith.constant 0.000000e+00 : f32
    %183 = vector.broadcast %cst_65 : f32 to vector<16x128xf32>
    %184 = vector.extract_strided_slice %11 {offsets = [16, 0], sizes = [16, 16], strides = [1, 1]} : vector<32x128xbf16> to vector<16x16xbf16>
    %185 = vector.extract_strided_slice %14 {offsets = [0, 16], sizes = [16, 16], strides = [1, 1]} : vector<128x32xbf16> to vector<16x16xbf16>
    %186 = vector.extract_strided_slice %15 {offsets = [16, 0], sizes = [16, 16], strides = [1, 1]} : vector<32x128xbf16> to vector<16x16xbf16>
    %cst_66 = arith.constant dense<0.000000e+00> : vector<16x16xf32>
    %187 = tpu.matmul %184, %185, %cst_66 {dimension_numbers = #tpu.dot_dimension_numbers<[1], [0], [0], [1], [0, 0, 1, 1], [], []>} : vector<16x16xbf16>, vector<16x16xbf16>, vector<16x16xf32> -> vector<16x16xf32>
    %cst_67 = arith.constant dense<0xFF800000> : vector<16xf32>
    %188 = vector.multi_reduction <maximumf>, %187, %cst_67 [1] : vector<16x16xf32> to vector<16xf32>
    %189 = vector.shape_cast %188 : vector<16xf32> to vector<16x1xf32>
    %190 = vector.broadcast %189 : vector<16x1xf32> to vector<16x16xf32>
    %191 = arith.subf %187, %190 : vector<16x16xf32>
    %192 = math.exp %191 : vector<16x16xf32>
    %cst_68 = arith.constant dense<0.000000e+00> : vector<16xf32>
    %193 = vector.multi_reduction <add>, %192, %cst_68 [1] : vector<16x16xf32> to vector<16xf32>
    %194 = vector.shape_cast %193 : vector<16xf32> to vector<16x1xf32>
    %195 = arith.truncf %192 : vector<16x16xf32> to vector<16x16xbf16>
    %cst_69 = arith.constant dense<0.000000e+00> : vector<16x16xf32>
    %196 = tpu.matmul %195, %186, %cst_69 {dimension_numbers = #tpu.dot_dimension_numbers<[1], [0], [0], [1], [0, 0, 1, 1], [], []>} : vector<16x16xbf16>, vector<16x16xbf16>, vector<16x16xf32> -> vector<16x16xf32>
    %197 = tpu.reciprocal %194 {approx = true} : vector<16x1xf32> -> vector<16x1xf32>
    %198 = vector.broadcast %197 : vector<16x1xf32> to vector<16x16xf32>
    %199 = arith.mulf %196, %198 : vector<16x16xf32>
    %200 = arith.truncf %199 : vector<16x16xf32> to vector<16x16xbf16>
    %c0_70 = arith.constant 0 : index
    %c0_71 = arith.constant 0 : index
    %201 = vector.load %arg5[%c0_70, %c0_71] : memref<128x128xbf16, #tpu.memory_space<vmem>>, vector<16x128xbf16>
    %cst_72 = arith.constant dense<0.000000e+00> : vector<16x128xf32>
    %202 = tpu.matmul %200, %201, %cst_72 {dimension_numbers = #tpu.dot_dimension_numbers<[1], [0], [0], [1], [0, 0, 1, 1], [], []>} : vector<16x16xbf16>, vector<16x128xbf16>, vector<16x128xf32> -> vector<16x128xf32>
    %203 = arith.addf %183, %202 : vector<16x128xf32>
    %204 = vector.extract_strided_slice %11 {offsets = [16, 16], sizes = [16, 16], strides = [1, 1]} : vector<32x128xbf16> to vector<16x16xbf16>
    %205 = vector.extract_strided_slice %14 {offsets = [16, 16], sizes = [16, 16], strides = [1, 1]} : vector<128x32xbf16> to vector<16x16xbf16>
    %206 = vector.extract_strided_slice %15 {offsets = [16, 16], sizes = [16, 16], strides = [1, 1]} : vector<32x128xbf16> to vector<16x16xbf16>
    %cst_73 = arith.constant dense<0.000000e+00> : vector<16x16xf32>
    %207 = tpu.matmul %204, %205, %cst_73 {dimension_numbers = #tpu.dot_dimension_numbers<[1], [0], [0], [1], [0, 0, 1, 1], [], []>} : vector<16x16xbf16>, vector<16x16xbf16>, vector<16x16xf32> -> vector<16x16xf32>
    %cst_74 = arith.constant dense<0xFF800000> : vector<16xf32>
    %208 = vector.multi_reduction <maximumf>, %207, %cst_74 [1] : vector<16x16xf32> to vector<16xf32>
    %209 = vector.shape_cast %208 : vector<16xf32> to vector<16x1xf32>
    %210 = vector.broadcast %209 : vector<16x1xf32> to vector<16x16xf32>
    %211 = arith.subf %207, %210 : vector<16x16xf32>
    %212 = math.exp %211 : vector<16x16xf32>
    %cst_75 = arith.constant dense<0.000000e+00> : vector<16xf32>
    %213 = vector.multi_reduction <add>, %212, %cst_75 [1] : vector<16x16xf32> to vector<16xf32>
    %214 = vector.shape_cast %213 : vector<16xf32> to vector<16x1xf32>
    %215 = arith.truncf %212 : vector<16x16xf32> to vector<16x16xbf16>
    %cst_76 = arith.constant dense<0.000000e+00> : vector<16x16xf32>
    %216 = tpu.matmul %215, %206, %cst_76 {dimension_numbers = #tpu.dot_dimension_numbers<[1], [0], [0], [1], [0, 0, 1, 1], [], []>} : vector<16x16xbf16>, vector<16x16xbf16>, vector<16x16xf32> -> vector<16x16xf32>
    %217 = tpu.reciprocal %214 {approx = true} : vector<16x1xf32> -> vector<16x1xf32>
    %218 = vector.broadcast %217 : vector<16x1xf32> to vector<16x16xf32>
    %219 = arith.mulf %216, %218 : vector<16x16xf32>
    %220 = arith.truncf %219 : vector<16x16xf32> to vector<16x16xbf16>
    %c16_77 = arith.constant 16 : index
    %c0_78 = arith.constant 0 : index
    %221 = vector.load %arg5[%c16_77, %c0_78] : memref<128x128xbf16, #tpu.memory_space<vmem>>, vector<16x128xbf16>
    %cst_79 = arith.constant dense<0.000000e+00> : vector<16x128xf32>
    %222 = tpu.matmul %220, %221, %cst_79 {dimension_numbers = #tpu.dot_dimension_numbers<[1], [0], [0], [1], [0, 0, 1, 1], [], []>} : vector<16x16xbf16>, vector<16x128xbf16>, vector<16x128xf32> -> vector<16x128xf32>
    %223 = arith.addf %203, %222 : vector<16x128xf32>
    %224 = vector.extract_strided_slice %11 {offsets = [16, 32], sizes = [16, 16], strides = [1, 1]} : vector<32x128xbf16> to vector<16x16xbf16>
    %225 = vector.extract_strided_slice %14 {offsets = [32, 16], sizes = [16, 16], strides = [1, 1]} : vector<128x32xbf16> to vector<16x16xbf16>
    %226 = vector.extract_strided_slice %15 {offsets = [16, 32], sizes = [16, 16], strides = [1, 1]} : vector<32x128xbf16> to vector<16x16xbf16>
    %cst_80 = arith.constant dense<0.000000e+00> : vector<16x16xf32>
    %227 = tpu.matmul %224, %225, %cst_80 {dimension_numbers = #tpu.dot_dimension_numbers<[1], [0], [0], [1], [0, 0, 1, 1], [], []>} : vector<16x16xbf16>, vector<16x16xbf16>, vector<16x16xf32> -> vector<16x16xf32>
    %cst_81 = arith.constant dense<0xFF800000> : vector<16xf32>
    %228 = vector.multi_reduction <maximumf>, %227, %cst_81 [1] : vector<16x16xf32> to vector<16xf32>
    %229 = vector.shape_cast %228 : vector<16xf32> to vector<16x1xf32>
    %230 = vector.broadcast %229 : vector<16x1xf32> to vector<16x16xf32>
    %231 = arith.subf %227, %230 : vector<16x16xf32>
    %232 = math.exp %231 : vector<16x16xf32>
    %cst_82 = arith.constant dense<0.000000e+00> : vector<16xf32>
    %233 = vector.multi_reduction <add>, %232, %cst_82 [1] : vector<16x16xf32> to vector<16xf32>
    %234 = vector.shape_cast %233 : vector<16xf32> to vector<16x1xf32>
    %235 = arith.truncf %232 : vector<16x16xf32> to vector<16x16xbf16>
    %cst_83 = arith.constant dense<0.000000e+00> : vector<16x16xf32>
    %236 = tpu.matmul %235, %226, %cst_83 {dimension_numbers = #tpu.dot_dimension_numbers<[1], [0], [0], [1], [0, 0, 1, 1], [], []>} : vector<16x16xbf16>, vector<16x16xbf16>, vector<16x16xf32> -> vector<16x16xf32>
    %237 = tpu.reciprocal %234 {approx = true} : vector<16x1xf32> -> vector<16x1xf32>
    %238 = vector.broadcast %237 : vector<16x1xf32> to vector<16x16xf32>
    %239 = arith.mulf %236, %238 : vector<16x16xf32>
    %240 = arith.truncf %239 : vector<16x16xf32> to vector<16x16xbf16>
    %c32_84 = arith.constant 32 : index
    %c0_85 = arith.constant 0 : index
    %241 = vector.load %arg5[%c32_84, %c0_85] : memref<128x128xbf16, #tpu.memory_space<vmem>>, vector<16x128xbf16>
    %cst_86 = arith.constant dense<0.000000e+00> : vector<16x128xf32>
    %242 = tpu.matmul %240, %241, %cst_86 {dimension_numbers = #tpu.dot_dimension_numbers<[1], [0], [0], [1], [0, 0, 1, 1], [], []>} : vector<16x16xbf16>, vector<16x128xbf16>, vector<16x128xf32> -> vector<16x128xf32>
    %243 = arith.addf %223, %242 : vector<16x128xf32>
    %244 = vector.extract_strided_slice %11 {offsets = [16, 48], sizes = [16, 16], strides = [1, 1]} : vector<32x128xbf16> to vector<16x16xbf16>
    %245 = vector.extract_strided_slice %14 {offsets = [48, 16], sizes = [16, 16], strides = [1, 1]} : vector<128x32xbf16> to vector<16x16xbf16>
    %246 = vector.extract_strided_slice %15 {offsets = [16, 48], sizes = [16, 16], strides = [1, 1]} : vector<32x128xbf16> to vector<16x16xbf16>
    %cst_87 = arith.constant dense<0.000000e+00> : vector<16x16xf32>
    %247 = tpu.matmul %244, %245, %cst_87 {dimension_numbers = #tpu.dot_dimension_numbers<[1], [0], [0], [1], [0, 0, 1, 1], [], []>} : vector<16x16xbf16>, vector<16x16xbf16>, vector<16x16xf32> -> vector<16x16xf32>
    %cst_88 = arith.constant dense<0xFF800000> : vector<16xf32>
    %248 = vector.multi_reduction <maximumf>, %247, %cst_88 [1] : vector<16x16xf32> to vector<16xf32>
    %249 = vector.shape_cast %248 : vector<16xf32> to vector<16x1xf32>
    %250 = vector.broadcast %249 : vector<16x1xf32> to vector<16x16xf32>
    %251 = arith.subf %247, %250 : vector<16x16xf32>
    %252 = math.exp %251 : vector<16x16xf32>
    %cst_89 = arith.constant dense<0.000000e+00> : vector<16xf32>
    %253 = vector.multi_reduction <add>, %252, %cst_89 [1] : vector<16x16xf32> to vector<16xf32>
    %254 = vector.shape_cast %253 : vector<16xf32> to vector<16x1xf32>
    %255 = arith.truncf %252 : vector<16x16xf32> to vector<16x16xbf16>
    %cst_90 = arith.constant dense<0.000000e+00> : vector<16x16xf32>
    %256 = tpu.matmul %255, %246, %cst_90 {dimension_numbers = #tpu.dot_dimension_numbers<[1], [0], [0], [1], [0, 0, 1, 1], [], []>} : vector<16x16xbf16>, vector<16x16xbf16>, vector<16x16xf32> -> vector<16x16xf32>
    %257 = tpu.reciprocal %254 {approx = true} : vector<16x1xf32> -> vector<16x1xf32>
    %258 = vector.broadcast %257 : vector<16x1xf32> to vector<16x16xf32>
    %259 = arith.mulf %256, %258 : vector<16x16xf32>
    %260 = arith.truncf %259 : vector<16x16xf32> to vector<16x16xbf16>
    %c48_91 = arith.constant 48 : index
    %c0_92 = arith.constant 0 : index
    %261 = vector.load %arg5[%c48_91, %c0_92] : memref<128x128xbf16, #tpu.memory_space<vmem>>, vector<16x128xbf16>
    %cst_93 = arith.constant dense<0.000000e+00> : vector<16x128xf32>
    %262 = tpu.matmul %260, %261, %cst_93 {dimension_numbers = #tpu.dot_dimension_numbers<[1], [0], [0], [1], [0, 0, 1, 1], [], []>} : vector<16x16xbf16>, vector<16x128xbf16>, vector<16x128xf32> -> vector<16x128xf32>
    %263 = arith.addf %243, %262 : vector<16x128xf32>
    %264 = vector.extract_strided_slice %11 {offsets = [16, 64], sizes = [16, 16], strides = [1, 1]} : vector<32x128xbf16> to vector<16x16xbf16>
    %265 = vector.extract_strided_slice %14 {offsets = [64, 16], sizes = [16, 16], strides = [1, 1]} : vector<128x32xbf16> to vector<16x16xbf16>
    %266 = vector.extract_strided_slice %15 {offsets = [16, 64], sizes = [16, 16], strides = [1, 1]} : vector<32x128xbf16> to vector<16x16xbf16>
    %cst_94 = arith.constant dense<0.000000e+00> : vector<16x16xf32>
    %267 = tpu.matmul %264, %265, %cst_94 {dimension_numbers = #tpu.dot_dimension_numbers<[1], [0], [0], [1], [0, 0, 1, 1], [], []>} : vector<16x16xbf16>, vector<16x16xbf16>, vector<16x16xf32> -> vector<16x16xf32>
    %cst_95 = arith.constant dense<0xFF800000> : vector<16xf32>
    %268 = vector.multi_reduction <maximumf>, %267, %cst_95 [1] : vector<16x16xf32> to vector<16xf32>
    %269 = vector.shape_cast %268 : vector<16xf32> to vector<16x1xf32>
    %270 = vector.broadcast %269 : vector<16x1xf32> to vector<16x16xf32>
    %271 = arith.subf %267, %270 : vector<16x16xf32>
    %272 = math.exp %271 : vector<16x16xf32>
    %cst_96 = arith.constant dense<0.000000e+00> : vector<16xf32>
    %273 = vector.multi_reduction <add>, %272, %cst_96 [1] : vector<16x16xf32> to vector<16xf32>
    %274 = vector.shape_cast %273 : vector<16xf32> to vector<16x1xf32>
    %275 = arith.truncf %272 : vector<16x16xf32> to vector<16x16xbf16>
    %cst_97 = arith.constant dense<0.000000e+00> : vector<16x16xf32>
    %276 = tpu.matmul %275, %266, %cst_97 {dimension_numbers = #tpu.dot_dimension_numbers<[1], [0], [0], [1], [0, 0, 1, 1], [], []>} : vector<16x16xbf16>, vector<16x16xbf16>, vector<16x16xf32> -> vector<16x16xf32>
    %277 = tpu.reciprocal %274 {approx = true} : vector<16x1xf32> -> vector<16x1xf32>
    %278 = vector.broadcast %277 : vector<16x1xf32> to vector<16x16xf32>
    %279 = arith.mulf %276, %278 : vector<16x16xf32>
    %280 = arith.truncf %279 : vector<16x16xf32> to vector<16x16xbf16>
    %c64_98 = arith.constant 64 : index
    %c0_99 = arith.constant 0 : index
    %281 = vector.load %arg5[%c64_98, %c0_99] : memref<128x128xbf16, #tpu.memory_space<vmem>>, vector<16x128xbf16>
    %cst_100 = arith.constant dense<0.000000e+00> : vector<16x128xf32>
    %282 = tpu.matmul %280, %281, %cst_100 {dimension_numbers = #tpu.dot_dimension_numbers<[1], [0], [0], [1], [0, 0, 1, 1], [], []>} : vector<16x16xbf16>, vector<16x128xbf16>, vector<16x128xf32> -> vector<16x128xf32>
    %283 = arith.addf %263, %282 : vector<16x128xf32>
    %284 = vector.extract_strided_slice %11 {offsets = [16, 80], sizes = [16, 16], strides = [1, 1]} : vector<32x128xbf16> to vector<16x16xbf16>
    %285 = vector.extract_strided_slice %14 {offsets = [80, 16], sizes = [16, 16], strides = [1, 1]} : vector<128x32xbf16> to vector<16x16xbf16>
    %286 = vector.extract_strided_slice %15 {offsets = [16, 80], sizes = [16, 16], strides = [1, 1]} : vector<32x128xbf16> to vector<16x16xbf16>
    %cst_101 = arith.constant dense<0.000000e+00> : vector<16x16xf32>
    %287 = tpu.matmul %284, %285, %cst_101 {dimension_numbers = #tpu.dot_dimension_numbers<[1], [0], [0], [1], [0, 0, 1, 1], [], []>} : vector<16x16xbf16>, vector<16x16xbf16>, vector<16x16xf32> -> vector<16x16xf32>
    %cst_102 = arith.constant dense<0xFF800000> : vector<16xf32>
    %288 = vector.multi_reduction <maximumf>, %287, %cst_102 [1] : vector<16x16xf32> to vector<16xf32>
    %289 = vector.shape_cast %288 : vector<16xf32> to vector<16x1xf32>
    %290 = vector.broadcast %289 : vector<16x1xf32> to vector<16x16xf32>
    %291 = arith.subf %287, %290 : vector<16x16xf32>
    %292 = math.exp %291 : vector<16x16xf32>
    %cst_103 = arith.constant dense<0.000000e+00> : vector<16xf32>
    %293 = vector.multi_reduction <add>, %292, %cst_103 [1] : vector<16x16xf32> to vector<16xf32>
    %294 = vector.shape_cast %293 : vector<16xf32> to vector<16x1xf32>
    %295 = arith.truncf %292 : vector<16x16xf32> to vector<16x16xbf16>
    %cst_104 = arith.constant dense<0.000000e+00> : vector<16x16xf32>
    %296 = tpu.matmul %295, %286, %cst_104 {dimension_numbers = #tpu.dot_dimension_numbers<[1], [0], [0], [1], [0, 0, 1, 1], [], []>} : vector<16x16xbf16>, vector<16x16xbf16>, vector<16x16xf32> -> vector<16x16xf32>
    %297 = tpu.reciprocal %294 {approx = true} : vector<16x1xf32> -> vector<16x1xf32>
    %298 = vector.broadcast %297 : vector<16x1xf32> to vector<16x16xf32>
    %299 = arith.mulf %296, %298 : vector<16x16xf32>
    %300 = arith.truncf %299 : vector<16x16xf32> to vector<16x16xbf16>
    %c80_105 = arith.constant 80 : index
    %c0_106 = arith.constant 0 : index
    %301 = vector.load %arg5[%c80_105, %c0_106] : memref<128x128xbf16, #tpu.memory_space<vmem>>, vector<16x128xbf16>
    %cst_107 = arith.constant dense<0.000000e+00> : vector<16x128xf32>
    %302 = tpu.matmul %300, %301, %cst_107 {dimension_numbers = #tpu.dot_dimension_numbers<[1], [0], [0], [1], [0, 0, 1, 1], [], []>} : vector<16x16xbf16>, vector<16x128xbf16>, vector<16x128xf32> -> vector<16x128xf32>
    %303 = arith.addf %283, %302 : vector<16x128xf32>
    %304 = vector.extract_strided_slice %11 {offsets = [16, 96], sizes = [16, 16], strides = [1, 1]} : vector<32x128xbf16> to vector<16x16xbf16>
    %305 = vector.extract_strided_slice %14 {offsets = [96, 16], sizes = [16, 16], strides = [1, 1]} : vector<128x32xbf16> to vector<16x16xbf16>
    %306 = vector.extract_strided_slice %15 {offsets = [16, 96], sizes = [16, 16], strides = [1, 1]} : vector<32x128xbf16> to vector<16x16xbf16>
    %cst_108 = arith.constant dense<0.000000e+00> : vector<16x16xf32>
    %307 = tpu.matmul %304, %305, %cst_108 {dimension_numbers = #tpu.dot_dimension_numbers<[1], [0], [0], [1], [0, 0, 1, 1], [], []>} : vector<16x16xbf16>, vector<16x16xbf16>, vector<16x16xf32> -> vector<16x16xf32>
    %cst_109 = arith.constant dense<0xFF800000> : vector<16xf32>
    %308 = vector.multi_reduction <maximumf>, %307, %cst_109 [1] : vector<16x16xf32> to vector<16xf32>
    %309 = vector.shape_cast %308 : vector<16xf32> to vector<16x1xf32>
    %310 = vector.broadcast %309 : vector<16x1xf32> to vector<16x16xf32>
    %311 = arith.subf %307, %310 : vector<16x16xf32>
    %312 = math.exp %311 : vector<16x16xf32>
    %cst_110 = arith.constant dense<0.000000e+00> : vector<16xf32>
    %313 = vector.multi_reduction <add>, %312, %cst_110 [1] : vector<16x16xf32> to vector<16xf32>
    %314 = vector.shape_cast %313 : vector<16xf32> to vector<16x1xf32>
    %315 = arith.truncf %312 : vector<16x16xf32> to vector<16x16xbf16>
    %cst_111 = arith.constant dense<0.000000e+00> : vector<16x16xf32>
    %316 = tpu.matmul %315, %306, %cst_111 {dimension_numbers = #tpu.dot_dimension_numbers<[1], [0], [0], [1], [0, 0, 1, 1], [], []>} : vector<16x16xbf16>, vector<16x16xbf16>, vector<16x16xf32> -> vector<16x16xf32>
    %317 = tpu.reciprocal %314 {approx = true} : vector<16x1xf32> -> vector<16x1xf32>
    %318 = vector.broadcast %317 : vector<16x1xf32> to vector<16x16xf32>
    %319 = arith.mulf %316, %318 : vector<16x16xf32>
    %320 = arith.truncf %319 : vector<16x16xf32> to vector<16x16xbf16>
    %c96_112 = arith.constant 96 : index
    %c0_113 = arith.constant 0 : index
    %321 = vector.load %arg5[%c96_112, %c0_113] : memref<128x128xbf16, #tpu.memory_space<vmem>>, vector<16x128xbf16>
    %cst_114 = arith.constant dense<0.000000e+00> : vector<16x128xf32>
    %322 = tpu.matmul %320, %321, %cst_114 {dimension_numbers = #tpu.dot_dimension_numbers<[1], [0], [0], [1], [0, 0, 1, 1], [], []>} : vector<16x16xbf16>, vector<16x128xbf16>, vector<16x128xf32> -> vector<16x128xf32>
    %323 = arith.addf %303, %322 : vector<16x128xf32>
    %324 = vector.extract_strided_slice %11 {offsets = [16, 112], sizes = [16, 16], strides = [1, 1]} : vector<32x128xbf16> to vector<16x16xbf16>
    %325 = vector.extract_strided_slice %14 {offsets = [112, 16], sizes = [16, 16], strides = [1, 1]} : vector<128x32xbf16> to vector<16x16xbf16>
    %326 = vector.extract_strided_slice %15 {offsets = [16, 112], sizes = [16, 16], strides = [1, 1]} : vector<32x128xbf16> to vector<16x16xbf16>
    %cst_115 = arith.constant dense<0.000000e+00> : vector<16x16xf32>
    %327 = tpu.matmul %324, %325, %cst_115 {dimension_numbers = #tpu.dot_dimension_numbers<[1], [0], [0], [1], [0, 0, 1, 1], [], []>} : vector<16x16xbf16>, vector<16x16xbf16>, vector<16x16xf32> -> vector<16x16xf32>
    %cst_116 = arith.constant dense<0xFF800000> : vector<16xf32>
    %328 = vector.multi_reduction <maximumf>, %327, %cst_116 [1] : vector<16x16xf32> to vector<16xf32>
    %329 = vector.shape_cast %328 : vector<16xf32> to vector<16x1xf32>
    %330 = vector.broadcast %329 : vector<16x1xf32> to vector<16x16xf32>
    %331 = arith.subf %327, %330 : vector<16x16xf32>
    %332 = math.exp %331 : vector<16x16xf32>
    %cst_117 = arith.constant dense<0.000000e+00> : vector<16xf32>
    %333 = vector.multi_reduction <add>, %332, %cst_117 [1] : vector<16x16xf32> to vector<16xf32>
    %334 = vector.shape_cast %333 : vector<16xf32> to vector<16x1xf32>
    %335 = arith.truncf %332 : vector<16x16xf32> to vector<16x16xbf16>
    %cst_118 = arith.constant dense<0.000000e+00> : vector<16x16xf32>
    %336 = tpu.matmul %335, %326, %cst_118 {dimension_numbers = #tpu.dot_dimension_numbers<[1], [0], [0], [1], [0, 0, 1, 1], [], []>} : vector<16x16xbf16>, vector<16x16xbf16>, vector<16x16xf32> -> vector<16x16xf32>
    %337 = tpu.reciprocal %334 {approx = true} : vector<16x1xf32> -> vector<16x1xf32>
    %338 = vector.broadcast %337 : vector<16x1xf32> to vector<16x16xf32>
    %339 = arith.mulf %336, %338 : vector<16x16xf32>
    %340 = arith.truncf %339 : vector<16x16xf32> to vector<16x16xbf16>
    %c112_119 = arith.constant 112 : index
    %c0_120 = arith.constant 0 : index
    %341 = vector.load %arg5[%c112_119, %c0_120] : memref<128x128xbf16, #tpu.memory_space<vmem>>, vector<16x128xbf16>
    %cst_121 = arith.constant dense<0.000000e+00> : vector<16x128xf32>
    %342 = tpu.matmul %340, %341, %cst_121 {dimension_numbers = #tpu.dot_dimension_numbers<[1], [0], [0], [1], [0, 0, 1, 1], [], []>} : vector<16x16xbf16>, vector<16x128xbf16>, vector<16x128xf32> -> vector<16x128xf32>
    %343 = arith.addf %323, %342 : vector<16x128xf32>
    %344 = vector.broadcast %16 : vector<1x128xf32> to vector<16x128xf32>
    %345 = arith.addf %343, %344 : vector<16x128xf32>
    %c1 = arith.constant 1 : index
    %c0_122 = arith.constant 0 : index
    %c0_123 = arith.constant 0 : index
    %346 = vector.load %arg7[%c1, %c0_122, %c0_123] : memref<2x16x128xf32, #tpu.memory_space<vmem>>, vector<1x16x128xf32>
    %347 = vector.shape_cast %346 : vector<1x16x128xf32> to vector<16x128xf32>
    %348 = vector.shape_cast %345 : vector<16x128xf32> to vector<1x16x128xf32>
    tpu.vector_store %arg7[%c1, %c0_122, %c0_123], %348 {strides = array<i32>} : memref<2x16x128xf32, #tpu.memory_space<vmem>>, vector<1x16x128xf32>,
    return
  }
  func.func @transform_0(%arg0: i32) -> (i32, i32, i32) {
    %c0_i32 = arith.constant 0 : i32
    %c0_i32_0 = arith.constant 0 : i32
    %c0_i32_1 = arith.constant 0 : i32
    return %arg0, %c0_i32, %c0_i32_0 : i32, i32, i32
  }
  func.func @transform_1(%arg0: i32) -> (i32, i32, i32) {
    %c0_i32 = arith.constant 0 : i32
    %c0_i32_0 = arith.constant 0 : i32
    %c0_i32_1 = arith.constant 0 : i32
    return %arg0, %c0_i32, %c0_i32_0 : i32, i32, i32
  }
  func.func @transform_2(%arg0: i32) -> (i32, i32) {
    %c0_i32 = arith.constant 0 : i32
    %c0_i32_0 = arith.constant 0 : i32
    %c0_i32_1 = arith.constant 0 : i32
    return %c0_i32, %c0_i32_0 : i32, i32
  }
  func.func @transform_3(%arg0: i32) -> (i32, i32) {
    %c0_i32 = arith.constant 0 : i32
    %c0_i32_0 = arith.constant 0 : i32
    %c0_i32_1 = arith.constant 0 : i32
    return %c0_i32, %c0_i32_0 : i32, i32
  }
  func.func @transform_4(%arg0: i32) -> (i32, i32) {
    %c0_i32 = arith.constant 0 : i32
    %c0_i32_0 = arith.constant 0 : i32
    %c0_i32_1 = arith.constant 0 : i32
    return %c0_i32, %c0_i32_0 : i32, i32
  }
  func.func @transform_5(%arg0: i32) -> (i32, i32) {
    %c0_i32 = arith.constant 0 : i32
    %c0_i32_0 = arith.constant 0 : i32
    %c0_i32_1 = arith.constant 0 : i32
    return %c0_i32, %c0_i32_0 : i32, i32
  }
  func.func @transform_6(%arg0: i32) -> (i32, i32, i32) {
    %c0_i32 = arith.constant 0 : i32
    %c0_i32_0 = arith.constant 0 : i32
    %c0_i32_1 = arith.constant 0 : i32
    return %arg0, %c0_i32, %c0_i32_0 : i32, i32, i32
  }
}

</mosaic_0001>

<llo_original>
// kernel: cross_attention.1
$region0: #{cross_attention.1}
  #allocation0 [shape = 'u32[]', space=smem, size = 0x4, offset = 0x4, fixed_abs, tag = 'smem constant byte address 0x4 - core index']
  #allocation1 [shape = 'u32[144,128]{1,0:T(1,128)}', space=vmem, size = 0x12000, scoped, tag = 'internal scratch']
  %s0 = inlined_call_operand.vmem [shape: f32[2,16,128], index: 0, kind: input, shape index: {}]
  %s1 = inlined_call_operand.vmem [shape: f32[2,16,128], index: 1, kind: input, shape index: {}]
  %s2 = inlined_call_operand.vmem [shape: bf16[128,256], index: 2, kind: input, shape index: {}]
  %s3 = inlined_call_operand.vmem [shape: bf16[128,128], index: 3, kind: input, shape index: {}]
  %s4 = inlined_call_operand.vmem [shape: bf16[128,128], index: 4, kind: input, shape index: {}]
  %s5 = inlined_call_operand.vmem [shape: f32[1,128], index: 5, kind: input, shape index: {}]
  %s6 = inlined_call_operand.hbm [shape: f32[2,16,128], index: 6, kind: output, shape index: {}]
  %s7 = sld [smem:[#allocation0]]
  $region34: #{cross_attention.1} parent=0
    _
  %s9 = ssub.s32 1, %s7
  %s10 = scalar_select 0, %s9, %s7
  $region1: #{cross_attention.1} parent=0
    #allocation2 [shape = 'u8[16384]{0}', space=vmem, size = 0x4000, scoped, tag = 'output window, operand 0, single buffered']
    #allocation3 [shape = 's32[1]{0}', space=sflag, size = 0x4, scoped, tag = 'scoped memory for cross_attention.1']
    %11 = vsyncpa [#allocation3], 0
    // Predicated region
    $region2: #{cross_attention.1} parent=1 // pred_check
      _
    $region3: #{cross_attention.1} parent=1 // pred_check_branch
      %13 = sbr.rel (0) target = $region5
    $region4: #{cross_attention.1} parent=1 // pred_region
      _
    $region5: #{cross_attention.1} parent=1 // pred_fallthru
      _
    // Predicated region
    $region6: #{cross_attention.1} parent=1 // pred_check
      _
    $region7: #{cross_attention.1} parent=1 // pred_check_branch
      %15 = sbr.rel (0) target = $region9
    $region8: #{cross_attention.1} parent=1 // pred_region
      _
    $region9: #{cross_attention.1} parent=1 // pred_fallthru
      _
    // Predicated region
    $region10: #{cross_attention.1} parent=1 // pred_check
      _
    $region11: #{cross_attention.1} parent=1 // pred_check_branch
      %17 = sbr.rel (0) target = $region13
    $region12: #{cross_attention.1} parent=1 // pred_region
      _
    $region13: #{cross_attention.1} parent=1 // pred_fallthru
      _
    // Predicated region
    $region14: #{cross_attention.1} parent=1 // pred_check
      _
    $region15: #{cross_attention.1} parent=1 // pred_check_branch
      %19 = sbr.rel (0) target = $region17
    $region16: #{cross_attention.1} parent=1 // pred_region
      _
    $region17: #{cross_attention.1} parent=1 // pred_fallthru
      _
    // Predicated region
    $region18: #{cross_attention.1} parent=1 // pred_check
      _
    $region19: #{cross_attention.1} parent=1 // pred_check_branch
      %21 = sbr.rel (0) target = $region21
    $region20: #{cross_attention.1} parent=1 // pred_region
      _
    $region21: #{cross_attention.1} parent=1 // pred_fallthru
      _
    // Predicated region
    $region22: #{cross_attention.1} parent=1 // pred_check
      _
    $region23: #{cross_attention.1} parent=1 // pred_check_branch
      %23 = sbr.rel (0) target = $region25
    $region24: #{cross_attention.1} parent=1 // pred_region
      _
    $region25: #{cross_attention.1} parent=1 // pred_fallthru
      _
    %v25 = vld [vmem:[%s0] sm:$0xff]
    %v26 = vld [vmem:[%s0 + $0x8] sm:$0xff]
    %v27 = vld [vmem:[%s0 + $0x10] sm:$0xff]
    %v28 = vld [vmem:[%s0 + $0x18] sm:$0xff]
    %v29 = vpack.c.bf16 %v26, %v25
    %v30 = vpack.c.bf16 %v28, %v27
    %v31 = vld [vmem:[%s1] sm:$0xff]
    %v32 = vld [vmem:[%s1 + $0x8] sm:$0xff]
    %v33 = vld [vmem:[%s1 + $0x10] sm:$0xff]
    %v34 = vld [vmem:[%s1 + $0x18] sm:$0xff]
    %v35 = vpack.c.bf16 %v32, %v31
    %v36 = vpack.c.bf16 %v34, %v33
    %v37 = vld [vmem:[%s2] sm:$0xff]
    %v38 = vld [vmem:[%s2 + $0x8] sm:$0xff]
    %v39 = vld [vmem:[%s2 + $0x10] sm:$0xff]
    %v40 = vld [vmem:[%s2 + $0x18] sm:$0xff]
    %v41 = vld [vmem:[%s2 + $0x20] sm:$0xff]
    %v42 = vld [vmem:[%s2 + $0x28] sm:$0xff]
    %v43 = vld [vmem:[%s2 + $0x30] sm:$0xff]
    %v44 = vld [vmem:[%s2 + $0x38] sm:$0xff]
    %v45 = vld [vmem:[%s2 + $0x40] sm:$0xff]
    %v46 = vld [vmem:[%s2 + $0x48] sm:$0xff]
    %v47 = vld [vmem:[%s2 + $0x50] sm:$0xff]
    %v48 = vld [vmem:[%s2 + $0x58] sm:$0xff]
    %v49 = vld [vmem:[%s2 + $0x60] sm:$0xff]
    %v50 = vld [vmem:[%s2 + $0x68] sm:$0xff]
    %v51 = vld [vmem:[%s2 + $0x70] sm:$0xff]
    %v52 = vld [vmem:[%s2 + $0x78] sm:$0xff]
    %v69 = vunpack.c.l.b16 %v37
    %v70 = vunpack.c.h.b16 %v37
    %v71 = vunpack.c.l.b16 %v38
    %v72 = vunpack.c.h.b16 %v38
    %v73 = vunpack.c.l.b16 %v39
    %v74 = vunpack.c.h.b16 %v39
    %v75 = vunpack.c.l.b16 %v40
    %v76 = vunpack.c.h.b16 %v40
    %v77 = vunpack.c.l.b16 %v41
    %v78 = vunpack.c.h.b16 %v41
    %v79 = vunpack.c.l.b16 %v42
    %v80 = vunpack.c.h.b16 %v42
    %v81 = vunpack.c.l.b16 %v43
    %v82 = vunpack.c.h.b16 %v43
    %v83 = vunpack.c.l.b16 %v44
    %v84 = vunpack.c.h.b16 %v44
    %v85 = vunpack.c.l.b16 %v45
    %v86 = vunpack.c.h.b16 %v45
    %v87 = vunpack.c.l.b16 %v46
    %v88 = vunpack.c.h.b16 %v46
    %v89 = vunpack.c.l.b16 %v47
    %v90 = vunpack.c.h.b16 %v47
    %v91 = vunpack.c.l.b16 %v48
    %v92 = vunpack.c.h.b16 %v48
    %v93 = vunpack.c.l.b16 %v49
    %v94 = vunpack.c.h.b16 %v49
    %v95 = vunpack.c.l.b16 %v50
    %v96 = vunpack.c.h.b16 %v50
    %v97 = vunpack.c.l.b16 %v51
    %v98 = vunpack.c.h.b16 %v51
    %v99 = vunpack.c.l.b16 %v52
    %v100 = vunpack.c.h.b16 %v52
    %v101 = vpack.c.b16 %v71, %v69
    %v102 = vpack.c.b16 %v72, %v70
    %v103 = vpack.c.b16 %v75, %v73
    %v104 = vpack.c.b16 %v76, %v74
    %v105 = vpack.c.b16 %v79, %v77
    %v106 = vpack.c.b16 %v80, %v78
    %v107 = vpack.c.b16 %v83, %v81
    %v108 = vpack.c.b16 %v84, %v82
    %v109 = vpack.c.b16 %v87, %v85
    %v110 = vpack.c.b16 %v88, %v86
    %v111 = vpack.c.b16 %v91, %v89
    %v112 = vpack.c.b16 %v92, %v90
    %v113 = vpack.c.b16 %v95, %v93
    %v114 = vpack.c.b16 %v96, %v94
    %v115 = vpack.c.b16 %v99, %v97
    %v116 = vpack.c.b16 %v100, %v98
    %133 = vmatprep.subr.bf16.mxu0 %v102
    %134 = vmatpush1.bf16.msra.mxu0 %v101
    %135 = vmatprep.subr.bf16.mxu0 %v104
    %136 = vmatpush1.bf16.msra.mxu0 %v103
    %137 = vmatprep.subr.bf16.mxu0 %v106
    %138 = vmatpush1.bf16.msra.mxu0 %v105
    %139 = vmatprep.subr.bf16.mxu0 %v108
    %140 = vmatpush1.bf16.msra.mxu0 %v107
    %141 = vmatprep.subr.bf16.mxu0 %v110
    %142 = vmatpush1.bf16.msra.mxu0 %v109
    %143 = vmatprep.subr.bf16.mxu0 %v112
    %144 = vmatpush1.bf16.msra.mxu0 %v111
    %145 = vmatprep.subr.bf16.mxu0 %v114
    %146 = vmatpush1.bf16.msra.mxu0 %v113
    %147 = vmatprep.subr.bf16.mxu0 %v116
    %148 = vmatpush1.bf16.msra.mxu0 %v115
    %149 = vmatprep.subr.bf16.mxu0 0
    %150 = vmatpush1.bf16.msra.mxu0 0
    %151 = vmatprep.subr.bf16.mxu0 0
    %152 = vmatpush1.bf16.msra.mxu0 0
    %153 = vmatprep.subr.bf16.mxu0 0
    %154 = vmatpush1.bf16.msra.mxu0 0
    %155 = vmatprep.subr.bf16.mxu0 0
    %156 = vmatpush1.bf16.msra.mxu0 0
    %157 = vmatprep.subr.bf16.mxu0 0
    %158 = vmatpush1.bf16.msra.mxu0 0
    %159 = vmatprep.subr.bf16.mxu0 0
    %160 = vmatpush1.bf16.msra.mxu0 0
    %161 = vmatprep.subr.bf16.mxu0 0
    %162 = vmatpush1.bf16.msra.mxu0 0
    %163 = vmatprep.subr.bf16.mxu0 0
    %164 = vmatpush1.bf16.msra.mxu0 0
    %165 = vmatprep.mubr.bf16.mxu0 0
    %166 = vmatmul.mubr.bf16.gmra.mrb[0].mxu0 %v29
    %v167 = vpop.f32.mrb[0].mxu0
    %v168 = vadd.f32 0.0, %v167
    %v169 = vpop.f32.mrb[0].mxu0
    %v170 = vadd.f32 0.0, %v169
    %v171 = vpop.f32.mrb[0].mxu0
    %v172 = vadd.f32 0.0, %v171
    %v173 = vpop.f32.mrb[0].mxu0
    %v174 = vadd.f32 0.0, %v173
    %175 = vmatprep.mubr.bf16.mxu0 0
    %176 = vmatmul.mubr.bf16.gmra.mrb[0].mxu0 %v30
    %v177 = vpop.f32.mrb[0].mxu0
    %v178 = vadd.f32 0.0, %v177
    %v179 = vpop.f32.mrb[0].mxu0
    %v180 = vadd.f32 0.0, %v179
    %v181 = vpop.f32.mrb[0].mxu0
    %v182 = vadd.f32 0.0, %v181
    %v183 = vpop.f32.mrb[0].mxu0
    %v184 = vadd.f32 0.0, %v183
    %185 = vdwg.mxu0
    %v186 = vld [vmem:[%s3] sm:$0xf]
    %v187 = vld [vmem:[%s3 + $0x4] sm:$0xf]
    %v188 = vld [vmem:[%s3 + $0x8] sm:$0xf]
    %v189 = vld [vmem:[%s3 + $0xc] sm:$0xf]
    %v190 = vld [vmem:[%s3 + $0x10] sm:$0xf]
    %v191 = vld [vmem:[%s3 + $0x14] sm:$0xf]
    %v192 = vld [vmem:[%s3 + $0x18] sm:$0xf]
    %v193 = vld [vmem:[%s3 + $0x1c] sm:$0xf]
    %v194 = vld [vmem:[%s3 + $0x20] sm:$0xf]
    %v195 = vld [vmem:[%s3 + $0x24] sm:$0xf]
    %v196 = vld [vmem:[%s3 + $0x28] sm:$0xf]
    %v197 = vld [vmem:[%s3 + $0x2c] sm:$0xf]
    %v198 = vld [vmem:[%s3 + $0x30] sm:$0xf]
    %v199 = vld [vmem:[%s3 + $0x34] sm:$0xf]
    %v200 = vld [vmem:[%s3 + $0x38] sm:$0xf]
    %v201 = vld [vmem:[%s3 + $0x3c] sm:$0xf]
    %v218 = vunpack.c.l.b16 %v186
    %v219 = vunpack.c.l.b16 %v187
    %v220 = vunpack.c.l.b16 %v188
    %v221 = vunpack.c.l.b16 %v189
    %v222 = vunpack.c.l.b16 %v190
    %v223 = vunpack.c.l.b16 %v191
    %v224 = vunpack.c.l.b16 %v192
    %v225 = vunpack.c.l.b16 %v193
    %v226 = vunpack.c.l.b16 %v194
    %v227 = vunpack.c.l.b16 %v195
    %v228 = vunpack.c.l.b16 %v196
    %v229 = vunpack.c.l.b16 %v197
    %v230 = vunpack.c.l.b16 %v198
    %v231 = vunpack.c.l.b16 %v199
    %v232 = vunpack.c.l.b16 %v200
    %v233 = vunpack.c.l.b16 %v201
    %v234 = vpack.c.b16 %v219, %v218
    %v235 = vpack.c.b16 %v221, %v220
    %v236 = vpack.c.b16 %v223, %v222
    %v237 = vpack.c.b16 %v225, %v224
    %v238 = vpack.c.b16 %v227, %v226
    %v239 = vpack.c.b16 %v229, %v228
    %v240 = vpack.c.b16 %v231, %v230
    %v241 = vpack.c.b16 %v233, %v232
    %250 = vmatprep.subr.bf16.mxu0 0
    %251 = vmatpush1.bf16.msra.mxu0 %v234
    %252 = vmatprep.subr.bf16.mxu0 0
    %253 = vmatpush1.bf16.msra.mxu0 %v235
    %254 = vmatprep.subr.bf16.mxu0 0
    %255 = vmatpush1.bf16.msra.mxu0 %v236
    %256 = vmatprep.subr.bf16.mxu0 0
    %257 = vmatpush1.bf16.msra.mxu0 %v237
    %258 = vmatprep.subr.bf16.mxu0 0
    %259 = vmatpush1.bf16.msra.mxu0 %v238
    %260 = vmatprep.subr.bf16.mxu0 0
    %261 = vmatpush1.bf16.msra.mxu0 %v239
    %262 = vmatprep.subr.bf16.mxu0 0
    %263 = vmatpush1.bf16.msra.mxu0 %v240
    %264 = vmatprep.subr.bf16.mxu0 0
    %265 = vmatpush1.bf16.msra.mxu0 %v241
    %266 = vmatprep.subr.bf16.mxu0 0
    %267 = vmatpush1.bf16.msra.mxu0 0
    %268 = vmatprep.subr.bf16.mxu0 0
    %269 = vmatpush1.bf16.msra.mxu0 0
    %270 = vmatprep.subr.bf16.mxu0 0
    %271 = vmatpush1.bf16.msra.mxu0 0
    %272 = vmatprep.subr.bf16.mxu0 0
    %273 = vmatpush1.bf16.msra.mxu0 0
    %274 = vmatprep.subr.bf16.mxu0 0
    %275 = vmatpush1.bf16.msra.mxu0 0
    %276 = vmatprep.subr.bf16.mxu0 0
    %277 = vmatpush1.bf16.msra.mxu0 0
    %278 = vmatprep.subr.bf16.mxu0 0
    %279 = vmatpush1.bf16.msra.mxu0 0
    %280 = vmatprep.subr.bf16.mxu0 0
    %281 = vmatpush1.bf16.msra.mxu0 0
    %282 = vmatprep.mubr.bf16.mxu0 0
    %283 = vmatmul.mubr.bf16.gmra.mrb[0].mxu0 %v35
    %v284 = vpop.f32.mrb[0].mxu0
    %v285 = vadd.f32 0.0, %v284
    %v286 = vpop.f32.mrb[0].mxu0
    %v287 = vpop.f32.mrb[0].mxu0
    %v288 = vadd.f32 0.0, %v287
    %v289 = vpop.f32.mrb[0].mxu0
    %290 = vmatprep.mubr.bf16.mxu0 0
    %291 = vmatmul.mubr.bf16.gmra.mrb[0].mxu0 %v36
    %v292 = vpop.f32.mrb[0].mxu0
    %v293 = vadd.f32 0.0, %v292
    %v294 = vpop.f32.mrb[0].mxu0
    %v295 = vpop.f32.mrb[0].mxu0
    %v296 = vadd.f32 0.0, %v295
    %v297 = vpop.f32.mrb[0].mxu0
    %298 = vdwg.mxu0
    %v299 = vpack.c.bf16 %v172, %v168
    %v300 = vpack.c.bf16 %v182, %v178
    %301 = vxpose.xlu0.b32.start [1/16] %v170, 128
    %302 = vxpose.xlu0.b32.cont [2/16] %v174, 128
    %303 = vxpose.xlu0.b32.cont [3/16] %v180, 128
    %304 = vxpose.xlu0.b32.cont [4/16] %v184, 128
    %305 = vxpose.xlu0.b32.cont [5/16] 0.0, 128
    %306 = vxpose.xlu0.b32.cont [6/16] 0.0, 128
    %307 = vxpose.xlu0.b32.cont [7/16] 0.0, 128
    %308 = vxpose.xlu0.b32.cont [8/16] 0.0, 128
    %309 = vxpose.xlu0.b32.cont [9/16] 0.0, 128
    %310 = vxpose.xlu0.b32.cont [10/16] 0.0, 128
    %311 = vxpose.xlu0.b32.cont [11/16] 0.0, 128
    %312 = vxpose.xlu0.b32.cont [12/16] 0.0, 128
    %313 = vxpose.xlu0.b32.cont [13/16] 0.0, 128
    %314 = vxpose.xlu0.b32.cont [14/16] 0.0, 128
    %315 = vxpose.xlu0.b32.cont [15/16] 0.0, 128
    %316 = vxpose.xlu0.b32.end [16/16] 0.0, 128
    %v317 = vpop.trf.xlu0
    %v318 = vpop.trf.xlu0
    %v319 = vpop.trf.xlu0
    %v320 = vpop.trf.xlu0
    %v321 = vpop.trf.xlu0
    %v322 = vpop.trf.xlu0
    %v323 = vpop.trf.xlu0
    %v324 = vpop.trf.xlu0
    %v325 = vpop.trf.xlu0
    %v326 = vpop.trf.xlu0
    %v327 = vpop.trf.xlu0
    %v328 = vpop.trf.xlu0
    %v329 = vpop.trf.xlu0
    %v330 = vpop.trf.xlu0
    %v331 = vpop.trf.xlu0
    %v332 = vpop.trf.xlu0
    %v333 = vpack.c.bf16 %v318, %v317
    %v334 = vpack.c.bf16 %v320, %v319
    %v335 = vpack.c.bf16 %v322, %v321
    %v336 = vpack.c.bf16 %v324, %v323
    %v337 = vpack.c.bf16 %v326, %v325
    %v338 = vpack.c.bf16 %v328, %v327
    %v339 = vpack.c.bf16 %v330, %v329
    %v340 = vpack.c.bf16 %v332, %v331
    %v341 = vpack.c.bf16 %v288, %v285
    %v342 = vpack.c.bf16 %v296, %v293
    %v343 = vld [vmem:[%s5] sm:$0x1]
    %vm344 = vcmask 130048
    %v346 = vsel %vm344, %v299, 0
    %348 = vmatprep.subr.bf16.mxu0 0
    %349 = vmatpush1.bf16.msra.mxu0 %v333
    %350 = vmatprep.subr.bf16.mxu0 0
    %351 = vmatpush1.bf16.msra.mxu0 0
    %352 = vmatprep.subr.bf16.mxu0 0
    %353 = vmatpush1.bf16.msra.mxu0 0
    %354 = vmatprep.subr.bf16.mxu0 0
    %355 = vmatpush1.bf16.msra.mxu0 0
    %356 = vmatprep.subr.bf16.mxu0 0
    %357 = vmatpush1.bf16.msra.mxu0 0
    %358 = vmatprep.subr.bf16.mxu0 0
    %359 = vmatpush1.bf16.msra.mxu0 0
    %360 = vmatprep.subr.bf16.mxu0 0
    %361 = vmatpush1.bf16.msra.mxu0 0
    %362 = vmatprep.subr.bf16.mxu0 0
    %363 = vmatpush1.bf16.msra.mxu0 0
    %364 = vmatprep.subr.bf16.mxu0 0
    %365 = vmatpush1.bf16.msra.mxu0 0
    %366 = vmatprep.subr.bf16.mxu0 0
    %367 = vmatpush1.bf16.msra.mxu0 0
    %368 = vmatprep.subr.bf16.mxu0 0
    %369 = vmatpush1.bf16.msra.mxu0 0
    %370 = vmatprep.subr.bf16.mxu0 0
    %371 = vmatpush1.bf16.msra.mxu0 0
    %372 = vmatprep.subr.bf16.mxu0 0
    %373 = vmatpush1.bf16.msra.mxu0 0
    %374 = vmatprep.subr.bf16.mxu0 0
    %375 = vmatpush1.bf16.msra.mxu0 0
    %376 = vmatprep.subr.bf16.mxu0 0
    %377 = vmatpush1.bf16.msra.mxu0 0
    %378 = vmatprep.subr.bf16.mxu0 0
    %379 = vmatpush1.bf16.msra.mxu0 0
    %380 = vmatprep.mubr.bf16.mxu0 0
    %381 = vmatmul.mubr.bf16.gmra.mrb[0].mxu0 %v346
    %v382 = vpop.f32.mrb[0].mxu0
    %v383 = vadd.f32 0.0, %v382
    %v384 = vpop.f32.mrb[0].mxu0
    %v385 = vpop.f32.mrb[0].mxu0
    %v386 = vadd.f32 0.0, %v385
    %v387 = vpop.f32.mrb[0].mxu0
    %388 = vdwg.mxu0
    %v389 = vsel %vm344, %v383, -inf
    %390 = vmax.xlane.f32.xlu0 %v389
    %v391 = vpop.xlane.xlu0 %390
    %v392 = vsel %vm344, %v386, -inf
    %393 = vmax.xlane.f32.xlu0 %v392
    %v394 = vpop.xlane.xlu0 %393
    %v395 = vsub.f32 %v383, %v391
    %v396 = vsub.f32 %v386, %v394
    %v397 = vmul.f32 %v395, 1.442695
    %v398 = vpow.pop %v397
    %v399 = vmul.f32 %v396, 1.442695
    %v400 = vpow.pop %v399
    %v401 = vsel %vm344, %v398, 0.0
    %402 = vadd.xlane.f32.xlu0 %v401
    %v403 = vpop.xlane.xlu0 %402
    %v404 = vsel %vm344, %v400, 0.0
    %405 = vadd.xlane.f32.xlu0 %v404
    %v406 = vpop.xlane.xlu0 %405
    %v407 = vpack.c.bf16 %v400, %v398
    %v409 = vsel %vm344, %v407, 0
    %411 = vmatprep.subr.bf16.mxu0 0
    %412 = vmatpush1.bf16.msra.mxu0 %v341
    %413 = vmatprep.subr.bf16.mxu0 0
    %414 = vmatpush1.bf16.msra.mxu0 0
    %415 = vmatprep.subr.bf16.mxu0 0
    %416 = vmatpush1.bf16.msra.mxu0 0
    %417 = vmatprep.subr.bf16.mxu0 0
    %418 = vmatpush1.bf16.msra.mxu0 0
    %419 = vmatprep.subr.bf16.mxu0 0
    %420 = vmatpush1.bf16.msra.mxu0 0
    %421 = vmatprep.subr.bf16.mxu0 0
    %422 = vmatpush1.bf16.msra.mxu0 0
    %423 = vmatprep.subr.bf16.mxu0 0
    %424 = vmatpush1.bf16.msra.mxu0 0
    %425 = vmatprep.subr.bf16.mxu0 0
    %426 = vmatpush1.bf16.msra.mxu0 0
    %427 = vmatprep.subr.bf16.mxu0 0
    %428 = vmatpush1.bf16.msra.mxu0 0
    %429 = vmatprep.subr.bf16.mxu0 0
    %430 = vmatpush1.bf16.msra.mxu0 0
    %431 = vmatprep.subr.bf16.mxu0 0
    %432 = vmatpush1.bf16.msra.mxu0 0
    %433 = vmatprep.subr.bf16.mxu0 0
    %434 = vmatpush1.bf16.msra.mxu0 0
    %435 = vmatprep.subr.bf16.mxu0 0
    %436 = vmatpush1.bf16.msra.mxu0 0
    %437 = vmatprep.subr.bf16.mxu0 0
    %438 = vmatpush1.bf16.msra.mxu0 0
    %439 = vmatprep.subr.bf16.mxu0 0
    %440 = vmatpush1.bf16.msra.mxu0 0
    %441 = vmatprep.subr.bf16.mxu0 0
    %442 = vmatpush1.bf16.msra.mxu0 0
    %443 = vmatprep.mubr.bf16.mxu0 0
    %444 = vmatmul.mubr.bf16.gmra.mrb[0].mxu0 %v409
    %v445 = vpop.f32.mrb[0].mxu0
    %v446 = vadd.f32 0.0, %v445
    %v447 = vpop.f32.mrb[0].mxu0
    %v448 = vpop.f32.mrb[0].mxu0
    %v449 = vadd.f32 0.0, %v448
    %v450 = vpop.f32.mrb[0].mxu0
    %451 = vdwg.mxu0
    %v452 = vrcp.pop %v403
    %v453 = vrcp.pop %v406
    %v454 = vmul.f32 %v446, %v452
    %v455 = vmul.f32 %v449, %v453
    %v456 = vpack.c.bf16 %v455, %v454
    %v457 = vld [vmem:[%s4] sm:$0xf]
    %v458 = vld [vmem:[%s4 + $0x4] sm:$0xf]
    %460 = vrot.lane.b32.xlu0 %v299, 112
    %v461 = vpop.permute.xlu0 %460
    %v463 = vsel %vm344, %v461, 0
    %465 = vmatprep.subr.bf16.mxu0 0
    %466 = vmatpush1.bf16.msra.mxu0 %v334
    %467 = vmatprep.subr.bf16.mxu0 0
    %468 = vmatpush1.bf16.msra.mxu0 0
    %469 = vmatprep.subr.bf16.mxu0 0
    %470 = vmatpush1.bf16.msra.mxu0 0
    %471 = vmatprep.subr.bf16.mxu0 0
    %472 = vmatpush1.bf16.msra.mxu0 0
    %473 = vmatprep.subr.bf16.mxu0 0
    %474 = vmatpush1.bf16.msra.mxu0 0
    %475 = vmatprep.subr.bf16.mxu0 0
    %476 = vmatpush1.bf16.msra.mxu0 0
    %477 = vmatprep.subr.bf16.mxu0 0
    %478 = vmatpush1.bf16.msra.mxu0 0
    %479 = vmatprep.subr.bf16.mxu0 0
    %480 = vmatpush1.bf16.msra.mxu0 0
    %481 = vmatprep.subr.bf16.mxu0 0
    %482 = vmatpush1.bf16.msra.mxu0 0
    %483 = vmatprep.subr.bf16.mxu0 0
    %484 = vmatpush1.bf16.msra.mxu0 0
    %485 = vmatprep.subr.bf16.mxu0 0
    %486 = vmatpush1.bf16.msra.mxu0 0
    %487 = vmatprep.subr.bf16.mxu0 0
    %488 = vmatpush1.bf16.msra.mxu0 0
    %489 = vmatprep.subr.bf16.mxu0 0
    %490 = vmatpush1.bf16.msra.mxu0 0
    %491 = vmatprep.subr.bf16.mxu0 0
    %492 = vmatpush1.bf16.msra.mxu0 0
    %493 = vmatprep.subr.bf16.mxu0 0
    %494 = vmatpush1.bf16.msra.mxu0 0
    %495 = vmatprep.subr.bf16.mxu0 0
    %496 = vmatpush1.bf16.msra.mxu0 0
    %497 = vmatprep.mubr.bf16.mxu0 0
    %498 = vmatmul.mubr.bf16.gmra.mrb[0].mxu0 %v463
    %v499 = vpop.f32.mrb[0].mxu0
    %v500 = vadd.f32 0.0, %v499
    %v501 = vpop.f32.mrb[0].mxu0
    %v502 = vpop.f32.mrb[0].mxu0
    %v503 = vadd.f32 0.0, %v502
    %v504 = vpop.f32.mrb[0].mxu0
    %505 = vdwg.mxu0
    %v506 = vsel %vm344, %v500, -inf
    %507 = vmax.xlane.f32.xlu0 %v506
    %v508 = vpop.xlane.xlu0 %507
    %v509 = vsel %vm344, %v503, -inf
    %510 = vmax.xlane.f32.xlu0 %v509
    %v511 = vpop.xlane.xlu0 %510
    %v512 = vsub.f32 %v500, %v508
    %v513 = vsub.f32 %v503, %v511
    %v514 = vmul.f32 %v512, 1.442695
    %v515 = vpow.pop %v514
    %v516 = vmul.f32 %v513, 1.442695
    %v517 = vpow.pop %v516
    %v518 = vsel %vm344, %v515, 0.0
    %519 = vadd.xlane.f32.xlu0 %v518
    %v520 = vpop.xlane.xlu0 %519
    %v521 = vsel %vm344, %v517, 0.0
    %522 = vadd.xlane.f32.xlu0 %v521
    %v523 = vpop.xlane.xlu0 %522
    %v524 = vpack.c.bf16 %v517, %v515
    %526 = vrot.lane.b32.xlu0 %v341, 112
    %v527 = vpop.permute.xlu0 %526
    %v530 = vsel %vm344, %v524, 0
    %532 = vmatprep.subr.bf16.mxu0 0
    %533 = vmatpush1.bf16.msra.mxu0 %v527
    %534 = vmatprep.subr.bf16.mxu0 0
    %535 = vmatpush1.bf16.msra.mxu0 0
    %536 = vmatprep.subr.bf16.mxu0 0
    %537 = vmatpush1.bf16.msra.mxu0 0
    %538 = vmatprep.subr.bf16.mxu0 0
    %539 = vmatpush1.bf16.msra.mxu0 0
    %540 = vmatprep.subr.bf16.mxu0 0
    %541 = vmatpush1.bf16.msra.mxu0 0
    %542 = vmatprep.subr.bf16.mxu0 0
    %543 = vmatpush1.bf16.msra.mxu0 0
    %544 = vmatprep.subr.bf16.mxu0 0
    %545 = vmatpush1.bf16.msra.mxu0 0
    %546 = vmatprep.subr.bf16.mxu0 0
    %547 = vmatpush1.bf16.msra.mxu0 0
    %548 = vmatprep.subr.bf16.mxu0 0
    %549 = vmatpush1.bf16.msra.mxu0 0
    %550 = vmatprep.subr.bf16.mxu0 0
    %551 = vmatpush1.bf16.msra.mxu0 0
    %552 = vmatprep.subr.bf16.mxu0 0
    %553 = vmatpush1.bf16.msra.mxu0 0
    %554 = vmatprep.subr.bf16.mxu0 0
    %555 = vmatpush1.bf16.msra.mxu0 0
    %556 = vmatprep.subr.bf16.mxu0 0
    %557 = vmatpush1.bf16.msra.mxu0 0
    %558 = vmatprep.subr.bf16.mxu0 0
    %559 = vmatpush1.bf16.msra.mxu0 0
    %560 = vmatprep.subr.bf16.mxu0 0
    %561 = vmatpush1.bf16.msra.mxu0 0
    %562 = vmatprep.subr.bf16.mxu0 0
    %563 = vmatpush1.bf16.msra.mxu0 0
    %564 = vmatprep.mubr.bf16.mxu0 0
    %565 = vmatmul.mubr.bf16.gmra.mrb[0].mxu0 %v530
    %v566 = vpop.f32.mrb[0].mxu0
    %v567 = vadd.f32 0.0, %v566
    %v568 = vpop.f32.mrb[0].mxu0
    %v569 = vpop.f32.mrb[0].mxu0
    %v570 = vadd.f32 0.0, %v569
    %v571 = vpop.f32.mrb[0].mxu0
    %572 = vdwg.mxu0
    %v573 = vrcp.pop %v520
    %v574 = vrcp.pop %v523
    %v575 = vmul.f32 %v567, %v573
    %v576 = vmul.f32 %v570, %v574
    %v577 = vpack.c.bf16 %v576, %v575
    %v578 = vld [vmem:[%s4 + $0x8] sm:$0xf]
    %v579 = vld [vmem:[%s4 + $0xc] sm:$0xf]
    %v582 = vunpack.c.l.b16 %v578
    %v583 = vunpack.c.l.b16 %v579
    %v584 = vpack.c.b16 %v583, %v582
    %v587 = vsel %vm344, %v577, 0
    %589 = vmatprep.subr.bf16.mxu0 0
    %590 = vmatpush1.bf16.msra.mxu0 %v584
    %591 = vmatprep.subr.bf16.mxu0 0
    %592 = vmatpush1.bf16.msra.mxu0 0
    %593 = vmatprep.subr.bf16.mxu0 0
    %594 = vmatpush1.bf16.msra.mxu0 0
    %595 = vmatprep.subr.bf16.mxu0 0
    %596 = vmatpush1.bf16.msra.mxu0 0
    %597 = vmatprep.subr.bf16.mxu0 0
    %598 = vmatpush1.bf16.msra.mxu0 0
    %599 = vmatprep.subr.bf16.mxu0 0
    %600 = vmatpush1.bf16.msra.mxu0 0
    %601 = vmatprep.subr.bf16.mxu0 0
    %602 = vmatpush1.bf16.msra.mxu0 0
    %603 = vmatprep.subr.bf16.mxu0 0
    %604 = vmatpush1.bf16.msra.mxu0 0
    %605 = vmatprep.subr.bf16.mxu0 0
    %606 = vmatpush1.bf16.msra.mxu0 0
    %607 = vmatprep.subr.bf16.mxu0 0
    %608 = vmatpush1.bf16.msra.mxu0 0
    %609 = vmatprep.subr.bf16.mxu0 0
    %610 = vmatpush1.bf16.msra.mxu0 0
    %611 = vmatprep.subr.bf16.mxu0 0
    %612 = vmatpush1.bf16.msra.mxu0 0
    %613 = vmatprep.subr.bf16.mxu0 0
    %614 = vmatpush1.bf16.msra.mxu0 0
    %615 = vmatprep.subr.bf16.mxu0 0
    %616 = vmatpush1.bf16.msra.mxu0 0
    %617 = vmatprep.subr.bf16.mxu0 0
    %618 = vmatpush1.bf16.msra.mxu0 0
    %619 = vmatprep.subr.bf16.mxu0 0
    %620 = vmatpush1.bf16.msra.mxu0 0
    %621 = vmatprep.mubr.bf16.mxu0 0
    %622 = vmatmul.mubr.bf16.gmra.mrb[0].mxu0 %v587
    %v623 = vpop.f32.mrb[0].mxu0
    %v624 = vadd.f32 0.0, %v623
    %v625 = vpop.f32.mrb[0].mxu0
    %v626 = vpop.f32.mrb[0].mxu0
    %v627 = vadd.f32 0.0, %v626
    %v628 = vpop.f32.mrb[0].mxu0
    %629 = vdwg.mxu0
    %v632 = vunpack.c.l.b16 %v457
    %v633 = vunpack.c.l.b16 %v458
    %v634 = vpack.c.b16 %v633, %v632
    %v637 = vsel %vm344, %v456, 0
    %639 = vmatprep.subr.bf16.mxu0 0
    %640 = vmatpush1.bf16.msra.mxu0 %v634
    %641 = vmatprep.subr.bf16.mxu0 0
    %642 = vmatpush1.bf16.msra.mxu0 0
    %643 = vmatprep.subr.bf16.mxu0 0
    %644 = vmatpush1.bf16.msra.mxu0 0
    %645 = vmatprep.subr.bf16.mxu0 0
    %646 = vmatpush1.bf16.msra.mxu0 0
    %647 = vmatprep.subr.bf16.mxu0 0
    %648 = vmatpush1.bf16.msra.mxu0 0
    %649 = vmatprep.subr.bf16.mxu0 0
    %650 = vmatpush1.bf16.msra.mxu0 0
    %651 = vmatprep.subr.bf16.mxu0 0
    %652 = vmatpush1.bf16.msra.mxu0 0
    %653 = vmatprep.subr.bf16.mxu0 0
    %654 = vmatpush1.bf16.msra.mxu0 0
    %655 = vmatprep.subr.bf16.mxu0 0
    %656 = vmatpush1.bf16.msra.mxu0 0
    %657 = vmatprep.subr.bf16.mxu0 0
    %658 = vmatpush1.bf16.msra.mxu0 0
    %659 = vmatprep.subr.bf16.mxu0 0
    %660 = vmatpush1.bf16.msra.mxu0 0
    %661 = vmatprep.subr.bf16.mxu0 0
    %662 = vmatpush1.bf16.msra.mxu0 0
    %663 = vmatprep.subr.bf16.mxu0 0
    %664 = vmatpush1.bf16.msra.mxu0 0
    %665 = vmatprep.subr.bf16.mxu0 0
    %666 = vmatpush1.bf16.msra.mxu0 0
    %667 = vmatprep.subr.bf16.mxu0 0
    %668 = vmatpush1.bf16.msra.mxu0 0
    %669 = vmatprep.subr.bf16.mxu0 0
    %670 = vmatpush1.bf16.msra.mxu0 0
    %671 = vmatprep.mubr.bf16.mxu0 0
    %672 = vmatmul.mubr.bf16.gmra.mrb[0].mxu0 %v637
    %v673 = vpop.f32.mrb[0].mxu0
    %v674 = vadd.f32 %v624, %v673
    %v675 = vpop.f32.mrb[0].mxu0
    %v676 = vpop.f32.mrb[0].mxu0
    %v677 = vadd.f32 %v627, %v676
    %v678 = vpop.f32.mrb[0].mxu0
    %679 = vdwg.mxu0
    %680 = vrot.lane.b32.xlu0 %v299, 96
    %v681 = vpop.permute.xlu0 %680
    %v683 = vsel %vm344, %v681, 0
    %685 = vmatprep.subr.bf16.mxu0 0
    %686 = vmatpush1.bf16.msra.mxu0 %v335
    %687 = vmatprep.subr.bf16.mxu0 0
    %688 = vmatpush1.bf16.msra.mxu0 0
    %689 = vmatprep.subr.bf16.mxu0 0
    %690 = vmatpush1.bf16.msra.mxu0 0
    %691 = vmatprep.subr.bf16.mxu0 0
    %692 = vmatpush1.bf16.msra.mxu0 0
    %693 = vmatprep.subr.bf16.mxu0 0
    %694 = vmatpush1.bf16.msra.mxu0 0
    %695 = vmatprep.subr.bf16.mxu0 0
    %696 = vmatpush1.bf16.msra.mxu0 0
    %697 = vmatprep.subr.bf16.mxu0 0
    %698 = vmatpush1.bf16.msra.mxu0 0
    %699 = vmatprep.subr.bf16.mxu0 0
    %700 = vmatpush1.bf16.msra.mxu0 0
    %701 = vmatprep.subr.bf16.mxu0 0
    %702 = vmatpush1.bf16.msra.mxu0 0
    %703 = vmatprep.subr.bf16.mxu0 0
    %704 = vmatpush1.bf16.msra.mxu0 0
    %705 = vmatprep.subr.bf16.mxu0 0
    %706 = vmatpush1.bf16.msra.mxu0 0
    %707 = vmatprep.subr.bf16.mxu0 0
    %708 = vmatpush1.bf16.msra.mxu0 0
    %709 = vmatprep.subr.bf16.mxu0 0
    %710 = vmatpush1.bf16.msra.mxu0 0
    %711 = vmatprep.subr.bf16.mxu0 0
    %712 = vmatpush1.bf16.msra.mxu0 0
    %713 = vmatprep.subr.bf16.mxu0 0
    %714 = vmatpush1.bf16.msra.mxu0 0
    %715 = vmatprep.subr.bf16.mxu0 0
    %716 = vmatpush1.bf16.msra.mxu0 0
    %717 = vmatprep.mubr.bf16.mxu0 0
    %718 = vmatmul.mubr.bf16.gmra.mrb[0].mxu0 %v683
    %v719 = vpop.f32.mrb[0].mxu0
    %v720 = vadd.f32 0.0, %v719
    %v721 = vpop.f32.mrb[0].mxu0
    %v722 = vpop.f32.mrb[0].mxu0
    %v723 = vadd.f32 0.0, %v722
    %v724 = vpop.f32.mrb[0].mxu0
    %725 = vdwg.mxu0
    %v726 = vsel %vm344, %v720, -inf
    %727 = vmax.xlane.f32.xlu0 %v726
    %v728 = vpop.xlane.xlu0 %727
    %v729 = vsel %vm344, %v723, -inf
    %730 = vmax.xlane.f32.xlu0 %v729
    %v731 = vpop.xlane.xlu0 %730
    %v732 = vsub.f32 %v720, %v728
    %v733 = vsub.f32 %v723, %v731
    %v734 = vmul.f32 %v732, 1.442695
    %v735 = vpow.pop %v734
    %v736 = vmul.f32 %v733, 1.442695
    %v737 = vpow.pop %v736
    %v738 = vsel %vm344, %v735, 0.0
    %739 = vadd.xlane.f32.xlu0 %v738
    %v740 = vpop.xlane.xlu0 %739
    %v741 = vsel %vm344, %v737, 0.0
    %742 = vadd.xlane.f32.xlu0 %v741
    %v743 = vpop.xlane.xlu0 %742
    %v744 = vpack.c.bf16 %v737, %v735
    %745 = vrot.lane.b32.xlu0 %v341, 96
    %v746 = vpop.permute.xlu0 %745
    %v749 = vsel %vm344, %v744, 0
    %751 = vmatprep.subr.bf16.mxu0 0
    %752 = vmatpush1.bf16.msra.mxu0 %v746
    %753 = vmatprep.subr.bf16.mxu0 0
    %754 = vmatpush1.bf16.msra.mxu0 0
    %755 = vmatprep.subr.bf16.mxu0 0
    %756 = vmatpush1.bf16.msra.mxu0 0
    %757 = vmatprep.subr.bf16.mxu0 0
    %758 = vmatpush1.bf16.msra.mxu0 0
    %759 = vmatprep.subr.bf16.mxu0 0
    %760 = vmatpush1.bf16.msra.mxu0 0
    %761 = vmatprep.subr.bf16.mxu0 0
    %762 = vmatpush1.bf16.msra.mxu0 0
    %763 = vmatprep.subr.bf16.mxu0 0
    %764 = vmatpush1.bf16.msra.mxu0 0
    %765 = vmatprep.subr.bf16.mxu0 0
    %766 = vmatpush1.bf16.msra.mxu0 0
    %767 = vmatprep.subr.bf16.mxu0 0
    %768 = vmatpush1.bf16.msra.mxu0 0
    %769 = vmatprep.subr.bf16.mxu0 0
    %770 = vmatpush1.bf16.msra.mxu0 0
    %771 = vmatprep.subr.bf16.mxu0 0
    %772 = vmatpush1.bf16.msra.mxu0 0
    %773 = vmatprep.subr.bf16.mxu0 0
    %774 = vmatpush1.bf16.msra.mxu0 0
    %775 = vmatprep.subr.bf16.mxu0 0
    %776 = vmatpush1.bf16.msra.mxu0 0
    %777 = vmatprep.subr.bf16.mxu0 0
    %778 = vmatpush1.bf16.msra.mxu0 0
    %779 = vmatprep.subr.bf16.mxu0 0
    %780 = vmatpush1.bf16.msra.mxu0 0
    %781 = vmatprep.subr.bf16.mxu0 0
    %782 = vmatpush1.bf16.msra.mxu0 0
    %783 = vmatprep.mubr.bf16.mxu0 0
    %784 = vmatmul.mubr.bf16.gmra.mrb[0].mxu0 %v749
    %v785 = vpop.f32.mrb[0].mxu0
    %v786 = vadd.f32 0.0, %v785
    %v787 = vpop.f32.mrb[0].mxu0
    %v788 = vpop.f32.mrb[0].mxu0
    %v789 = vadd.f32 0.0, %v788
    %v790 = vpop.f32.mrb[0].mxu0
    %791 = vdwg.mxu0
    %v792 = vrcp.pop %v740
    %v793 = vrcp.pop %v743
    %v794 = vmul.f32 %v786, %v792
    %v795 = vmul.f32 %v789, %v793
    %v796 = vpack.c.bf16 %v795, %v794
    %v797 = vld [vmem:[%s4 + $0x10] sm:$0xf]
    %v798 = vld [vmem:[%s4 + $0x14] sm:$0xf]
    %v801 = vunpack.c.l.b16 %v797
    %v802 = vunpack.c.l.b16 %v798
    %v803 = vpack.c.b16 %v802, %v801
    %v806 = vsel %vm344, %v796, 0
    %808 = vmatprep.subr.bf16.mxu0 0
    %809 = vmatpush1.bf16.msra.mxu0 %v803
    %810 = vmatprep.subr.bf16.mxu0 0
    %811 = vmatpush1.bf16.msra.mxu0 0
    %812 = vmatprep.subr.bf16.mxu0 0
    %813 = vmatpush1.bf16.msra.mxu0 0
    %814 = vmatprep.subr.bf16.mxu0 0
    %815 = vmatpush1.bf16.msra.mxu0 0
    %816 = vmatprep.subr.bf16.mxu0 0
    %817 = vmatpush1.bf16.msra.mxu0 0
    %818 = vmatprep.subr.bf16.mxu0 0
    %819 = vmatpush1.bf16.msra.mxu0 0
    %820 = vmatprep.subr.bf16.mxu0 0
    %821 = vmatpush1.bf16.msra.mxu0 0
    %822 = vmatprep.subr.bf16.mxu0 0
    %823 = vmatpush1.bf16.msra.mxu0 0
    %824 = vmatprep.subr.bf16.mxu0 0
    %825 = vmatpush1.bf16.msra.mxu0 0
    %826 = vmatprep.subr.bf16.mxu0 0
    %827 = vmatpush1.bf16.msra.mxu0 0
    %828 = vmatprep.subr.bf16.mxu0 0
    %829 = vmatpush1.bf16.msra.mxu0 0
    %830 = vmatprep.subr.bf16.mxu0 0
    %831 = vmatpush1.bf16.msra.mxu0 0
    %832 = vmatprep.subr.bf16.mxu0 0
    %833 = vmatpush1.bf16.msra.mxu0 0
    %834 = vmatprep.subr.bf16.mxu0 0
    %835 = vmatpush1.bf16.msra.mxu0 0
    %836 = vmatprep.subr.bf16.mxu0 0
    %837 = vmatpush1.bf16.msra.mxu0 0
    %838 = vmatprep.subr.bf16.mxu0 0
    %839 = vmatpush1.bf16.msra.mxu0 0
    %840 = vmatprep.mubr.bf16.mxu0 0
    %841 = vmatmul.mubr.bf16.gmra.mrb[0].mxu0 %v806
    %v842 = vpop.f32.mrb[0].mxu0
    %v843 = vadd.f32 0.0, %v842
    %v844 = vpop.f32.mrb[0].mxu0
    %v845 = vpop.f32.mrb[0].mxu0
    %v846 = vadd.f32 0.0, %v845
    %v847 = vpop.f32.mrb[0].mxu0
    %848 = vdwg.mxu0
    %v849 = vadd.f32 %v674, %v843
    %v850 = vadd.f32 %v677, %v846
    %851 = vrot.lane.b32.xlu0 %v299, 80
    %v852 = vpop.permute.xlu0 %851
    %v854 = vsel %vm344, %v852, 0
    %856 = vmatprep.subr.bf16.mxu0 0
    %857 = vmatpush1.bf16.msra.mxu0 %v336
    %858 = vmatprep.subr.bf16.mxu0 0
    %859 = vmatpush1.bf16.msra.mxu0 0
    %860 = vmatprep.subr.bf16.mxu0 0
    %861 = vmatpush1.bf16.msra.mxu0 0
    %862 = vmatprep.subr.bf16.mxu0 0
    %863 = vmatpush1.bf16.msra.mxu0 0
    %864 = vmatprep.subr.bf16.mxu0 0
    %865 = vmatpush1.bf16.msra.mxu0 0
    %866 = vmatprep.subr.bf16.mxu0 0
    %867 = vmatpush1.bf16.msra.mxu0 0
    %868 = vmatprep.subr.bf16.mxu0 0
    %869 = vmatpush1.bf16.msra.mxu0 0
    %870 = vmatprep.subr.bf16.mxu0 0
    %871 = vmatpush1.bf16.msra.mxu0 0
    %872 = vmatprep.subr.bf16.mxu0 0
    %873 = vmatpush1.bf16.msra.mxu0 0
    %874 = vmatprep.subr.bf16.mxu0 0
    %875 = vmatpush1.bf16.msra.mxu0 0
    %876 = vmatprep.subr.bf16.mxu0 0
    %877 = vmatpush1.bf16.msra.mxu0 0
    %878 = vmatprep.subr.bf16.mxu0 0
    %879 = vmatpush1.bf16.msra.mxu0 0
    %880 = vmatprep.subr.bf16.mxu0 0
    %881 = vmatpush1.bf16.msra.mxu0 0
    %882 = vmatprep.subr.bf16.mxu0 0
    %883 = vmatpush1.bf16.msra.mxu0 0
    %884 = vmatprep.subr.bf16.mxu0 0
    %885 = vmatpush1.bf16.msra.mxu0 0
    %886 = vmatprep.subr.bf16.mxu0 0
    %887 = vmatpush1.bf16.msra.mxu0 0
    %888 = vmatprep.mubr.bf16.mxu0 0
    %889 = vmatmul.mubr.bf16.gmra.mrb[0].mxu0 %v854
    %v890 = vpop.f32.mrb[0].mxu0
    %v891 = vadd.f32 0.0, %v890
    %v892 = vpop.f32.mrb[0].mxu0
    %v893 = vpop.f32.mrb[0].mxu0
    %v894 = vadd.f32 0.0, %v893
    %v895 = vpop.f32.mrb[0].mxu0
    %896 = vdwg.mxu0
    %v897 = vsel %vm344, %v891, -inf
    %898 = vmax.xlane.f32.xlu0 %v897
    %v899 = vpop.xlane.xlu0 %898
    %v900 = vsel %vm344, %v894, -inf
    %901 = vmax.xlane.f32.xlu0 %v900
    %v902 = vpop.xlane.xlu0 %901
    %v903 = vsub.f32 %v891, %v899
    %v904 = vsub.f32 %v894, %v902
    %v905 = vmul.f32 %v903, 1.442695
    %v906 = vpow.pop %v905
    %v907 = vmul.f32 %v904, 1.442695
    %v908 = vpow.pop %v907
    %v909 = vsel %vm344, %v906, 0.0
    %910 = vadd.xlane.f32.xlu0 %v909
    %v911 = vpop.xlane.xlu0 %910
    %v912 = vsel %vm344, %v908, 0.0
    %913 = vadd.xlane.f32.xlu0 %v912
    %v914 = vpop.xlane.xlu0 %913
    %v915 = vpack.c.bf16 %v908, %v906
    %916 = vrot.lane.b32.xlu0 %v341, 80
    %v917 = vpop.permute.xlu0 %916
    %v920 = vsel %vm344, %v915, 0
    %922 = vmatprep.subr.bf16.mxu0 0
    %923 = vmatpush1.bf16.msra.mxu0 %v917
    %924 = vmatprep.subr.bf16.mxu0 0
    %925 = vmatpush1.bf16.msra.mxu0 0
    %926 = vmatprep.subr.bf16.mxu0 0
    %927 = vmatpush1.bf16.msra.mxu0 0
    %928 = vmatprep.subr.bf16.mxu0 0
    %929 = vmatpush1.bf16.msra.mxu0 0
    %930 = vmatprep.subr.bf16.mxu0 0
    %931 = vmatpush1.bf16.msra.mxu0 0
    %932 = vmatprep.subr.bf16.mxu0 0
    %933 = vmatpush1.bf16.msra.mxu0 0
    %934 = vmatprep.subr.bf16.mxu0 0
    %935 = vmatpush1.bf16.msra.mxu0 0
    %936 = vmatprep.subr.bf16.mxu0 0
    %937 = vmatpush1.bf16.msra.mxu0 0
    %938 = vmatprep.subr.bf16.mxu0 0
    %939 = vmatpush1.bf16.msra.mxu0 0
    %940 = vmatprep.subr.bf16.mxu0 0
    %941 = vmatpush1.bf16.msra.mxu0 0
    %942 = vmatprep.subr.bf16.mxu0 0
    %943 = vmatpush1.bf16.msra.mxu0 0
    %944 = vmatprep.subr.bf16.mxu0 0
    %945 = vmatpush1.bf16.msra.mxu0 0
    %946 = vmatprep.subr.bf16.mxu0 0
    %947 = vmatpush1.bf16.msra.mxu0 0
    %948 = vmatprep.subr.bf16.mxu0 0
    %949 = vmatpush1.bf16.msra.mxu0 0
    %950 = vmatprep.subr.bf16.mxu0 0
    %951 = vmatpush1.bf16.msra.mxu0 0
    %952 = vmatprep.subr.bf16.mxu0 0
    %953 = vmatpush1.bf16.msra.mxu0 0
    %954 = vmatprep.mubr.bf16.mxu0 0
    %955 = vmatmul.mubr.bf16.gmra.mrb[0].mxu0 %v920
    %v956 = vpop.f32.mrb[0].mxu0
    %v957 = vadd.f32 0.0, %v956
    %v958 = vpop.f32.mrb[0].mxu0
    %v959 = vpop.f32.mrb[0].mxu0
    %v960 = vadd.f32 0.0, %v959
    %v961 = vpop.f32.mrb[0].mxu0
    %962 = vdwg.mxu0
    %v963 = vrcp.pop %v911
    %v964 = vrcp.pop %v914
    %v965 = vmul.f32 %v957, %v963
    %v966 = vmul.f32 %v960, %v964
    %v967 = vpack.c.bf16 %v966, %v965
    %v968 = vld [vmem:[%s4 + $0x18] sm:$0xf]
    %v969 = vld [vmem:[%s4 + $0x1c] sm:$0xf]
    %v972 = vunpack.c.l.b16 %v968
    %v973 = vunpack.c.l.b16 %v969
    %v974 = vpack.c.b16 %v973, %v972
    %v977 = vsel %vm344, %v967, 0
    %979 = vmatprep.subr.bf16.mxu0 0
    %980 = vmatpush1.bf16.msra.mxu0 %v974
    %981 = vmatprep.subr.bf16.mxu0 0
    %982 = vmatpush1.bf16.msra.mxu0 0
    %983 = vmatprep.subr.bf16.mxu0 0
    %984 = vmatpush1.bf16.msra.mxu0 0
    %985 = vmatprep.subr.bf16.mxu0 0
    %986 = vmatpush1.bf16.msra.mxu0 0
    %987 = vmatprep.subr.bf16.mxu0 0
    %988 = vmatpush1.bf16.msra.mxu0 0
    %989 = vmatprep.subr.bf16.mxu0 0
    %990 = vmatpush1.bf16.msra.mxu0 0
    %991 = vmatprep.subr.bf16.mxu0 0
    %992 = vmatpush1.bf16.msra.mxu0 0
    %993 = vmatprep.subr.bf16.mxu0 0
    %994 = vmatpush1.bf16.msra.mxu0 0
    %995 = vmatprep.subr.bf16.mxu0 0
    %996 = vmatpush1.bf16.msra.mxu0 0
    %997 = vmatprep.subr.bf16.mxu0 0
    %998 = vmatpush1.bf16.msra.mxu0 0
    %999 = vmatprep.subr.bf16.mxu0 0
    %1000 = vmatpush1.bf16.msra.mxu0 0
    %1001 = vmatprep.subr.bf16.mxu0 0
    %1002 = vmatpush1.bf16.msra.mxu0 0
    %1003 = vmatprep.subr.bf16.mxu0 0
    %1004 = vmatpush1.bf16.msra.mxu0 0
    %1005 = vmatprep.subr.bf16.mxu0 0
    %1006 = vmatpush1.bf16.msra.mxu0 0
    %1007 = vmatprep.subr.bf16.mxu0 0
    %1008 = vmatpush1.bf16.msra.mxu0 0
    %1009 = vmatprep.subr.bf16.mxu0 0
    %1010 = vmatpush1.bf16.msra.mxu0 0
    %1011 = vmatprep.mubr.bf16.mxu0 0
    %1012 = vmatmul.mubr.bf16.gmra.mrb[0].mxu0 %v977
    %v1013 = vpop.f32.mrb[0].mxu0
    %v1014 = vadd.f32 0.0, %v1013
    %v1015 = vpop.f32.mrb[0].mxu0
    %v1016 = vpop.f32.mrb[0].mxu0
    %v1017 = vadd.f32 0.0, %v1016
    %v1018 = vpop.f32.mrb[0].mxu0
    %1019 = vdwg.mxu0
    %v1020 = vadd.f32 %v849, %v1014
    %v1021 = vadd.f32 %v850, %v1017
    %1022 = vrot.lane.b32.xlu0 %v299, 64
    %v1023 = vpop.permute.xlu0 %1022
    %v1025 = vsel %vm344, %v1023, 0
    %1027 = vmatprep.subr.bf16.mxu0 0
    %1028 = vmatpush1.bf16.msra.mxu0 %v337
    %1029 = vmatprep.subr.bf16.mxu0 0
    %1030 = vmatpush1.bf16.msra.mxu0 0
    %1031 = vmatprep.subr.bf16.mxu0 0
    %1032 = vmatpush1.bf16.msra.mxu0 0
    %1033 = vmatprep.subr.bf16.mxu0 0
    %1034 = vmatpush1.bf16.msra.mxu0 0
    %1035 = vmatprep.subr.bf16.mxu0 0
    %1036 = vmatpush1.bf16.msra.mxu0 0
    %1037 = vmatprep.subr.bf16.mxu0 0
    %1038 = vmatpush1.bf16.msra.mxu0 0
    %1039 = vmatprep.subr.bf16.mxu0 0
    %1040 = vmatpush1.bf16.msra.mxu0 0
    %1041 = vmatprep.subr.bf16.mxu0 0
    %1042 = vmatpush1.bf16.msra.mxu0 0
    %1043 = vmatprep.subr.bf16.mxu0 0
    %1044 = vmatpush1.bf16.msra.mxu0 0
    %1045 = vmatprep.subr.bf16.mxu0 0
    %1046 = vmatpush1.bf16.msra.mxu0 0
    %1047 = vmatprep.subr.bf16.mxu0 0
    %1048 = vmatpush1.bf16.msra.mxu0 0
    %1049 = vmatprep.subr.bf16.mxu0 0
    %1050 = vmatpush1.bf16.msra.mxu0 0
    %1051 = vmatprep.subr.bf16.mxu0 0
    %1052 = vmatpush1.bf16.msra.mxu0 0
    %1053 = vmatprep.subr.bf16.mxu0 0
    %1054 = vmatpush1.bf16.msra.mxu0 0
    %1055 = vmatprep.subr.bf16.mxu0 0
    %1056 = vmatpush1.bf16.msra.mxu0 0
    %1057 = vmatprep.subr.bf16.mxu0 0
    %1058 = vmatpush1.bf16.msra.mxu0 0
    %1059 = vmatprep.mubr.bf16.mxu0 0
    %1060 = vmatmul.mubr.bf16.gmra.mrb[0].mxu0 %v1025
    %v1061 = vpop.f32.mrb[0].mxu0
    %v1062 = vadd.f32 0.0, %v1061
    %v1063 = vpop.f32.mrb[0].mxu0
    %v1064 = vpop.f32.mrb[0].mxu0
    %v1065 = vadd.f32 0.0, %v1064
    %v1066 = vpop.f32.mrb[0].mxu0
    %1067 = vdwg.mxu0
    %v1068 = vsel %vm344, %v1062, -inf
    %1069 = vmax.xlane.f32.xlu0 %v1068
    %v1070 = vpop.xlane.xlu0 %1069
    %v1071 = vsel %vm344, %v1065, -inf
    %1072 = vmax.xlane.f32.xlu0 %v1071
    %v1073 = vpop.xlane.xlu0 %1072
    %v1074 = vsub.f32 %v1062, %v1070
    %v1075 = vsub.f32 %v1065, %v1073
    %v1076 = vmul.f32 %v1074, 1.442695
    %v1077 = vpow.pop %v1076
    %v1078 = vmul.f32 %v1075, 1.442695
    %v1079 = vpow.pop %v1078
    %v1080 = vsel %vm344, %v1077, 0.0
    %1081 = vadd.xlane.f32.xlu0 %v1080
    %v1082 = vpop.xlane.xlu0 %1081
    %v1083 = vsel %vm344, %v1079, 0.0
    %1084 = vadd.xlane.f32.xlu0 %v1083
    %v1085 = vpop.xlane.xlu0 %1084
    %v1086 = vpack.c.bf16 %v1079, %v1077
    %1087 = vrot.lane.b32.xlu0 %v341, 64
    %v1088 = vpop.permute.xlu0 %1087
    %v1091 = vsel %vm344, %v1086, 0
    %1093 = vmatprep.subr.bf16.mxu0 0
    %1094 = vmatpush1.bf16.msra.mxu0 %v1088
    %1095 = vmatprep.subr.bf16.mxu0 0
    %1096 = vmatpush1.bf16.msra.mxu0 0
    %1097 = vmatprep.subr.bf16.mxu0 0
    %1098 = vmatpush1.bf16.msra.mxu0 0
    %1099 = vmatprep.subr.bf16.mxu0 0
    %1100 = vmatpush1.bf16.msra.mxu0 0
    %1101 = vmatprep.subr.bf16.mxu0 0
    %1102 = vmatpush1.bf16.msra.mxu0 0
    %1103 = vmatprep.subr.bf16.mxu0 0
    %1104 = vmatpush1.bf16.msra.mxu0 0
    %1105 = vmatprep.subr.bf16.mxu0 0
    %1106 = vmatpush1.bf16.msra.mxu0 0
    %1107 = vmatprep.subr.bf16.mxu0 0
    %1108 = vmatpush1.bf16.msra.mxu0 0
    %1109 = vmatprep.subr.bf16.mxu0 0
    %1110 = vmatpush1.bf16.msra.mxu0 0
    %1111 = vmatprep.subr.bf16.mxu0 0
    %1112 = vmatpush1.bf16.msra.mxu0 0
    %1113 = vmatprep.subr.bf16.mxu0 0
    %1114 = vmatpush1.bf16.msra.mxu0 0
    %1115 = vmatprep.subr.bf16.mxu0 0
    %1116 = vmatpush1.bf16.msra.mxu0 0
    %1117 = vmatprep.subr.bf16.mxu0 0
    %1118 = vmatpush1.bf16.msra.mxu0 0
    %1119 = vmatprep.subr.bf16.mxu0 0
    %1120 = vmatpush1.bf16.msra.mxu0 0
    %1121 = vmatprep.subr.bf16.mxu0 0
    %1122 = vmatpush1.bf16.msra.mxu0 0
    %1123 = vmatprep.subr.bf16.mxu0 0
    %1124 = vmatpush1.bf16.msra.mxu0 0
    %1125 = vmatprep.mubr.bf16.mxu0 0
    %1126 = vmatmul.mubr.bf16.gmra.mrb[0].mxu0 %v1091
    %v1127 = vpop.f32.mrb[0].mxu0
    %v1128 = vadd.f32 0.0, %v1127
    %v1129 = vpop.f32.mrb[0].mxu0
    %v1130 = vpop.f32.mrb[0].mxu0
    %v1131 = vadd.f32 0.0, %v1130
    %v1132 = vpop.f32.mrb[0].mxu0
    %1133 = vdwg.mxu0
    %v1134 = vrcp.pop %v1082
    %v1135 = vrcp.pop %v1085
    %v1136 = vmul.f32 %v1128, %v1134
    %v1137 = vmul.f32 %v1131, %v1135
    %v1138 = vpack.c.bf16 %v1137, %v1136
    %v1139 = vld [vmem:[%s4 + $0x20] sm:$0xf]
    %v1140 = vld [vmem:[%s4 + $0x24] sm:$0xf]
    %v1143 = vunpack.c.l.b16 %v1139
    %v1144 = vunpack.c.l.b16 %v1140
    %v1145 = vpack.c.b16 %v1144, %v1143
    %v1148 = vsel %vm344, %v1138, 0
    %1150 = vmatprep.subr.bf16.mxu0 0
    %1151 = vmatpush1.bf16.msra.mxu0 %v1145
    %1152 = vmatprep.subr.bf16.mxu0 0
    %1153 = vmatpush1.bf16.msra.mxu0 0
    %1154 = vmatprep.subr.bf16.mxu0 0
    %1155 = vmatpush1.bf16.msra.mxu0 0
    %1156 = vmatprep.subr.bf16.mxu0 0
    %1157 = vmatpush1.bf16.msra.mxu0 0
    %1158 = vmatprep.subr.bf16.mxu0 0
    %1159 = vmatpush1.bf16.msra.mxu0 0
    %1160 = vmatprep.subr.bf16.mxu0 0
    %1161 = vmatpush1.bf16.msra.mxu0 0
    %1162 = vmatprep.subr.bf16.mxu0 0
    %1163 = vmatpush1.bf16.msra.mxu0 0
    %1164 = vmatprep.subr.bf16.mxu0 0
    %1165 = vmatpush1.bf16.msra.mxu0 0
    %1166 = vmatprep.subr.bf16.mxu0 0
    %1167 = vmatpush1.bf16.msra.mxu0 0
    %1168 = vmatprep.subr.bf16.mxu0 0
    %1169 = vmatpush1.bf16.msra.mxu0 0
    %1170 = vmatprep.subr.bf16.mxu0 0
    %1171 = vmatpush1.bf16.msra.mxu0 0
    %1172 = vmatprep.subr.bf16.mxu0 0
    %1173 = vmatpush1.bf16.msra.mxu0 0
    %1174 = vmatprep.subr.bf16.mxu0 0
    %1175 = vmatpush1.bf16.msra.mxu0 0
    %1176 = vmatprep.subr.bf16.mxu0 0
    %1177 = vmatpush1.bf16.msra.mxu0 0
    %1178 = vmatprep.subr.bf16.mxu0 0
    %1179 = vmatpush1.bf16.msra.mxu0 0
    %1180 = vmatprep.subr.bf16.mxu0 0
    %1181 = vmatpush1.bf16.msra.mxu0 0
    %1182 = vmatprep.mubr.bf16.mxu0 0
    %1183 = vmatmul.mubr.bf16.gmra.mrb[0].mxu0 %v1148
    %v1184 = vpop.f32.mrb[0].mxu0
    %v1185 = vadd.f32 0.0, %v1184
    %v1186 = vpop.f32.mrb[0].mxu0
    %v1187 = vpop.f32.mrb[0].mxu0
    %v1188 = vadd.f32 0.0, %v1187
    %v1189 = vpop.f32.mrb[0].mxu0
    %1190 = vdwg.mxu0
    %v1191 = vadd.f32 %v1020, %v1185
    %v1192 = vadd.f32 %v1021, %v1188
    %1193 = vrot.lane.b32.xlu0 %v299, 48
    %v1194 = vpop.permute.xlu0 %1193
    %v1196 = vsel %vm344, %v1194, 0
    %1198 = vmatprep.subr.bf16.mxu0 0
    %1199 = vmatpush1.bf16.msra.mxu0 %v338
    %1200 = vmatprep.subr.bf16.mxu0 0
    %1201 = vmatpush1.bf16.msra.mxu0 0
    %1202 = vmatprep.subr.bf16.mxu0 0
    %1203 = vmatpush1.bf16.msra.mxu0 0
    %1204 = vmatprep.subr.bf16.mxu0 0
    %1205 = vmatpush1.bf16.msra.mxu0 0
    %1206 = vmatprep.subr.bf16.mxu0 0
    %1207 = vmatpush1.bf16.msra.mxu0 0
    %1208 = vmatprep.subr.bf16.mxu0 0
    %1209 = vmatpush1.bf16.msra.mxu0 0
    %1210 = vmatprep.subr.bf16.mxu0 0
    %1211 = vmatpush1.bf16.msra.mxu0 0
    %1212 = vmatprep.subr.bf16.mxu0 0
    %1213 = vmatpush1.bf16.msra.mxu0 0
    %1214 = vmatprep.subr.bf16.mxu0 0
    %1215 = vmatpush1.bf16.msra.mxu0 0
    %1216 = vmatprep.subr.bf16.mxu0 0
    %1217 = vmatpush1.bf16.msra.mxu0 0
    %1218 = vmatprep.subr.bf16.mxu0 0
    %1219 = vmatpush1.bf16.msra.mxu0 0
    %1220 = vmatprep.subr.bf16.mxu0 0
    %1221 = vmatpush1.bf16.msra.mxu0 0
    %1222 = vmatprep.subr.bf16.mxu0 0
    %1223 = vmatpush1.bf16.msra.mxu0 0
    %1224 = vmatprep.subr.bf16.mxu0 0
    %1225 = vmatpush1.bf16.msra.mxu0 0
    %1226 = vmatprep.subr.bf16.mxu0 0
    %1227 = vmatpush1.bf16.msra.mxu0 0
    %1228 = vmatprep.subr.bf16.mxu0 0
    %1229 = vmatpush1.bf16.msra.mxu0 0
    %1230 = vmatprep.mubr.bf16.mxu0 0
    %1231 = vmatmul.mubr.bf16.gmra.mrb[0].mxu0 %v1196
    %v1232 = vpop.f32.mrb[0].mxu0
    %v1233 = vadd.f32 0.0, %v1232
    %v1234 = vpop.f32.mrb[0].mxu0
    %v1235 = vpop.f32.mrb[0].mxu0
    %v1236 = vadd.f32 0.0, %v1235
    %v1237 = vpop.f32.mrb[0].mxu0
    %1238 = vdwg.mxu0
    %v1239 = vsel %vm344, %v1233, -inf
    %1240 = vmax.xlane.f32.xlu0 %v1239
    %v1241 = vpop.xlane.xlu0 %1240
    %v1242 = vsel %vm344, %v1236, -inf
    %1243 = vmax.xlane.f32.xlu0 %v1242
    %v1244 = vpop.xlane.xlu0 %1243
    %v1245 = vsub.f32 %v1233, %v1241
    %v1246 = vsub.f32 %v1236, %v1244
    %v1247 = vmul.f32 %v1245, 1.442695
    %v1248 = vpow.pop %v1247
    %v1249 = vmul.f32 %v1246, 1.442695
    %v1250 = vpow.pop %v1249
    %v1251 = vsel %vm344, %v1248, 0.0
    %1252 = vadd.xlane.f32.xlu0 %v1251
    %v1253 = vpop.xlane.xlu0 %1252
    %v1254 = vsel %vm344, %v1250, 0.0
    %1255 = vadd.xlane.f32.xlu0 %v1254
    %v1256 = vpop.xlane.xlu0 %1255
    %v1257 = vpack.c.bf16 %v1250, %v1248
    %1258 = vrot.lane.b32.xlu0 %v341, 48
    %v1259 = vpop.permute.xlu0 %1258
    %v1262 = vsel %vm344, %v1257, 0
    %1264 = vmatprep.subr.bf16.mxu0 0
    %1265 = vmatpush1.bf16.msra.mxu0 %v1259
    %1266 = vmatprep.subr.bf16.mxu0 0
    %1267 = vmatpush1.bf16.msra.mxu0 0
    %1268 = vmatprep.subr.bf16.mxu0 0
    %1269 = vmatpush1.bf16.msra.mxu0 0
    %1270 = vmatprep.subr.bf16.mxu0 0
    %1271 = vmatpush1.bf16.msra.mxu0 0
    %1272 = vmatprep.subr.bf16.mxu0 0
    %1273 = vmatpush1.bf16.msra.mxu0 0
    %1274 = vmatprep.subr.bf16.mxu0 0
    %1275 = vmatpush1.bf16.msra.mxu0 0
    %1276 = vmatprep.subr.bf16.mxu0 0
    %1277 = vmatpush1.bf16.msra.mxu0 0
    %1278 = vmatprep.subr.bf16.mxu0 0
    %1279 = vmatpush1.bf16.msra.mxu0 0
    %1280 = vmatprep.subr.bf16.mxu0 0
    %1281 = vmatpush1.bf16.msra.mxu0 0
    %1282 = vmatprep.subr.bf16.mxu0 0
    %1283 = vmatpush1.bf16.msra.mxu0 0
    %1284 = vmatprep.subr.bf16.mxu0 0
    %1285 = vmatpush1.bf16.msra.mxu0 0
    %1286 = vmatprep.subr.bf16.mxu0 0
    %1287 = vmatpush1.bf16.msra.mxu0 0
    %1288 = vmatprep.subr.bf16.mxu0 0
    %1289 = vmatpush1.bf16.msra.mxu0 0
    %1290 = vmatprep.subr.bf16.mxu0 0
    %1291 = vmatpush1.bf16.msra.mxu0 0
    %1292 = vmatprep.subr.bf16.mxu0 0
    %1293 = vmatpush1.bf16.msra.mxu0 0
    %1294 = vmatprep.subr.bf16.mxu0 0
    %1295 = vmatpush1.bf16.msra.mxu0 0
    %1296 = vmatprep.mubr.bf16.mxu0 0
    %1297 = vmatmul.mubr.bf16.gmra.mrb[0].mxu0 %v1262
    %v1298 = vpop.f32.mrb[0].mxu0
    %v1299 = vadd.f32 0.0, %v1298
    %v1300 = vpop.f32.mrb[0].mxu0
    %v1301 = vpop.f32.mrb[0].mxu0
    %v1302 = vadd.f32 0.0, %v1301
    %v1303 = vpop.f32.mrb[0].mxu0
    %1304 = vdwg.mxu0
    %v1305 = vrcp.pop %v1253
    %v1306 = vrcp.pop %v1256
    %v1307 = vmul.f32 %v1299, %v1305
    %v1308 = vmul.f32 %v1302, %v1306
    %v1309 = vpack.c.bf16 %v1308, %v1307
    %v1310 = vld [vmem:[%s4 + $0x28] sm:$0xf]
    %v1311 = vld [vmem:[%s4 + $0x2c] sm:$0xf]
    %v1314 = vunpack.c.l.b16 %v1310
    %v1315 = vunpack.c.l.b16 %v1311
    %v1316 = vpack.c.b16 %v1315, %v1314
    %v1319 = vsel %vm344, %v1309, 0
    %1321 = vmatprep.subr.bf16.mxu0 0
    %1322 = vmatpush1.bf16.msra.mxu0 %v1316
    %1323 = vmatprep.subr.bf16.mxu0 0
    %1324 = vmatpush1.bf16.msra.mxu0 0
    %1325 = vmatprep.subr.bf16.mxu0 0
    %1326 = vmatpush1.bf16.msra.mxu0 0
    %1327 = vmatprep.subr.bf16.mxu0 0
    %1328 = vmatpush1.bf16.msra.mxu0 0
    %1329 = vmatprep.subr.bf16.mxu0 0
    %1330 = vmatpush1.bf16.msra.mxu0 0
    %1331 = vmatprep.subr.bf16.mxu0 0
    %1332 = vmatpush1.bf16.msra.mxu0 0
    %1333 = vmatprep.subr.bf16.mxu0 0
    %1334 = vmatpush1.bf16.msra.mxu0 0
    %1335 = vmatprep.subr.bf16.mxu0 0
    %1336 = vmatpush1.bf16.msra.mxu0 0
    %1337 = vmatprep.subr.bf16.mxu0 0
    %1338 = vmatpush1.bf16.msra.mxu0 0
    %1339 = vmatprep.subr.bf16.mxu0 0
    %1340 = vmatpush1.bf16.msra.mxu0 0
    %1341 = vmatprep.subr.bf16.mxu0 0
    %1342 = vmatpush1.bf16.msra.mxu0 0
    %1343 = vmatprep.subr.bf16.mxu0 0
    %1344 = vmatpush1.bf16.msra.mxu0 0
    %1345 = vmatprep.subr.bf16.mxu0 0
    %1346 = vmatpush1.bf16.msra.mxu0 0
    %1347 = vmatprep.subr.bf16.mxu0 0
    %1348 = vmatpush1.bf16.msra.mxu0 0
    %1349 = vmatprep.subr.bf16.mxu0 0
    %1350 = vmatpush1.bf16.msra.mxu0 0
    %1351 = vmatprep.subr.bf16.mxu0 0
    %1352 = vmatpush1.bf16.msra.mxu0 0
    %1353 = vmatprep.mubr.bf16.mxu0 0
    %1354 = vmatmul.mubr.bf16.gmra.mrb[0].mxu0 %v1319
    %v1355 = vpop.f32.mrb[0].mxu0
    %v1356 = vadd.f32 0.0, %v1355
    %v1357 = vpop.f32.mrb[0].mxu0
    %v1358 = vpop.f32.mrb[0].mxu0
    %v1359 = vadd.f32 0.0, %v1358
    %v1360 = vpop.f32.mrb[0].mxu0
    %1361 = vdwg.mxu0
    %v1362 = vadd.f32 %v1191, %v1356
    %v1363 = vadd.f32 %v1192, %v1359
    %1364 = vrot.lane.b32.xlu0 %v299, 32
    %v1365 = vpop.permute.xlu0 %1364
    %v1367 = vsel %vm344, %v1365, 0
    %1369 = vmatprep.subr.bf16.mxu0 0
    %1370 = vmatpush1.bf16.msra.mxu0 %v339
    %1371 = vmatprep.subr.bf16.mxu0 0
    %1372 = vmatpush1.bf16.msra.mxu0 0
    %1373 = vmatprep.subr.bf16.mxu0 0
    %1374 = vmatpush1.bf16.msra.mxu0 0
    %1375 = vmatprep.subr.bf16.mxu0 0
    %1376 = vmatpush1.bf16.msra.mxu0 0
    %1377 = vmatprep.subr.bf16.mxu0 0
    %1378 = vmatpush1.bf16.msra.mxu0 0
    %1379 = vmatprep.subr.bf16.mxu0 0
    %1380 = vmatpush1.bf16.msra.mxu0 0
    %1381 = vmatprep.subr.bf16.mxu0 0
    %1382 = vmatpush1.bf16.msra.mxu0 0
    %1383 = vmatprep.subr.bf16.mxu0 0
    %1384 = vmatpush1.bf16.msra.mxu0 0
    %1385 = vmatprep.subr.bf16.mxu0 0
    %1386 = vmatpush1.bf16.msra.mxu0 0
    %1387 = vmatprep.subr.bf16.mxu0 0
    %1388 = vmatpush1.bf16.msra.mxu0 0
    %1389 = vmatprep.subr.bf16.mxu0 0
    %1390 = vmatpush1.bf16.msra.mxu0 0
    %1391 = vmatprep.subr.bf16.mxu0 0
    %1392 = vmatpush1.bf16.msra.mxu0 0
    %1393 = vmatprep.subr.bf16.mxu0 0
    %1394 = vmatpush1.bf16.msra.mxu0 0
    %1395 = vmatprep.subr.bf16.mxu0 0
    %1396 = vmatpush1.bf16.msra.mxu0 0
    %1397 = vmatprep.subr.bf16.mxu0 0
    %1398 = vmatpush1.bf16.msra.mxu0 0
    %1399 = vmatprep.subr.bf16.mxu0 0
    %1400 = vmatpush1.bf16.msra.mxu0 0
    %1401 = vmatprep.mubr.bf16.mxu0 0
    %1402 = vmatmul.mubr.bf16.gmra.mrb[0].mxu0 %v1367
    %v1403 = vpop.f32.mrb[0].mxu0
    %v1404 = vadd.f32 0.0, %v1403
    %v1405 = vpop.f32.mrb[0].mxu0
    %v1406 = vpop.f32.mrb[0].mxu0
    %v1407 = vadd.f32 0.0, %v1406
    %v1408 = vpop.f32.mrb[0].mxu0
    %1409 = vdwg.mxu0
    %v1410 = vsel %vm344, %v1404, -inf
    %1411 = vmax.xlane.f32.xlu0 %v1410
    %v1412 = vpop.xlane.xlu0 %1411
    %v1413 = vsel %vm344, %v1407, -inf
    %1414 = vmax.xlane.f32.xlu0 %v1413
    %v1415 = vpop.xlane.xlu0 %1414
    %v1416 = vsub.f32 %v1404, %v1412
    %v1417 = vsub.f32 %v1407, %v1415
    %v1418 = vmul.f32 %v1416, 1.442695
    %v1419 = vpow.pop %v1418
    %v1420 = vmul.f32 %v1417, 1.442695
    %v1421 = vpow.pop %v1420
    %v1422 = vsel %vm344, %v1419, 0.0
    %1423 = vadd.xlane.f32.xlu0 %v1422
    %v1424 = vpop.xlane.xlu0 %1423
    %v1425 = vsel %vm344, %v1421, 0.0
    %1426 = vadd.xlane.f32.xlu0 %v1425
    %v1427 = vpop.xlane.xlu0 %1426
    %v1428 = vpack.c.bf16 %v1421, %v1419
    %1429 = vrot.lane.b32.xlu0 %v341, 32
    %v1430 = vpop.permute.xlu0 %1429
    %v1433 = vsel %vm344, %v1428, 0
    %1435 = vmatprep.subr.bf16.mxu0 0
    %1436 = vmatpush1.bf16.msra.mxu0 %v1430
    %1437 = vmatprep.subr.bf16.mxu0 0
    %1438 = vmatpush1.bf16.msra.mxu0 0
    %1439 = vmatprep.subr.bf16.mxu0 0
    %1440 = vmatpush1.bf16.msra.mxu0 0
    %1441 = vmatprep.subr.bf16.mxu0 0
    %1442 = vmatpush1.bf16.msra.mxu0 0
    %1443 = vmatprep.subr.bf16.mxu0 0
    %1444 = vmatpush1.bf16.msra.mxu0 0
    %1445 = vmatprep.subr.bf16.mxu0 0
    %1446 = vmatpush1.bf16.msra.mxu0 0
    %1447 = vmatprep.subr.bf16.mxu0 0
    %1448 = vmatpush1.bf16.msra.mxu0 0
    %1449 = vmatprep.subr.bf16.mxu0 0
    %1450 = vmatpush1.bf16.msra.mxu0 0
    %1451 = vmatprep.subr.bf16.mxu0 0
    %1452 = vmatpush1.bf16.msra.mxu0 0
    %1453 = vmatprep.subr.bf16.mxu0 0
    %1454 = vmatpush1.bf16.msra.mxu0 0
    %1455 = vmatprep.subr.bf16.mxu0 0
    %1456 = vmatpush1.bf16.msra.mxu0 0
    %1457 = vmatprep.subr.bf16.mxu0 0
    %1458 = vmatpush1.bf16.msra.mxu0 0
    %1459 = vmatprep.subr.bf16.mxu0 0
    %1460 = vmatpush1.bf16.msra.mxu0 0
    %1461 = vmatprep.subr.bf16.mxu0 0
    %1462 = vmatpush1.bf16.msra.mxu0 0
    %1463 = vmatprep.subr.bf16.mxu0 0
    %1464 = vmatpush1.bf16.msra.mxu0 0
    %1465 = vmatprep.subr.bf16.mxu0 0
    %1466 = vmatpush1.bf16.msra.mxu0 0
    %1467 = vmatprep.mubr.bf16.mxu0 0
    %1468 = vmatmul.mubr.bf16.gmra.mrb[0].mxu0 %v1433
    %v1469 = vpop.f32.mrb[0].mxu0
    %v1470 = vadd.f32 0.0, %v1469
    %v1471 = vpop.f32.mrb[0].mxu0
    %v1472 = vpop.f32.mrb[0].mxu0
    %v1473 = vadd.f32 0.0, %v1472
    %v1474 = vpop.f32.mrb[0].mxu0
    %1475 = vdwg.mxu0
    %v1476 = vrcp.pop %v1424
    %v1477 = vrcp.pop %v1427
    %v1478 = vmul.f32 %v1470, %v1476
    %v1479 = vmul.f32 %v1473, %v1477
    %v1480 = vpack.c.bf16 %v1479, %v1478
    %v1481 = vld [vmem:[%s4 + $0x30] sm:$0xf]
    %v1482 = vld [vmem:[%s4 + $0x34] sm:$0xf]
    %v1485 = vunpack.c.l.b16 %v1481
    %v1486 = vunpack.c.l.b16 %v1482
    %v1487 = vpack.c.b16 %v1486, %v1485
    %v1490 = vsel %vm344, %v1480, 0
    %1492 = vmatprep.subr.bf16.mxu0 0
    %1493 = vmatpush1.bf16.msra.mxu0 %v1487
    %1494 = vmatprep.subr.bf16.mxu0 0
    %1495 = vmatpush1.bf16.msra.mxu0 0
    %1496 = vmatprep.subr.bf16.mxu0 0
    %1497 = vmatpush1.bf16.msra.mxu0 0
    %1498 = vmatprep.subr.bf16.mxu0 0
    %1499 = vmatpush1.bf16.msra.mxu0 0
    %1500 = vmatprep.subr.bf16.mxu0 0
    %1501 = vmatpush1.bf16.msra.mxu0 0
    %1502 = vmatprep.subr.bf16.mxu0 0
    %1503 = vmatpush1.bf16.msra.mxu0 0
    %1504 = vmatprep.subr.bf16.mxu0 0
    %1505 = vmatpush1.bf16.msra.mxu0 0
    %1506 = vmatprep.subr.bf16.mxu0 0
    %1507 = vmatpush1.bf16.msra.mxu0 0
    %1508 = vmatprep.subr.bf16.mxu0 0
    %1509 = vmatpush1.bf16.msra.mxu0 0
    %1510 = vmatprep.subr.bf16.mxu0 0
    %1511 = vmatpush1.bf16.msra.mxu0 0
    %1512 = vmatprep.subr.bf16.mxu0 0
    %1513 = vmatpush1.bf16.msra.mxu0 0
    %1514 = vmatprep.subr.bf16.mxu0 0
    %1515 = vmatpush1.bf16.msra.mxu0 0
    %1516 = vmatprep.subr.bf16.mxu0 0
    %1517 = vmatpush1.bf16.msra.mxu0 0
    %1518 = vmatprep.subr.bf16.mxu0 0
    %1519 = vmatpush1.bf16.msra.mxu0 0
    %1520 = vmatprep.subr.bf16.mxu0 0
    %1521 = vmatpush1.bf16.msra.mxu0 0
    %1522 = vmatprep.subr.bf16.mxu0 0
    %1523 = vmatpush1.bf16.msra.mxu0 0
    %1524 = vmatprep.mubr.bf16.mxu0 0
    %1525 = vmatmul.mubr.bf16.gmra.mrb[0].mxu0 %v1490
    %v1526 = vpop.f32.mrb[0].mxu0
    %v1527 = vadd.f32 0.0, %v1526
    %v1528 = vpop.f32.mrb[0].mxu0
    %v1529 = vpop.f32.mrb[0].mxu0
    %v1530 = vadd.f32 0.0, %v1529
    %v1531 = vpop.f32.mrb[0].mxu0
    %1532 = vdwg.mxu0
    %v1533 = vadd.f32 %v1362, %v1527
    %v1534 = vadd.f32 %v1363, %v1530
    %1535 = vrot.lane.b32.xlu0 %v299, 16
    %v1536 = vpop.permute.xlu0 %1535
    %v1538 = vsel %vm344, %v1536, 0
    %1540 = vmatprep.subr.bf16.mxu0 0
    %1541 = vmatpush1.bf16.msra.mxu0 %v340
    %1542 = vmatprep.subr.bf16.mxu0 0
    %1543 = vmatpush1.bf16.msra.mxu0 0
    %1544 = vmatprep.subr.bf16.mxu0 0
    %1545 = vmatpush1.bf16.msra.mxu0 0
    %1546 = vmatprep.subr.bf16.mxu0 0
    %1547 = vmatpush1.bf16.msra.mxu0 0
    %1548 = vmatprep.subr.bf16.mxu0 0
    %1549 = vmatpush1.bf16.msra.mxu0 0
    %1550 = vmatprep.subr.bf16.mxu0 0
    %1551 = vmatpush1.bf16.msra.mxu0 0
    %1552 = vmatprep.subr.bf16.mxu0 0
    %1553 = vmatpush1.bf16.msra.mxu0 0
    %1554 = vmatprep.subr.bf16.mxu0 0
    %1555 = vmatpush1.bf16.msra.mxu0 0
    %1556 = vmatprep.subr.bf16.mxu0 0
    %1557 = vmatpush1.bf16.msra.mxu0 0
    %1558 = vmatprep.subr.bf16.mxu0 0
    %1559 = vmatpush1.bf16.msra.mxu0 0
    %1560 = vmatprep.subr.bf16.mxu0 0
    %1561 = vmatpush1.bf16.msra.mxu0 0
    %1562 = vmatprep.subr.bf16.mxu0 0
    %1563 = vmatpush1.bf16.msra.mxu0 0
    %1564 = vmatprep.subr.bf16.mxu0 0
    %1565 = vmatpush1.bf16.msra.mxu0 0
    %1566 = vmatprep.subr.bf16.mxu0 0
    %1567 = vmatpush1.bf16.msra.mxu0 0
    %1568 = vmatprep.subr.bf16.mxu0 0
    %1569 = vmatpush1.bf16.msra.mxu0 0
    %1570 = vmatprep.subr.bf16.mxu0 0
    %1571 = vmatpush1.bf16.msra.mxu0 0
    %1572 = vmatprep.mubr.bf16.mxu0 0
    %1573 = vmatmul.mubr.bf16.gmra.mrb[0].mxu0 %v1538
    %v1574 = vpop.f32.mrb[0].mxu0
    %v1575 = vadd.f32 0.0, %v1574
    %v1576 = vpop.f32.mrb[0].mxu0
    %v1577 = vpop.f32.mrb[0].mxu0
    %v1578 = vadd.f32 0.0, %v1577
    %v1579 = vpop.f32.mrb[0].mxu0
    %1580 = vdwg.mxu0
    %v1581 = vsel %vm344, %v1575, -inf
    %1582 = vmax.xlane.f32.xlu0 %v1581
    %v1583 = vpop.xlane.xlu0 %1582
    %v1584 = vsel %vm344, %v1578, -inf
    %1585 = vmax.xlane.f32.xlu0 %v1584
    %v1586 = vpop.xlane.xlu0 %1585
    %v1587 = vsub.f32 %v1575, %v1583
    %v1588 = vsub.f32 %v1578, %v1586
    %v1589 = vmul.f32 %v1587, 1.442695
    %v1590 = vpow.pop %v1589
    %v1591 = vmul.f32 %v1588, 1.442695
    %v1592 = vpow.pop %v1591
    %v1593 = vsel %vm344, %v1590, 0.0
    %1594 = vadd.xlane.f32.xlu0 %v1593
    %v1595 = vpop.xlane.xlu0 %1594
    %v1596 = vsel %vm344, %v1592, 0.0
    %1597 = vadd.xlane.f32.xlu0 %v1596
    %v1598 = vpop.xlane.xlu0 %1597
    %v1599 = vpack.c.bf16 %v1592, %v1590
    %1600 = vrot.lane.b32.xlu0 %v341, 16
    %v1601 = vpop.permute.xlu0 %1600
    %v1604 = vsel %vm344, %v1599, 0
    %1606 = vmatprep.subr.bf16.mxu0 0
    %1607 = vmatpush1.bf16.msra.mxu0 %v1601
    %1608 = vmatprep.subr.bf16.mxu0 0
    %1609 = vmatpush1.bf16.msra.mxu0 0
    %1610 = vmatprep.subr.bf16.mxu0 0
    %1611 = vmatpush1.bf16.msra.mxu0 0
    %1612 = vmatprep.subr.bf16.mxu0 0
    %1613 = vmatpush1.bf16.msra.mxu0 0
    %1614 = vmatprep.subr.bf16.mxu0 0
    %1615 = vmatpush1.bf16.msra.mxu0 0
    %1616 = vmatprep.subr.bf16.mxu0 0
    %1617 = vmatpush1.bf16.msra.mxu0 0
    %1618 = vmatprep.subr.bf16.mxu0 0
    %1619 = vmatpush1.bf16.msra.mxu0 0
    %1620 = vmatprep.subr.bf16.mxu0 0
    %1621 = vmatpush1.bf16.msra.mxu0 0
    %1622 = vmatprep.subr.bf16.mxu0 0
    %1623 = vmatpush1.bf16.msra.mxu0 0
    %1624 = vmatprep.subr.bf16.mxu0 0
    %1625 = vmatpush1.bf16.msra.mxu0 0
    %1626 = vmatprep.subr.bf16.mxu0 0
    %1627 = vmatpush1.bf16.msra.mxu0 0
    %1628 = vmatprep.subr.bf16.mxu0 0
    %1629 = vmatpush1.bf16.msra.mxu0 0
    %1630 = vmatprep.subr.bf16.mxu0 0
    %1631 = vmatpush1.bf16.msra.mxu0 0
    %1632 = vmatprep.subr.bf16.mxu0 0
    %1633 = vmatpush1.bf16.msra.mxu0 0
    %1634 = vmatprep.subr.bf16.mxu0 0
    %1635 = vmatpush1.bf16.msra.mxu0 0
    %1636 = vmatprep.subr.bf16.mxu0 0
    %1637 = vmatpush1.bf16.msra.mxu0 0
    %1638 = vmatprep.mubr.bf16.mxu0 0
    %1639 = vmatmul.mubr.bf16.gmra.mrb[0].mxu0 %v1604
    %v1640 = vpop.f32.mrb[0].mxu0
    %v1641 = vadd.f32 0.0, %v1640
    %v1642 = vpop.f32.mrb[0].mxu0
    %v1643 = vpop.f32.mrb[0].mxu0
    %v1644 = vadd.f32 0.0, %v1643
    %v1645 = vpop.f32.mrb[0].mxu0
    %1646 = vdwg.mxu0
    %v1647 = vrcp.pop %v1595
    %v1648 = vrcp.pop %v1598
    %v1649 = vmul.f32 %v1641, %v1647
    %v1650 = vmul.f32 %v1644, %v1648
    %v1651 = vpack.c.bf16 %v1650, %v1649
    %v1652 = vld [vmem:[%s4 + $0x38] sm:$0xf]
    %v1653 = vld [vmem:[%s4 + $0x3c] sm:$0xf]
    %v1656 = vunpack.c.l.b16 %v1652
    %v1657 = vunpack.c.l.b16 %v1653
    %v1658 = vpack.c.b16 %v1657, %v1656
    %v1661 = vsel %vm344, %v1651, 0
    %1663 = vmatprep.subr.bf16.mxu0 0
    %1664 = vmatpush1.bf16.msra.mxu0 %v1658
    %1665 = vmatprep.subr.bf16.mxu0 0
    %1666 = vmatpush1.bf16.msra.mxu0 0
    %1667 = vmatprep.subr.bf16.mxu0 0
    %1668 = vmatpush1.bf16.msra.mxu0 0
    %1669 = vmatprep.subr.bf16.mxu0 0
    %1670 = vmatpush1.bf16.msra.mxu0 0
    %1671 = vmatprep.subr.bf16.mxu0 0
    %1672 = vmatpush1.bf16.msra.mxu0 0
    %1673 = vmatprep.subr.bf16.mxu0 0
    %1674 = vmatpush1.bf16.msra.mxu0 0
    %1675 = vmatprep.subr.bf16.mxu0 0
    %1676 = vmatpush1.bf16.msra.mxu0 0
    %1677 = vmatprep.subr.bf16.mxu0 0
    %1678 = vmatpush1.bf16.msra.mxu0 0
    %1679 = vmatprep.subr.bf16.mxu0 0
    %1680 = vmatpush1.bf16.msra.mxu0 0
    %1681 = vmatprep.subr.bf16.mxu0 0
    %1682 = vmatpush1.bf16.msra.mxu0 0
    %1683 = vmatprep.subr.bf16.mxu0 0
    %1684 = vmatpush1.bf16.msra.mxu0 0
    %1685 = vmatprep.subr.bf16.mxu0 0
    %1686 = vmatpush1.bf16.msra.mxu0 0
    %1687 = vmatprep.subr.bf16.mxu0 0
    %1688 = vmatpush1.bf16.msra.mxu0 0
    %1689 = vmatprep.subr.bf16.mxu0 0
    %1690 = vmatpush1.bf16.msra.mxu0 0
    %1691 = vmatprep.subr.bf16.mxu0 0
    %1692 = vmatpush1.bf16.msra.mxu0 0
    %1693 = vmatprep.subr.bf16.mxu0 0
    %1694 = vmatpush1.bf16.msra.mxu0 0
    %1695 = vmatprep.mubr.bf16.mxu0 0
    %1696 = vmatmul.mubr.bf16.gmra.mrb[0].mxu0 %v1661
    %v1697 = vpop.f32.mrb[0].mxu0
    %v1698 = vadd.f32 0.0, %v1697
    %v1699 = vpop.f32.mrb[0].mxu0
    %v1700 = vpop.f32.mrb[0].mxu0
    %v1701 = vadd.f32 0.0, %v1700
    %v1702 = vpop.f32.mrb[0].mxu0
    %1703 = vdwg.mxu0
    %v1704 = vadd.f32 %v1533, %v1698
    %v1705 = vadd.f32 %v1534, %v1701
    %v1707 = vlaneseq
    %v1708 = vshrl.u32 %v1707, 7
    %v1709 = vsub.s32 0, %v1708
    %v1710 = vrot.slane %v343, %v1709
    %v1712 = vadd.f32 %v1704, %v1710
    %v1713 = vadd.f32 %v1705, %v1710
    %1714 = vst [vmem:[#allocation2] sm:$0xff] %v1712
    %1715 = vst [vmem:[#allocation2 + $0x8] sm:$0xff] %v1713
    %1717 = vrot.lane.b32.xlu0 %v333, 112
    %v1718 = vpop.permute.xlu0 %1717
    %v1721 = vsel %vm344, %v300, 0
    %1723 = vmatprep.subr.bf16.mxu0 0
    %1724 = vmatpush1.bf16.msra.mxu0 %v1718
    %1725 = vmatprep.subr.bf16.mxu0 0
    %1726 = vmatpush1.bf16.msra.mxu0 0
    %1727 = vmatprep.subr.bf16.mxu0 0
    %1728 = vmatpush1.bf16.msra.mxu0 0
    %1729 = vmatprep.subr.bf16.mxu0 0
    %1730 = vmatpush1.bf16.msra.mxu0 0
    %1731 = vmatprep.subr.bf16.mxu0 0
    %1732 = vmatpush1.bf16.msra.mxu0 0
    %1733 = vmatprep.subr.bf16.mxu0 0
    %1734 = vmatpush1.bf16.msra.mxu0 0
    %1735 = vmatprep.subr.bf16.mxu0 0
    %1736 = vmatpush1.bf16.msra.mxu0 0
    %1737 = vmatprep.subr.bf16.mxu0 0
    %1738 = vmatpush1.bf16.msra.mxu0 0
    %1739 = vmatprep.subr.bf16.mxu0 0
    %1740 = vmatpush1.bf16.msra.mxu0 0
    %1741 = vmatprep.subr.bf16.mxu0 0
    %1742 = vmatpush1.bf16.msra.mxu0 0
    %1743 = vmatprep.subr.bf16.mxu0 0
    %1744 = vmatpush1.bf16.msra.mxu0 0
    %1745 = vmatprep.subr.bf16.mxu0 0
    %1746 = vmatpush1.bf16.msra.mxu0 0
    %1747 = vmatprep.subr.bf16.mxu0 0
    %1748 = vmatpush1.bf16.msra.mxu0 0
    %1749 = vmatprep.subr.bf16.mxu0 0
    %1750 = vmatpush1.bf16.msra.mxu0 0
    %1751 = vmatprep.subr.bf16.mxu0 0
    %1752 = vmatpush1.bf16.msra.mxu0 0
    %1753 = vmatprep.subr.bf16.mxu0 0
    %1754 = vmatpush1.bf16.msra.mxu0 0
    %1755 = vmatprep.mubr.bf16.mxu0 0
    %1756 = vmatmul.mubr.bf16.gmra.mrb[0].mxu0 %v1721
    %v1757 = vpop.f32.mrb[0].mxu0
    %v1758 = vadd.f32 0.0, %v1757
    %v1759 = vpop.f32.mrb[0].mxu0
    %v1760 = vpop.f32.mrb[0].mxu0
    %v1761 = vadd.f32 0.0, %v1760
    %v1762 = vpop.f32.mrb[0].mxu0
    %1763 = vdwg.mxu0
    %v1764 = vsel %vm344, %v1758, -inf
    %1765 = vmax.xlane.f32.xlu0 %v1764
    %v1766 = vpop.xlane.xlu0 %1765
    %v1767 = vsel %vm344, %v1761, -inf
    %1768 = vmax.xlane.f32.xlu0 %v1767
    %v1769 = vpop.xlane.xlu0 %1768
    %v1770 = vsub.f32 %v1758, %v1766
    %v1771 = vsub.f32 %v1761, %v1769
    %v1772 = vmul.f32 %v1770, 1.442695
    %v1773 = vpow.pop %v1772
    %v1774 = vmul.f32 %v1771, 1.442695
    %v1775 = vpow.pop %v1774
    %v1776 = vsel %vm344, %v1773, 0.0
    %1777 = vadd.xlane.f32.xlu0 %v1776
    %v1778 = vpop.xlane.xlu0 %1777
    %v1779 = vsel %vm344, %v1775, 0.0
    %1780 = vadd.xlane.f32.xlu0 %v1779
    %v1781 = vpop.xlane.xlu0 %1780
    %v1782 = vpack.c.bf16 %v1775, %v1773
    %v1784 = vsel %vm344, %v1782, 0
    %1786 = vmatprep.subr.bf16.mxu0 0
    %1787 = vmatpush1.bf16.msra.mxu0 %v342
    %1788 = vmatprep.subr.bf16.mxu0 0
    %1789 = vmatpush1.bf16.msra.mxu0 0
    %1790 = vmatprep.subr.bf16.mxu0 0
    %1791 = vmatpush1.bf16.msra.mxu0 0
    %1792 = vmatprep.subr.bf16.mxu0 0
    %1793 = vmatpush1.bf16.msra.mxu0 0
    %1794 = vmatprep.subr.bf16.mxu0 0
    %1795 = vmatpush1.bf16.msra.mxu0 0
    %1796 = vmatprep.subr.bf16.mxu0 0
    %1797 = vmatpush1.bf16.msra.mxu0 0
    %1798 = vmatprep.subr.bf16.mxu0 0
    %1799 = vmatpush1.bf16.msra.mxu0 0
    %1800 = vmatprep.subr.bf16.mxu0 0
    %1801 = vmatpush1.bf16.msra.mxu0 0
    %1802 = vmatprep.subr.bf16.mxu0 0
    %1803 = vmatpush1.bf16.msra.mxu0 0
    %1804 = vmatprep.subr.bf16.mxu0 0
    %1805 = vmatpush1.bf16.msra.mxu0 0
    %1806 = vmatprep.subr.bf16.mxu0 0
    %1807 = vmatpush1.bf16.msra.mxu0 0
    %1808 = vmatprep.subr.bf16.mxu0 0
    %1809 = vmatpush1.bf16.msra.mxu0 0
    %1810 = vmatprep.subr.bf16.mxu0 0
    %1811 = vmatpush1.bf16.msra.mxu0 0
    %1812 = vmatprep.subr.bf16.mxu0 0
    %1813 = vmatpush1.bf16.msra.mxu0 0
    %1814 = vmatprep.subr.bf16.mxu0 0
    %1815 = vmatpush1.bf16.msra.mxu0 0
    %1816 = vmatprep.subr.bf16.mxu0 0
    %1817 = vmatpush1.bf16.msra.mxu0 0
    %1818 = vmatprep.mubr.bf16.mxu0 0
    %1819 = vmatmul.mubr.bf16.gmra.mrb[0].mxu0 %v1784
    %v1820 = vpop.f32.mrb[0].mxu0
    %v1821 = vadd.f32 0.0, %v1820
    %v1822 = vpop.f32.mrb[0].mxu0
    %v1823 = vpop.f32.mrb[0].mxu0
    %v1824 = vadd.f32 0.0, %v1823
    %v1825 = vpop.f32.mrb[0].mxu0
    %1826 = vdwg.mxu0
    %v1827 = vrcp.pop %v1778
    %v1828 = vrcp.pop %v1781
    %v1829 = vmul.f32 %v1821, %v1827
    %v1830 = vmul.f32 %v1824, %v1828
    %v1831 = vpack.c.bf16 %v1830, %v1829
    %v1832 = vld [vmem:[%s4] sm:$0xf]
    %v1833 = vld [vmem:[%s4 + $0x4] sm:$0xf]
    %1835 = vrot.lane.b32.xlu0 %v300, 112
    %v1836 = vpop.permute.xlu0 %1835
    %1838 = vrot.lane.b32.xlu0 %v334, 112
    %v1839 = vpop.permute.xlu0 %1838
    %v1842 = vsel %vm344, %v1836, 0
    %1844 = vmatprep.subr.bf16.mxu0 0
    %1845 = vmatpush1.bf16.msra.mxu0 %v1839
    %1846 = vmatprep.subr.bf16.mxu0 0
    %1847 = vmatpush1.bf16.msra.mxu0 0
    %1848 = vmatprep.subr.bf16.mxu0 0
    %1849 = vmatpush1.bf16.msra.mxu0 0
    %1850 = vmatprep.subr.bf16.mxu0 0
    %1851 = vmatpush1.bf16.msra.mxu0 0
    %1852 = vmatprep.subr.bf16.mxu0 0
    %1853 = vmatpush1.bf16.msra.mxu0 0
    %1854 = vmatprep.subr.bf16.mxu0 0
    %1855 = vmatpush1.bf16.msra.mxu0 0
    %1856 = vmatprep.subr.bf16.mxu0 0
    %1857 = vmatpush1.bf16.msra.mxu0 0
    %1858 = vmatprep.subr.bf16.mxu0 0
    %1859 = vmatpush1.bf16.msra.mxu0 0
    %1860 = vmatprep.subr.bf16.mxu0 0
    %1861 = vmatpush1.bf16.msra.mxu0 0
    %1862 = vmatprep.subr.bf16.mxu0 0
    %1863 = vmatpush1.bf16.msra.mxu0 0
    %1864 = vmatprep.subr.bf16.mxu0 0
    %1865 = vmatpush1.bf16.msra.mxu0 0
    %1866 = vmatprep.subr.bf16.mxu0 0
    %1867 = vmatpush1.bf16.msra.mxu0 0
    %1868 = vmatprep.subr.bf16.mxu0 0
    %1869 = vmatpush1.bf16.msra.mxu0 0
    %1870 = vmatprep.subr.bf16.mxu0 0
    %1871 = vmatpush1.bf16.msra.mxu0 0
    %1872 = vmatprep.subr.bf16.mxu0 0
    %1873 = vmatpush1.bf16.msra.mxu0 0
    %1874 = vmatprep.subr.bf16.mxu0 0
    %1875 = vmatpush1.bf16.msra.mxu0 0
    %1876 = vmatprep.mubr.bf16.mxu0 0
    %1877 = vmatmul.mubr.bf16.gmra.mrb[0].mxu0 %v1842
    %v1878 = vpop.f32.mrb[0].mxu0
    %v1879 = vadd.f32 0.0, %v1878
    %v1880 = vpop.f32.mrb[0].mxu0
    %v1881 = vpop.f32.mrb[0].mxu0
    %v1882 = vadd.f32 0.0, %v1881
    %v1883 = vpop.f32.mrb[0].mxu0
    %1884 = vdwg.mxu0
    %v1885 = vsel %vm344, %v1879, -inf
    %1886 = vmax.xlane.f32.xlu0 %v1885
    %v1887 = vpop.xlane.xlu0 %1886
    %v1888 = vsel %vm344, %v1882, -inf
    %1889 = vmax.xlane.f32.xlu0 %v1888
    %v1890 = vpop.xlane.xlu0 %1889
    %v1891 = vsub.f32 %v1879, %v1887
    %v1892 = vsub.f32 %v1882, %v1890
    %v1893 = vmul.f32 %v1891, 1.442695
    %v1894 = vpow.pop %v1893
    %v1895 = vmul.f32 %v1892, 1.442695
    %v1896 = vpow.pop %v1895
    %v1897 = vsel %vm344, %v1894, 0.0
    %1898 = vadd.xlane.f32.xlu0 %v1897
    %v1899 = vpop.xlane.xlu0 %1898
    %v1900 = vsel %vm344, %v1896, 0.0
    %1901 = vadd.xlane.f32.xlu0 %v1900
    %v1902 = vpop.xlane.xlu0 %1901
    %v1903 = vpack.c.bf16 %v1896, %v1894
    %1905 = vrot.lane.b32.xlu0 %v342, 112
    %v1906 = vpop.permute.xlu0 %1905
    %v1909 = vsel %vm344, %v1903, 0
    %1911 = vmatprep.subr.bf16.mxu0 0
    %1912 = vmatpush1.bf16.msra.mxu0 %v1906
    %1913 = vmatprep.subr.bf16.mxu0 0
    %1914 = vmatpush1.bf16.msra.mxu0 0
    %1915 = vmatprep.subr.bf16.mxu0 0
    %1916 = vmatpush1.bf16.msra.mxu0 0
    %1917 = vmatprep.subr.bf16.mxu0 0
    %1918 = vmatpush1.bf16.msra.mxu0 0
    %1919 = vmatprep.subr.bf16.mxu0 0
    %1920 = vmatpush1.bf16.msra.mxu0 0
    %1921 = vmatprep.subr.bf16.mxu0 0
    %1922 = vmatpush1.bf16.msra.mxu0 0
    %1923 = vmatprep.subr.bf16.mxu0 0
    %1924 = vmatpush1.bf16.msra.mxu0 0
    %1925 = vmatprep.subr.bf16.mxu0 0
    %1926 = vmatpush1.bf16.msra.mxu0 0
    %1927 = vmatprep.subr.bf16.mxu0 0
    %1928 = vmatpush1.bf16.msra.mxu0 0
    %1929 = vmatprep.subr.bf16.mxu0 0
    %1930 = vmatpush1.bf16.msra.mxu0 0
    %1931 = vmatprep.subr.bf16.mxu0 0
    %1932 = vmatpush1.bf16.msra.mxu0 0
    %1933 = vmatprep.subr.bf16.mxu0 0
    %1934 = vmatpush1.bf16.msra.mxu0 0
    %1935 = vmatprep.subr.bf16.mxu0 0
    %1936 = vmatpush1.bf16.msra.mxu0 0
    %1937 = vmatprep.subr.bf16.mxu0 0
    %1938 = vmatpush1.bf16.msra.mxu0 0
    %1939 = vmatprep.subr.bf16.mxu0 0
    %1940 = vmatpush1.bf16.msra.mxu0 0
    %1941 = vmatprep.subr.bf16.mxu0 0
    %1942 = vmatpush1.bf16.msra.mxu0 0
    %1943 = vmatprep.mubr.bf16.mxu0 0
    %1944 = vmatmul.mubr.bf16.gmra.mrb[0].mxu0 %v1909
    %v1945 = vpop.f32.mrb[0].mxu0
    %v1946 = vadd.f32 0.0, %v1945
    %v1947 = vpop.f32.mrb[0].mxu0
    %v1948 = vpop.f32.mrb[0].mxu0
    %v1949 = vadd.f32 0.0, %v1948
    %v1950 = vpop.f32.mrb[0].mxu0
    %1951 = vdwg.mxu0
    %v1952 = vrcp.pop %v1899
    %v1953 = vrcp.pop %v1902
    %v1954 = vmul.f32 %v1946, %v1952
    %v1955 = vmul.f32 %v1949, %v1953
    %v1956 = vpack.c.bf16 %v1955, %v1954
    %v1957 = vld [vmem:[%s4 + $0x8] sm:$0xf]
    %v1958 = vld [vmem:[%s4 + $0xc] sm:$0xf]
    %v1961 = vunpack.c.l.b16 %v1957
    %v1962 = vunpack.c.l.b16 %v1958
    %v1963 = vpack.c.b16 %v1962, %v1961
    %v1966 = vsel %vm344, %v1956, 0
    %1968 = vmatprep.subr.bf16.mxu0 0
    %1969 = vmatpush1.bf16.msra.mxu0 %v1963
    %1970 = vmatprep.subr.bf16.mxu0 0
    %1971 = vmatpush1.bf16.msra.mxu0 0
    %1972 = vmatprep.subr.bf16.mxu0 0
    %1973 = vmatpush1.bf16.msra.mxu0 0
    %1974 = vmatprep.subr.bf16.mxu0 0
    %1975 = vmatpush1.bf16.msra.mxu0 0
    %1976 = vmatprep.subr.bf16.mxu0 0
    %1977 = vmatpush1.bf16.msra.mxu0 0
    %1978 = vmatprep.subr.bf16.mxu0 0
    %1979 = vmatpush1.bf16.msra.mxu0 0
    %1980 = vmatprep.subr.bf16.mxu0 0
    %1981 = vmatpush1.bf16.msra.mxu0 0
    %1982 = vmatprep.subr.bf16.mxu0 0
    %1983 = vmatpush1.bf16.msra.mxu0 0
    %1984 = vmatprep.subr.bf16.mxu0 0
    %1985 = vmatpush1.bf16.msra.mxu0 0
    %1986 = vmatprep.subr.bf16.mxu0 0
    %1987 = vmatpush1.bf16.msra.mxu0 0
    %1988 = vmatprep.subr.bf16.mxu0 0
    %1989 = vmatpush1.bf16.msra.mxu0 0
    %1990 = vmatprep.subr.bf16.mxu0 0
    %1991 = vmatpush1.bf16.msra.mxu0 0
    %1992 = vmatprep.subr.bf16.mxu0 0
    %1993 = vmatpush1.bf16.msra.mxu0 0
    %1994 = vmatprep.subr.bf16.mxu0 0
    %1995 = vmatpush1.bf16.msra.mxu0 0
    %1996 = vmatprep.subr.bf16.mxu0 0
    %1997 = vmatpush1.bf16.msra.mxu0 0
    %1998 = vmatprep.subr.bf16.mxu0 0
    %1999 = vmatpush1.bf16.msra.mxu0 0
    %2000 = vmatprep.mubr.bf16.mxu0 0
    %2001 = vmatmul.mubr.bf16.gmra.mrb[0].mxu0 %v1966
    %v2002 = vpop.f32.mrb[0].mxu0
    %v2003 = vadd.f32 0.0, %v2002
    %v2004 = vpop.f32.mrb[0].mxu0
    %v2005 = vpop.f32.mrb[0].mxu0
    %v2006 = vadd.f32 0.0, %v2005
    %v2007 = vpop.f32.mrb[0].mxu0
    %2008 = vdwg.mxu0
    %v2011 = vunpack.c.l.b16 %v1832
    %v2012 = vunpack.c.l.b16 %v1833
    %v2013 = vpack.c.b16 %v2012, %v2011
    %v2016 = vsel %vm344, %v1831, 0
    %2018 = vmatprep.subr.bf16.mxu0 0
    %2019 = vmatpush1.bf16.msra.mxu0 %v2013
    %2020 = vmatprep.subr.bf16.mxu0 0
    %2021 = vmatpush1.bf16.msra.mxu0 0
    %2022 = vmatprep.subr.bf16.mxu0 0
    %2023 = vmatpush1.bf16.msra.mxu0 0
    %2024 = vmatprep.subr.bf16.mxu0 0
    %2025 = vmatpush1.bf16.msra.mxu0 0
    %2026 = vmatprep.subr.bf16.mxu0 0
    %2027 = vmatpush1.bf16.msra.mxu0 0
    %2028 = vmatprep.subr.bf16.mxu0 0
    %2029 = vmatpush1.bf16.msra.mxu0 0
    %2030 = vmatprep.subr.bf16.mxu0 0
    %2031 = vmatpush1.bf16.msra.mxu0 0
    %2032 = vmatprep.subr.bf16.mxu0 0
    %2033 = vmatpush1.bf16.msra.mxu0 0
    %2034 = vmatprep.subr.bf16.mxu0 0
    %2035 = vmatpush1.bf16.msra.mxu0 0
    %2036 = vmatprep.subr.bf16.mxu0 0
    %2037 = vmatpush1.bf16.msra.mxu0 0
    %2038 = vmatprep.subr.bf16.mxu0 0
    %2039 = vmatpush1.bf16.msra.mxu0 0
    %2040 = vmatprep.subr.bf16.mxu0 0
    %2041 = vmatpush1.bf16.msra.mxu0 0
    %2042 = vmatprep.subr.bf16.mxu0 0
    %2043 = vmatpush1.bf16.msra.mxu0 0
    %2044 = vmatprep.subr.bf16.mxu0 0
    %2045 = vmatpush1.bf16.msra.mxu0 0
    %2046 = vmatprep.subr.bf16.mxu0 0
    %2047 = vmatpush1.bf16.msra.mxu0 0
    %2048 = vmatprep.subr.bf16.mxu0 0
    %2049 = vmatpush1.bf16.msra.mxu0 0
    %2050 = vmatprep.mubr.bf16.mxu0 0
    %2051 = vmatmul.mubr.bf16.gmra.mrb[0].mxu0 %v2016
    %v2052 = vpop.f32.mrb[0].mxu0
    %v2053 = vadd.f32 %v2003, %v2052
    %v2054 = vpop.f32.mrb[0].mxu0
    %v2055 = vpop.f32.mrb[0].mxu0
    %v2056 = vadd.f32 %v2006, %v2055
    %v2057 = vpop.f32.mrb[0].mxu0
    %2058 = vdwg.mxu0
    %2059 = vrot.lane.b32.xlu0 %v300, 96
    %v2060 = vpop.permute.xlu0 %2059
    %2062 = vrot.lane.b32.xlu0 %v335, 112
    %v2063 = vpop.permute.xlu0 %2062
    %v2066 = vsel %vm344, %v2060, 0
    %2068 = vmatprep.subr.bf16.mxu0 0
    %2069 = vmatpush1.bf16.msra.mxu0 %v2063
    %2070 = vmatprep.subr.bf16.mxu0 0
    %2071 = vmatpush1.bf16.msra.mxu0 0
    %2072 = vmatprep.subr.bf16.mxu0 0
    %2073 = vmatpush1.bf16.msra.mxu0 0
    %2074 = vmatprep.subr.bf16.mxu0 0
    %2075 = vmatpush1.bf16.msra.mxu0 0
    %2076 = vmatprep.subr.bf16.mxu0 0
    %2077 = vmatpush1.bf16.msra.mxu0 0
    %2078 = vmatprep.subr.bf16.mxu0 0
    %2079 = vmatpush1.bf16.msra.mxu0 0
    %2080 = vmatprep.subr.bf16.mxu0 0
    %2081 = vmatpush1.bf16.msra.mxu0 0
    %2082 = vmatprep.subr.bf16.mxu0 0
    %2083 = vmatpush1.bf16.msra.mxu0 0
    %2084 = vmatprep.subr.bf16.mxu0 0
    %2085 = vmatpush1.bf16.msra.mxu0 0
    %2086 = vmatprep.subr.bf16.mxu0 0
    %2087 = vmatpush1.bf16.msra.mxu0 0
    %2088 = vmatprep.subr.bf16.mxu0 0
    %2089 = vmatpush1.bf16.msra.mxu0 0
    %2090 = vmatprep.subr.bf16.mxu0 0
    %2091 = vmatpush1.bf16.msra.mxu0 0
    %2092 = vmatprep.subr.bf16.mxu0 0
    %2093 = vmatpush1.bf16.msra.mxu0 0
    %2094 = vmatprep.subr.bf16.mxu0 0
    %2095 = vmatpush1.bf16.msra.mxu0 0
    %2096 = vmatprep.subr.bf16.mxu0 0
    %2097 = vmatpush1.bf16.msra.mxu0 0
    %2098 = vmatprep.subr.bf16.mxu0 0
    %2099 = vmatpush1.bf16.msra.mxu0 0
    %2100 = vmatprep.mubr.bf16.mxu0 0
    %2101 = vmatmul.mubr.bf16.gmra.mrb[0].mxu0 %v2066
    %v2102 = vpop.f32.mrb[0].mxu0
    %v2103 = vadd.f32 0.0, %v2102
    %v2104 = vpop.f32.mrb[0].mxu0
    %v2105 = vpop.f32.mrb[0].mxu0
    %v2106 = vadd.f32 0.0, %v2105
    %v2107 = vpop.f32.mrb[0].mxu0
    %2108 = vdwg.mxu0
    %v2109 = vsel %vm344, %v2103, -inf
    %2110 = vmax.xlane.f32.xlu0 %v2109
    %v2111 = vpop.xlane.xlu0 %2110
    %v2112 = vsel %vm344, %v2106, -inf
    %2113 = vmax.xlane.f32.xlu0 %v2112
    %v2114 = vpop.xlane.xlu0 %2113
    %v2115 = vsub.f32 %v2103, %v2111
    %v2116 = vsub.f32 %v2106, %v2114
    %v2117 = vmul.f32 %v2115, 1.442695
    %v2118 = vpow.pop %v2117
    %v2119 = vmul.f32 %v2116, 1.442695
    %v2120 = vpow.pop %v2119
    %v2121 = vsel %vm344, %v2118, 0.0
    %2122 = vadd.xlane.f32.xlu0 %v2121
    %v2123 = vpop.xlane.xlu0 %2122
    %v2124 = vsel %vm344, %v2120, 0.0
    %2125 = vadd.xlane.f32.xlu0 %v2124
    %v2126 = vpop.xlane.xlu0 %2125
    %v2127 = vpack.c.bf16 %v2120, %v2118
    %2128 = vrot.lane.b32.xlu0 %v342, 96
    %v2129 = vpop.permute.xlu0 %2128
    %v2132 = vsel %vm344, %v2127, 0
    %2134 = vmatprep.subr.bf16.mxu0 0
    %2135 = vmatpush1.bf16.msra.mxu0 %v2129
    %2136 = vmatprep.subr.bf16.mxu0 0
    %2137 = vmatpush1.bf16.msra.mxu0 0
    %2138 = vmatprep.subr.bf16.mxu0 0
    %2139 = vmatpush1.bf16.msra.mxu0 0
    %2140 = vmatprep.subr.bf16.mxu0 0
    %2141 = vmatpush1.bf16.msra.mxu0 0
    %2142 = vmatprep.subr.bf16.mxu0 0
    %2143 = vmatpush1.bf16.msra.mxu0 0
    %2144 = vmatprep.subr.bf16.mxu0 0
    %2145 = vmatpush1.bf16.msra.mxu0 0
    %2146 = vmatprep.subr.bf16.mxu0 0
    %2147 = vmatpush1.bf16.msra.mxu0 0
    %2148 = vmatprep.subr.bf16.mxu0 0
    %2149 = vmatpush1.bf16.msra.mxu0 0
    %2150 = vmatprep.subr.bf16.mxu0 0
    %2151 = vmatpush1.bf16.msra.mxu0 0
    %2152 = vmatprep.subr.bf16.mxu0 0
    %2153 = vmatpush1.bf16.msra.mxu0 0
    %2154 = vmatprep.subr.bf16.mxu0 0
    %2155 = vmatpush1.bf16.msra.mxu0 0
    %2156 = vmatprep.subr.bf16.mxu0 0
    %2157 = vmatpush1.bf16.msra.mxu0 0
    %2158 = vmatprep.subr.bf16.mxu0 0
    %2159 = vmatpush1.bf16.msra.mxu0 0
    %2160 = vmatprep.subr.bf16.mxu0 0
    %2161 = vmatpush1.bf16.msra.mxu0 0
    %2162 = vmatprep.subr.bf16.mxu0 0
    %2163 = vmatpush1.bf16.msra.mxu0 0
    %2164 = vmatprep.subr.bf16.mxu0 0
    %2165 = vmatpush1.bf16.msra.mxu0 0
    %2166 = vmatprep.mubr.bf16.mxu0 0
    %2167 = vmatmul.mubr.bf16.gmra.mrb[0].mxu0 %v2132
    %v2168 = vpop.f32.mrb[0].mxu0
    %v2169 = vadd.f32 0.0, %v2168
    %v2170 = vpop.f32.mrb[0].mxu0
    %v2171 = vpop.f32.mrb[0].mxu0
    %v2172 = vadd.f32 0.0, %v2171
    %v2173 = vpop.f32.mrb[0].mxu0
    %2174 = vdwg.mxu0
    %v2175 = vrcp.pop %v2123
    %v2176 = vrcp.pop %v2126
    %v2177 = vmul.f32 %v2169, %v2175
    %v2178 = vmul.f32 %v2172, %v2176
    %v2179 = vpack.c.bf16 %v2178, %v2177
    %v2180 = vld [vmem:[%s4 + $0x10] sm:$0xf]
    %v2181 = vld [vmem:[%s4 + $0x14] sm:$0xf]
    %v2184 = vunpack.c.l.b16 %v2180
    %v2185 = vunpack.c.l.b16 %v2181
    %v2186 = vpack.c.b16 %v2185, %v2184
    %v2189 = vsel %vm344, %v2179, 0
    %2191 = vmatprep.subr.bf16.mxu0 0
    %2192 = vmatpush1.bf16.msra.mxu0 %v2186
    %2193 = vmatprep.subr.bf16.mxu0 0
    %2194 = vmatpush1.bf16.msra.mxu0 0
    %2195 = vmatprep.subr.bf16.mxu0 0
    %2196 = vmatpush1.bf16.msra.mxu0 0
    %2197 = vmatprep.subr.bf16.mxu0 0
    %2198 = vmatpush1.bf16.msra.mxu0 0
    %2199 = vmatprep.subr.bf16.mxu0 0
    %2200 = vmatpush1.bf16.msra.mxu0 0
    %2201 = vmatprep.subr.bf16.mxu0 0
    %2202 = vmatpush1.bf16.msra.mxu0 0
    %2203 = vmatprep.subr.bf16.mxu0 0
    %2204 = vmatpush1.bf16.msra.mxu0 0
    %2205 = vmatprep.subr.bf16.mxu0 0
    %2206 = vmatpush1.bf16.msra.mxu0 0
    %2207 = vmatprep.subr.bf16.mxu0 0
    %2208 = vmatpush1.bf16.msra.mxu0 0
    %2209 = vmatprep.subr.bf16.mxu0 0
    %2210 = vmatpush1.bf16.msra.mxu0 0
    %2211 = vmatprep.subr.bf16.mxu0 0
    %2212 = vmatpush1.bf16.msra.mxu0 0
    %2213 = vmatprep.subr.bf16.mxu0 0
    %2214 = vmatpush1.bf16.msra.mxu0 0
    %2215 = vmatprep.subr.bf16.mxu0 0
    %2216 = vmatpush1.bf16.msra.mxu0 0
    %2217 = vmatprep.subr.bf16.mxu0 0
    %2218 = vmatpush1.bf16.msra.mxu0 0
    %2219 = vmatprep.subr.bf16.mxu0 0
    %2220 = vmatpush1.bf16.msra.mxu0 0
    %2221 = vmatprep.subr.bf16.mxu0 0
    %2222 = vmatpush1.bf16.msra.mxu0 0
    %2223 = vmatprep.mubr.bf16.mxu0 0
    %2224 = vmatmul.mubr.bf16.gmra.mrb[0].mxu0 %v2189
    %v2225 = vpop.f32.mrb[0].mxu0
    %v2226 = vadd.f32 0.0, %v2225
    %v2227 = vpop.f32.mrb[0].mxu0
    %v2228 = vpop.f32.mrb[0].mxu0
    %v2229 = vadd.f32 0.0, %v2228
    %v2230 = vpop.f32.mrb[0].mxu0
    %2231 = vdwg.mxu0
    %v2232 = vadd.f32 %v2053, %v2226
    %v2233 = vadd.f32 %v2056, %v2229
    %2234 = vrot.lane.b32.xlu0 %v300, 80
    %v2235 = vpop.permute.xlu0 %2234
    %2237 = vrot.lane.b32.xlu0 %v336, 112
    %v2238 = vpop.permute.xlu0 %2237
    %v2241 = vsel %vm344, %v2235, 0
    %2243 = vmatprep.subr.bf16.mxu0 0
    %2244 = vmatpush1.bf16.msra.mxu0 %v2238
    %2245 = vmatprep.subr.bf16.mxu0 0
    %2246 = vmatpush1.bf16.msra.mxu0 0
    %2247 = vmatprep.subr.bf16.mxu0 0
    %2248 = vmatpush1.bf16.msra.mxu0 0
    %2249 = vmatprep.subr.bf16.mxu0 0
    %2250 = vmatpush1.bf16.msra.mxu0 0
    %2251 = vmatprep.subr.bf16.mxu0 0
    %2252 = vmatpush1.bf16.msra.mxu0 0
    %2253 = vmatprep.subr.bf16.mxu0 0
    %2254 = vmatpush1.bf16.msra.mxu0 0
    %2255 = vmatprep.subr.bf16.mxu0 0
    %2256 = vmatpush1.bf16.msra.mxu0 0
    %2257 = vmatprep.subr.bf16.mxu0 0
    %2258 = vmatpush1.bf16.msra.mxu0 0
    %2259 = vmatprep.subr.bf16.mxu0 0
    %2260 = vmatpush1.bf16.msra.mxu0 0
    %2261 = vmatprep.subr.bf16.mxu0 0
    %2262 = vmatpush1.bf16.msra.mxu0 0
    %2263 = vmatprep.subr.bf16.mxu0 0
    %2264 = vmatpush1.bf16.msra.mxu0 0
    %2265 = vmatprep.subr.bf16.mxu0 0
    %2266 = vmatpush1.bf16.msra.mxu0 0
    %2267 = vmatprep.subr.bf16.mxu0 0
    %2268 = vmatpush1.bf16.msra.mxu0 0
    %2269 = vmatprep.subr.bf16.mxu0 0
    %2270 = vmatpush1.bf16.msra.mxu0 0
    %2271 = vmatprep.subr.bf16.mxu0 0
    %2272 = vmatpush1.bf16.msra.mxu0 0
    %2273 = vmatprep.subr.bf16.mxu0 0
    %2274 = vmatpush1.bf16.msra.mxu0 0
    %2275 = vmatprep.mubr.bf16.mxu0 0
    %2276 = vmatmul.mubr.bf16.gmra.mrb[0].mxu0 %v2241
    %v2277 = vpop.f32.mrb[0].mxu0
    %v2278 = vadd.f32 0.0, %v2277
    %v2279 = vpop.f32.mrb[0].mxu0
    %v2280 = vpop.f32.mrb[0].mxu0
    %v2281 = vadd.f32 0.0, %v2280
    %v2282 = vpop.f32.mrb[0].mxu0
    %2283 = vdwg.mxu0
    %v2284 = vsel %vm344, %v2278, -inf
    %2285 = vmax.xlane.f32.xlu0 %v2284
    %v2286 = vpop.xlane.xlu0 %2285
    %v2287 = vsel %vm344, %v2281, -inf
    %2288 = vmax.xlane.f32.xlu0 %v2287
    %v2289 = vpop.xlane.xlu0 %2288
    %v2290 = vsub.f32 %v2278, %v2286
    %v2291 = vsub.f32 %v2281, %v2289
    %v2292 = vmul.f32 %v2290, 1.442695
    %v2293 = vpow.pop %v2292
    %v2294 = vmul.f32 %v2291, 1.442695
    %v2295 = vpow.pop %v2294
    %v2296 = vsel %vm344, %v2293, 0.0
    %2297 = vadd.xlane.f32.xlu0 %v2296
    %v2298 = vpop.xlane.xlu0 %2297
    %v2299 = vsel %vm344, %v2295, 0.0
    %2300 = vadd.xlane.f32.xlu0 %v2299
    %v2301 = vpop.xlane.xlu0 %2300
    %v2302 = vpack.c.bf16 %v2295, %v2293
    %2303 = vrot.lane.b32.xlu0 %v342, 80
    %v2304 = vpop.permute.xlu0 %2303
    %v2307 = vsel %vm344, %v2302, 0
    %2309 = vmatprep.subr.bf16.mxu0 0
    %2310 = vmatpush1.bf16.msra.mxu0 %v2304
    %2311 = vmatprep.subr.bf16.mxu0 0
    %2312 = vmatpush1.bf16.msra.mxu0 0
    %2313 = vmatprep.subr.bf16.mxu0 0
    %2314 = vmatpush1.bf16.msra.mxu0 0
    %2315 = vmatprep.subr.bf16.mxu0 0
    %2316 = vmatpush1.bf16.msra.mxu0 0
    %2317 = vmatprep.subr.bf16.mxu0 0
    %2318 = vmatpush1.bf16.msra.mxu0 0
    %2319 = vmatprep.subr.bf16.mxu0 0
    %2320 = vmatpush1.bf16.msra.mxu0 0
    %2321 = vmatprep.subr.bf16.mxu0 0
    %2322 = vmatpush1.bf16.msra.mxu0 0
    %2323 = vmatprep.subr.bf16.mxu0 0
    %2324 = vmatpush1.bf16.msra.mxu0 0
    %2325 = vmatprep.subr.bf16.mxu0 0
    %2326 = vmatpush1.bf16.msra.mxu0 0
    %2327 = vmatprep.subr.bf16.mxu0 0
    %2328 = vmatpush1.bf16.msra.mxu0 0
    %2329 = vmatprep.subr.bf16.mxu0 0
    %2330 = vmatpush1.bf16.msra.mxu0 0
    %2331 = vmatprep.subr.bf16.mxu0 0
    %2332 = vmatpush1.bf16.msra.mxu0 0
    %2333 = vmatprep.subr.bf16.mxu0 0
    %2334 = vmatpush1.bf16.msra.mxu0 0
    %2335 = vmatprep.subr.bf16.mxu0 0
    %2336 = vmatpush1.bf16.msra.mxu0 0
    %2337 = vmatprep.subr.bf16.mxu0 0
    %2338 = vmatpush1.bf16.msra.mxu0 0
    %2339 = vmatprep.subr.bf16.mxu0 0
    %2340 = vmatpush1.bf16.msra.mxu0 0
    %2341 = vmatprep.mubr.bf16.mxu0 0
    %2342 = vmatmul.mubr.bf16.gmra.mrb[0].mxu0 %v2307
    %v2343 = vpop.f32.mrb[0].mxu0
    %v2344 = vadd.f32 0.0, %v2343
    %v2345 = vpop.f32.mrb[0].mxu0
    %v2346 = vpop.f32.mrb[0].mxu0
    %v2347 = vadd.f32 0.0, %v2346
    %v2348 = vpop.f32.mrb[0].mxu0
    %2349 = vdwg.mxu0
    %v2350 = vrcp.pop %v2298
    %v2351 = vrcp.pop %v2301
    %v2352 = vmul.f32 %v2344, %v2350
    %v2353 = vmul.f32 %v2347, %v2351
    %v2354 = vpack.c.bf16 %v2353, %v2352
    %v2355 = vld [vmem:[%s4 + $0x18] sm:$0xf]
    %v2356 = vld [vmem:[%s4 + $0x1c] sm:$0xf]
    %v2359 = vunpack.c.l.b16 %v2355
    %v2360 = vunpack.c.l.b16 %v2356
    %v2361 = vpack.c.b16 %v2360, %v2359
    %v2364 = vsel %vm344, %v2354, 0
    %2366 = vmatprep.subr.bf16.mxu0 0
    %2367 = vmatpush1.bf16.msra.mxu0 %v2361
    %2368 = vmatprep.subr.bf16.mxu0 0
    %2369 = vmatpush1.bf16.msra.mxu0 0
    %2370 = vmatprep.subr.bf16.mxu0 0
    %2371 = vmatpush1.bf16.msra.mxu0 0
    %2372 = vmatprep.subr.bf16.mxu0 0
    %2373 = vmatpush1.bf16.msra.mxu0 0
    %2374 = vmatprep.subr.bf16.mxu0 0
    %2375 = vmatpush1.bf16.msra.mxu0 0
    %2376 = vmatprep.subr.bf16.mxu0 0
    %2377 = vmatpush1.bf16.msra.mxu0 0
    %2378 = vmatprep.subr.bf16.mxu0 0
    %2379 = vmatpush1.bf16.msra.mxu0 0
    %2380 = vmatprep.subr.bf16.mxu0 0
    %2381 = vmatpush1.bf16.msra.mxu0 0
    %2382 = vmatprep.subr.bf16.mxu0 0
    %2383 = vmatpush1.bf16.msra.mxu0 0
    %2384 = vmatprep.subr.bf16.mxu0 0
    %2385 = vmatpush1.bf16.msra.mxu0 0
    %2386 = vmatprep.subr.bf16.mxu0 0
    %2387 = vmatpush1.bf16.msra.mxu0 0
    %2388 = vmatprep.subr.bf16.mxu0 0
    %2389 = vmatpush1.bf16.msra.mxu0 0
    %2390 = vmatprep.subr.bf16.mxu0 0
    %2391 = vmatpush1.bf16.msra.mxu0 0
    %2392 = vmatprep.subr.bf16.mxu0 0
    %2393 = vmatpush1.bf16.msra.mxu0 0
    %2394 = vmatprep.subr.bf16.mxu0 0
    %2395 = vmatpush1.bf16.msra.mxu0 0
    %2396 = vmatprep.subr.bf16.mxu0 0
    %2397 = vmatpush1.bf16.msra.mxu0 0
    %2398 = vmatprep.mubr.bf16.mxu0 0
    %2399 = vmatmul.mubr.bf16.gmra.mrb[0].mxu0 %v2364
    %v2400 = vpop.f32.mrb[0].mxu0
    %v2401 = vadd.f32 0.0, %v2400
    %v2402 = vpop.f32.mrb[0].mxu0
    %v2403 = vpop.f32.mrb[0].mxu0
    %v2404 = vadd.f32 0.0, %v2403
    %v2405 = vpop.f32.mrb[0].mxu0
    %2406 = vdwg.mxu0
    %v2407 = vadd.f32 %v2232, %v2401
    %v2408 = vadd.f32 %v2233, %v2404
    %2409 = vrot.lane.b32.xlu0 %v300, 64
    %v2410 = vpop.permute.xlu0 %2409
    %2412 = vrot.lane.b32.xlu0 %v337, 112
    %v2413 = vpop.permute.xlu0 %2412
    %v2416 = vsel %vm344, %v2410, 0
    %2418 = vmatprep.subr.bf16.mxu0 0
    %2419 = vmatpush1.bf16.msra.mxu0 %v2413
    %2420 = vmatprep.subr.bf16.mxu0 0
    %2421 = vmatpush1.bf16.msra.mxu0 0
    %2422 = vmatprep.subr.bf16.mxu0 0
    %2423 = vmatpush1.bf16.msra.mxu0 0
    %2424 = vmatprep.subr.bf16.mxu0 0
    %2425 = vmatpush1.bf16.msra.mxu0 0
    %2426 = vmatprep.subr.bf16.mxu0 0
    %2427 = vmatpush1.bf16.msra.mxu0 0
    %2428 = vmatprep.subr.bf16.mxu0 0
    %2429 = vmatpush1.bf16.msra.mxu0 0
    %2430 = vmatprep.subr.bf16.mxu0 0
    %2431 = vmatpush1.bf16.msra.mxu0 0
    %2432 = vmatprep.subr.bf16.mxu0 0
    %2433 = vmatpush1.bf16.msra.mxu0 0
    %2434 = vmatprep.subr.bf16.mxu0 0
    %2435 = vmatpush1.bf16.msra.mxu0 0
    %2436 = vmatprep.subr.bf16.mxu0 0
    %2437 = vmatpush1.bf16.msra.mxu0 0
    %2438 = vmatprep.subr.bf16.mxu0 0
    %2439 = vmatpush1.bf16.msra.mxu0 0
    %2440 = vmatprep.subr.bf16.mxu0 0
    %2441 = vmatpush1.bf16.msra.mxu0 0
    %2442 = vmatprep.subr.bf16.mxu0 0
    %2443 = vmatpush1.bf16.msra.mxu0 0
    %2444 = vmatprep.subr.bf16.mxu0 0
    %2445 = vmatpush1.bf16.msra.mxu0 0
    %2446 = vmatprep.subr.bf16.mxu0 0
    %2447 = vmatpush1.bf16.msra.mxu0 0
    %2448 = vmatprep.subr.bf16.mxu0 0
    %2449 = vmatpush1.bf16.msra.mxu0 0
    %2450 = vmatprep.mubr.bf16.mxu0 0
    %2451 = vmatmul.mubr.bf16.gmra.mrb[0].mxu0 %v2416
    %v2452 = vpop.f32.mrb[0].mxu0
    %v2453 = vadd.f32 0.0, %v2452
    %v2454 = vpop.f32.mrb[0].mxu0
    %v2455 = vpop.f32.mrb[0].mxu0
    %v2456 = vadd.f32 0.0, %v2455
    %v2457 = vpop.f32.mrb[0].mxu0
    %2458 = vdwg.mxu0
    %v2459 = vsel %vm344, %v2453, -inf
    %2460 = vmax.xlane.f32.xlu0 %v2459
    %v2461 = vpop.xlane.xlu0 %2460
    %v2462 = vsel %vm344, %v2456, -inf
    %2463 = vmax.xlane.f32.xlu0 %v2462
    %v2464 = vpop.xlane.xlu0 %2463
    %v2465 = vsub.f32 %v2453, %v2461
    %v2466 = vsub.f32 %v2456, %v2464
    %v2467 = vmul.f32 %v2465, 1.442695
    %v2468 = vpow.pop %v2467
    %v2469 = vmul.f32 %v2466, 1.442695
    %v2470 = vpow.pop %v2469
    %v2471 = vsel %vm344, %v2468, 0.0
    %2472 = vadd.xlane.f32.xlu0 %v2471
    %v2473 = vpop.xlane.xlu0 %2472
    %v2474 = vsel %vm344, %v2470, 0.0
    %2475 = vadd.xlane.f32.xlu0 %v2474
    %v2476 = vpop.xlane.xlu0 %2475
    %v2477 = vpack.c.bf16 %v2470, %v2468
    %2478 = vrot.lane.b32.xlu0 %v342, 64
    %v2479 = vpop.permute.xlu0 %2478
    %v2482 = vsel %vm344, %v2477, 0
    %2484 = vmatprep.subr.bf16.mxu0 0
    %2485 = vmatpush1.bf16.msra.mxu0 %v2479
    %2486 = vmatprep.subr.bf16.mxu0 0
    %2487 = vmatpush1.bf16.msra.mxu0 0
    %2488 = vmatprep.subr.bf16.mxu0 0
    %2489 = vmatpush1.bf16.msra.mxu0 0
    %2490 = vmatprep.subr.bf16.mxu0 0
    %2491 = vmatpush1.bf16.msra.mxu0 0
    %2492 = vmatprep.subr.bf16.mxu0 0
    %2493 = vmatpush1.bf16.msra.mxu0 0
    %2494 = vmatprep.subr.bf16.mxu0 0
    %2495 = vmatpush1.bf16.msra.mxu0 0
    %2496 = vmatprep.subr.bf16.mxu0 0
    %2497 = vmatpush1.bf16.msra.mxu0 0
    %2498 = vmatprep.subr.bf16.mxu0 0
    %2499 = vmatpush1.bf16.msra.mxu0 0
    %2500 = vmatprep.subr.bf16.mxu0 0
    %2501 = vmatpush1.bf16.msra.mxu0 0
    %2502 = vmatprep.subr.bf16.mxu0 0
    %2503 = vmatpush1.bf16.msra.mxu0 0
    %2504 = vmatprep.subr.bf16.mxu0 0
    %2505 = vmatpush1.bf16.msra.mxu0 0
    %2506 = vmatprep.subr.bf16.mxu0 0
    %2507 = vmatpush1.bf16.msra.mxu0 0
    %2508 = vmatprep.subr.bf16.mxu0 0
    %2509 = vmatpush1.bf16.msra.mxu0 0
    %2510 = vmatprep.subr.bf16.mxu0 0
    %2511 = vmatpush1.bf16.msra.mxu0 0
    %2512 = vmatprep.subr.bf16.mxu0 0
    %2513 = vmatpush1.bf16.msra.mxu0 0
    %2514 = vmatprep.subr.bf16.mxu0 0
    %2515 = vmatpush1.bf16.msra.mxu0 0
    %2516 = vmatprep.mubr.bf16.mxu0 0
    %2517 = vmatmul.mubr.bf16.gmra.mrb[0].mxu0 %v2482
    %v2518 = vpop.f32.mrb[0].mxu0
    %v2519 = vadd.f32 0.0, %v2518
    %v2520 = vpop.f32.mrb[0].mxu0
    %v2521 = vpop.f32.mrb[0].mxu0
    %v2522 = vadd.f32 0.0, %v2521
    %v2523 = vpop.f32.mrb[0].mxu0
    %2524 = vdwg.mxu0
    %v2525 = vrcp.pop %v2473
    %v2526 = vrcp.pop %v2476
    %v2527 = vmul.f32 %v2519, %v2525
    %v2528 = vmul.f32 %v2522, %v2526
    %v2529 = vpack.c.bf16 %v2528, %v2527
    %v2530 = vld [vmem:[%s4 + $0x20] sm:$0xf]
    %v2531 = vld [vmem:[%s4 + $0x24] sm:$0xf]
    %v2534 = vunpack.c.l.b16 %v2530
    %v2535 = vunpack.c.l.b16 %v2531
    %v2536 = vpack.c.b16 %v2535, %v2534
    %v2539 = vsel %vm344, %v2529, 0
    %2541 = vmatprep.subr.bf16.mxu0 0
    %2542 = vmatpush1.bf16.msra.mxu0 %v2536
    %2543 = vmatprep.subr.bf16.mxu0 0
    %2544 = vmatpush1.bf16.msra.mxu0 0
    %2545 = vmatprep.subr.bf16.mxu0 0
    %2546 = vmatpush1.bf16.msra.mxu0 0
    %2547 = vmatprep.subr.bf16.mxu0 0
    %2548 = vmatpush1.bf16.msra.mxu0 0
    %2549 = vmatprep.subr.bf16.mxu0 0
    %2550 = vmatpush1.bf16.msra.mxu0 0
    %2551 = vmatprep.subr.bf16.mxu0 0
    %2552 = vmatpush1.bf16.msra.mxu0 0
    %2553 = vmatprep.subr.bf16.mxu0 0
    %2554 = vmatpush1.bf16.msra.mxu0 0
    %2555 = vmatprep.subr.bf16.mxu0 0
    %2556 = vmatpush1.bf16.msra.mxu0 0
    %2557 = vmatprep.subr.bf16.mxu0 0
    %2558 = vmatpush1.bf16.msra.mxu0 0
    %2559 = vmatprep.subr.bf16.mxu0 0
    %2560 = vmatpush1.bf16.msra.mxu0 0
    %2561 = vmatprep.subr.bf16.mxu0 0
    %2562 = vmatpush1.bf16.msra.mxu0 0
    %2563 = vmatprep.subr.bf16.mxu0 0
    %2564 = vmatpush1.bf16.msra.mxu0 0
    %2565 = vmatprep.subr.bf16.mxu0 0
    %2566 = vmatpush1.bf16.msra.mxu0 0
    %2567 = vmatprep.subr.bf16.mxu0 0
    %2568 = vmatpush1.bf16.msra.mxu0 0
    %2569 = vmatprep.subr.bf16.mxu0 0
    %2570 = vmatpush1.bf16.msra.mxu0 0
    %2571 = vmatprep.subr.bf16.mxu0 0
    %2572 = vmatpush1.bf16.msra.mxu0 0
    %2573 = vmatprep.mubr.bf16.mxu0 0
    %2574 = vmatmul.mubr.bf16.gmra.mrb[0].mxu0 %v2539
    %v2575 = vpop.f32.mrb[0].mxu0
    %v2576 = vadd.f32 0.0, %v2575
    %v2577 = vpop.f32.mrb[0].mxu0
    %v2578 = vpop.f32.mrb[0].mxu0
    %v2579 = vadd.f32 0.0, %v2578
    %v2580 = vpop.f32.mrb[0].mxu0
    %2581 = vdwg.mxu0
    %v2582 = vadd.f32 %v2407, %v2576
    %v2583 = vadd.f32 %v2408, %v2579
    %2584 = vrot.lane.b32.xlu0 %v300, 48
    %v2585 = vpop.permute.xlu0 %2584
    %2587 = vrot.lane.b32.xlu0 %v338, 112
    %v2588 = vpop.permute.xlu0 %2587
    %v2591 = vsel %vm344, %v2585, 0
    %2593 = vmatprep.subr.bf16.mxu0 0
    %2594 = vmatpush1.bf16.msra.mxu0 %v2588
    %2595 = vmatprep.subr.bf16.mxu0 0
    %2596 = vmatpush1.bf16.msra.mxu0 0
    %2597 = vmatprep.subr.bf16.mxu0 0
    %2598 = vmatpush1.bf16.msra.mxu0 0
    %2599 = vmatprep.subr.bf16.mxu0 0
    %2600 = vmatpush1.bf16.msra.mxu0 0
    %2601 = vmatprep.subr.bf16.mxu0 0
    %2602 = vmatpush1.bf16.msra.mxu0 0
    %2603 = vmatprep.subr.bf16.mxu0 0
    %2604 = vmatpush1.bf16.msra.mxu0 0
    %2605 = vmatprep.subr.bf16.mxu0 0
    %2606 = vmatpush1.bf16.msra.mxu0 0
    %2607 = vmatprep.subr.bf16.mxu0 0
    %2608 = vmatpush1.bf16.msra.mxu0 0
    %2609 = vmatprep.subr.bf16.mxu0 0
    %2610 = vmatpush1.bf16.msra.mxu0 0
    %2611 = vmatprep.subr.bf16.mxu0 0
    %2612 = vmatpush1.bf16.msra.mxu0 0
    %2613 = vmatprep.subr.bf16.mxu0 0
    %2614 = vmatpush1.bf16.msra.mxu0 0
    %2615 = vmatprep.subr.bf16.mxu0 0
    %2616 = vmatpush1.bf16.msra.mxu0 0
    %2617 = vmatprep.subr.bf16.mxu0 0
    %2618 = vmatpush1.bf16.msra.mxu0 0
    %2619 = vmatprep.subr.bf16.mxu0 0
    %2620 = vmatpush1.bf16.msra.mxu0 0
    %2621 = vmatprep.subr.bf16.mxu0 0
    %2622 = vmatpush1.bf16.msra.mxu0 0
    %2623 = vmatprep.subr.bf16.mxu0 0
    %2624 = vmatpush1.bf16.msra.mxu0 0
    %2625 = vmatprep.mubr.bf16.mxu0 0
    %2626 = vmatmul.mubr.bf16.gmra.mrb[0].mxu0 %v2591
    %v2627 = vpop.f32.mrb[0].mxu0
    %v2628 = vadd.f32 0.0, %v2627
    %v2629 = vpop.f32.mrb[0].mxu0
    %v2630 = vpop.f32.mrb[0].mxu0
    %v2631 = vadd.f32 0.0, %v2630
    %v2632 = vpop.f32.mrb[0].mxu0
    %2633 = vdwg.mxu0
    %v2634 = vsel %vm344, %v2628, -inf
    %2635 = vmax.xlane.f32.xlu0 %v2634
    %v2636 = vpop.xlane.xlu0 %2635
    %v2637 = vsel %vm344, %v2631, -inf
    %2638 = vmax.xlane.f32.xlu0 %v2637
    %v2639 = vpop.xlane.xlu0 %2638
    %v2640 = vsub.f32 %v2628, %v2636
    %v2641 = vsub.f32 %v2631, %v2639
    %v2642 = vmul.f32 %v2640, 1.442695
    %v2643 = vpow.pop %v2642
    %v2644 = vmul.f32 %v2641, 1.442695
    %v2645 = vpow.pop %v2644
    %v2646 = vsel %vm344, %v2643, 0.0
    %2647 = vadd.xlane.f32.xlu0 %v2646
    %v2648 = vpop.xlane.xlu0 %2647
    %v2649 = vsel %vm344, %v2645, 0.0
    %2650 = vadd.xlane.f32.xlu0 %v2649
    %v2651 = vpop.xlane.xlu0 %2650
    %v2652 = vpack.c.bf16 %v2645, %v2643
    %2653 = vrot.lane.b32.xlu0 %v342, 48
    %v2654 = vpop.permute.xlu0 %2653
    %v2657 = vsel %vm344, %v2652, 0
    %2659 = vmatprep.subr.bf16.mxu0 0
    %2660 = vmatpush1.bf16.msra.mxu0 %v2654
    %2661 = vmatprep.subr.bf16.mxu0 0
    %2662 = vmatpush1.bf16.msra.mxu0 0
    %2663 = vmatprep.subr.bf16.mxu0 0
    %2664 = vmatpush1.bf16.msra.mxu0 0
    %2665 = vmatprep.subr.bf16.mxu0 0
    %2666 = vmatpush1.bf16.msra.mxu0 0
    %2667 = vmatprep.subr.bf16.mxu0 0
    %2668 = vmatpush1.bf16.msra.mxu0 0
    %2669 = vmatprep.subr.bf16.mxu0 0
    %2670 = vmatpush1.bf16.msra.mxu0 0
    %2671 = vmatprep.subr.bf16.mxu0 0
    %2672 = vmatpush1.bf16.msra.mxu0 0
    %2673 = vmatprep.subr.bf16.mxu0 0
    %2674 = vmatpush1.bf16.msra.mxu0 0
    %2675 = vmatprep.subr.bf16.mxu0 0
    %2676 = vmatpush1.bf16.msra.mxu0 0
    %2677 = vmatprep.subr.bf16.mxu0 0
    %2678 = vmatpush1.bf16.msra.mxu0 0
    %2679 = vmatprep.subr.bf16.mxu0 0
    %2680 = vmatpush1.bf16.msra.mxu0 0
    %2681 = vmatprep.subr.bf16.mxu0 0
    %2682 = vmatpush1.bf16.msra.mxu0 0
    %2683 = vmatprep.subr.bf16.mxu0 0
    %2684 = vmatpush1.bf16.msra.mxu0 0
    %2685 = vmatprep.subr.bf16.mxu0 0
    %2686 = vmatpush1.bf16.msra.mxu0 0
    %2687 = vmatprep.subr.bf16.mxu0 0
    %2688 = vmatpush1.bf16.msra.mxu0 0
    %2689 = vmatprep.subr.bf16.mxu0 0
    %2690 = vmatpush1.bf16.msra.mxu0 0
    %2691 = vmatprep.mubr.bf16.mxu0 0
    %2692 = vmatmul.mubr.bf16.gmra.mrb[0].mxu0 %v2657
    %v2693 = vpop.f32.mrb[0].mxu0
    %v2694 = vadd.f32 0.0, %v2693
    %v2695 = vpop.f32.mrb[0].mxu0
    %v2696 = vpop.f32.mrb[0].mxu0
    %v2697 = vadd.f32 0.0, %v2696
    %v2698 = vpop.f32.mrb[0].mxu0
    %2699 = vdwg.mxu0
    %v2700 = vrcp.pop %v2648
    %v2701 = vrcp.pop %v2651
    %v2702 = vmul.f32 %v2694, %v2700
    %v2703 = vmul.f32 %v2697, %v2701
    %v2704 = vpack.c.bf16 %v2703, %v2702
    %v2705 = vld [vmem:[%s4 + $0x28] sm:$0xf]
    %v2706 = vld [vmem:[%s4 + $0x2c] sm:$0xf]
    %v2709 = vunpack.c.l.b16 %v2705
    %v2710 = vunpack.c.l.b16 %v2706
    %v2711 = vpack.c.b16 %v2710, %v2709
    %v2714 = vsel %vm344, %v2704, 0
    %2716 = vmatprep.subr.bf16.mxu0 0
    %2717 = vmatpush1.bf16.msra.mxu0 %v2711
    %2718 = vmatprep.subr.bf16.mxu0 0
    %2719 = vmatpush1.bf16.msra.mxu0 0
    %2720 = vmatprep.subr.bf16.mxu0 0
    %2721 = vmatpush1.bf16.msra.mxu0 0
    %2722 = vmatprep.subr.bf16.mxu0 0
    %2723 = vmatpush1.bf16.msra.mxu0 0
    %2724 = vmatprep.subr.bf16.mxu0 0
    %2725 = vmatpush1.bf16.msra.mxu0 0
    %2726 = vmatprep.subr.bf16.mxu0 0
    %2727 = vmatpush1.bf16.msra.mxu0 0
    %2728 = vmatprep.subr.bf16.mxu0 0
    %2729 = vmatpush1.bf16.msra.mxu0 0
    %2730 = vmatprep.subr.bf16.mxu0 0
    %2731 = vmatpush1.bf16.msra.mxu0 0
    %2732 = vmatprep.subr.bf16.mxu0 0
    %2733 = vmatpush1.bf16.msra.mxu0 0
    %2734 = vmatprep.subr.bf16.mxu0 0
    %2735 = vmatpush1.bf16.msra.mxu0 0
    %2736 = vmatprep.subr.bf16.mxu0 0
    %2737 = vmatpush1.bf16.msra.mxu0 0
    %2738 = vmatprep.subr.bf16.mxu0 0
    %2739 = vmatpush1.bf16.msra.mxu0 0
    %2740 = vmatprep.subr.bf16.mxu0 0
    %2741 = vmatpush1.bf16.msra.mxu0 0
    %2742 = vmatprep.subr.bf16.mxu0 0
    %2743 = vmatpush1.bf16.msra.mxu0 0
    %2744 = vmatprep.subr.bf16.mxu0 0
    %2745 = vmatpush1.bf16.msra.mxu0 0
    %2746 = vmatprep.subr.bf16.mxu0 0
    %2747 = vmatpush1.bf16.msra.mxu0 0
    %2748 = vmatprep.mubr.bf16.mxu0 0
    %2749 = vmatmul.mubr.bf16.gmra.mrb[0].mxu0 %v2714
    %v2750 = vpop.f32.mrb[0].mxu0
    %v2751 = vadd.f32 0.0, %v2750
    %v2752 = vpop.f32.mrb[0].mxu0
    %v2753 = vpop.f32.mrb[0].mxu0
    %v2754 = vadd.f32 0.0, %v2753
    %v2755 = vpop.f32.mrb[0].mxu0
    %2756 = vdwg.mxu0
    %v2757 = vadd.f32 %v2582, %v2751
    %v2758 = vadd.f32 %v2583, %v2754
    %2759 = vrot.lane.b32.xlu0 %v300, 32
    %v2760 = vpop.permute.xlu0 %2759
    %2762 = vrot.lane.b32.xlu0 %v339, 112
    %v2763 = vpop.permute.xlu0 %2762
    %v2766 = vsel %vm344, %v2760, 0
    %2768 = vmatprep.subr.bf16.mxu0 0
    %2769 = vmatpush1.bf16.msra.mxu0 %v2763
    %2770 = vmatprep.subr.bf16.mxu0 0
    %2771 = vmatpush1.bf16.msra.mxu0 0
    %2772 = vmatprep.subr.bf16.mxu0 0
    %2773 = vmatpush1.bf16.msra.mxu0 0
    %2774 = vmatprep.subr.bf16.mxu0 0
    %2775 = vmatpush1.bf16.msra.mxu0 0
    %2776 = vmatprep.subr.bf16.mxu0 0
    %2777 = vmatpush1.bf16.msra.mxu0 0
    %2778 = vmatprep.subr.bf16.mxu0 0
    %2779 = vmatpush1.bf16.msra.mxu0 0
    %2780 = vmatprep.subr.bf16.mxu0 0
    %2781 = vmatpush1.bf16.msra.mxu0 0
    %2782 = vmatprep.subr.bf16.mxu0 0
    %2783 = vmatpush1.bf16.msra.mxu0 0
    %2784 = vmatprep.subr.bf16.mxu0 0
    %2785 = vmatpush1.bf16.msra.mxu0 0
    %2786 = vmatprep.subr.bf16.mxu0 0
    %2787 = vmatpush1.bf16.msra.mxu0 0
    %2788 = vmatprep.subr.bf16.mxu0 0
    %2789 = vmatpush1.bf16.msra.mxu0 0
    %2790 = vmatprep.subr.bf16.mxu0 0
    %2791 = vmatpush1.bf16.msra.mxu0 0
    %2792 = vmatprep.subr.bf16.mxu0 0
    %2793 = vmatpush1.bf16.msra.mxu0 0
    %2794 = vmatprep.subr.bf16.mxu0 0
    %2795 = vmatpush1.bf16.msra.mxu0 0
    %2796 = vmatprep.subr.bf16.mxu0 0
    %2797 = vmatpush1.bf16.msra.mxu0 0
    %2798 = vmatprep.subr.bf16.mxu0 0
    %2799 = vmatpush1.bf16.msra.mxu0 0
    %2800 = vmatprep.mubr.bf16.mxu0 0
    %2801 = vmatmul.mubr.bf16.gmra.mrb[0].mxu0 %v2766
    %v2802 = vpop.f32.mrb[0].mxu0
    %v2803 = vadd.f32 0.0, %v2802
    %v2804 = vpop.f32.mrb[0].mxu0
    %v2805 = vpop.f32.mrb[0].mxu0
    %v2806 = vadd.f32 0.0, %v2805
    %v2807 = vpop.f32.mrb[0].mxu0
    %2808 = vdwg.mxu0
    %v2809 = vsel %vm344, %v2803, -inf
    %2810 = vmax.xlane.f32.xlu0 %v2809
    %v2811 = vpop.xlane.xlu0 %2810
    %v2812 = vsel %vm344, %v2806, -inf
    %2813 = vmax.xlane.f32.xlu0 %v2812
    %v2814 = vpop.xlane.xlu0 %2813
    %v2815 = vsub.f32 %v2803, %v2811
    %v2816 = vsub.f32 %v2806, %v2814
    %v2817 = vmul.f32 %v2815, 1.442695
    %v2818 = vpow.pop %v2817
    %v2819 = vmul.f32 %v2816, 1.442695
    %v2820 = vpow.pop %v2819
    %v2821 = vsel %vm344, %v2818, 0.0
    %2822 = vadd.xlane.f32.xlu0 %v2821
    %v2823 = vpop.xlane.xlu0 %2822
    %v2824 = vsel %vm344, %v2820, 0.0
    %2825 = vadd.xlane.f32.xlu0 %v2824
    %v2826 = vpop.xlane.xlu0 %2825
    %v2827 = vpack.c.bf16 %v2820, %v2818
    %2828 = vrot.lane.b32.xlu0 %v342, 32
    %v2829 = vpop.permute.xlu0 %2828
    %v2832 = vsel %vm344, %v2827, 0
    %2834 = vmatprep.subr.bf16.mxu0 0
    %2835 = vmatpush1.bf16.msra.mxu0 %v2829
    %2836 = vmatprep.subr.bf16.mxu0 0
    %2837 = vmatpush1.bf16.msra.mxu0 0
    %2838 = vmatprep.subr.bf16.mxu0 0
    %2839 = vmatpush1.bf16.msra.mxu0 0
    %2840 = vmatprep.subr.bf16.mxu0 0
    %2841 = vmatpush1.bf16.msra.mxu0 0
    %2842 = vmatprep.subr.bf16.mxu0 0
    %2843 = vmatpush1.bf16.msra.mxu0 0
    %2844 = vmatprep.subr.bf16.mxu0 0
    %2845 = vmatpush1.bf16.msra.mxu0 0
    %2846 = vmatprep.subr.bf16.mxu0 0
    %2847 = vmatpush1.bf16.msra.mxu0 0
    %2848 = vmatprep.subr.bf16.mxu0 0
    %2849 = vmatpush1.bf16.msra.mxu0 0
    %2850 = vmatprep.subr.bf16.mxu0 0
    %2851 = vmatpush1.bf16.msra.mxu0 0
    %2852 = vmatprep.subr.bf16.mxu0 0
    %2853 = vmatpush1.bf16.msra.mxu0 0
    %2854 = vmatprep.subr.bf16.mxu0 0
    %2855 = vmatpush1.bf16.msra.mxu0 0
    %2856 = vmatprep.subr.bf16.mxu0 0
    %2857 = vmatpush1.bf16.msra.mxu0 0
    %2858 = vmatprep.subr.bf16.mxu0 0
    %2859 = vmatpush1.bf16.msra.mxu0 0
    %2860 = vmatprep.subr.bf16.mxu0 0
    %2861 = vmatpush1.bf16.msra.mxu0 0
    %2862 = vmatprep.subr.bf16.mxu0 0
    %2863 = vmatpush1.bf16.msra.mxu0 0
    %2864 = vmatprep.subr.bf16.mxu0 0
    %2865 = vmatpush1.bf16.msra.mxu0 0
    %2866 = vmatprep.mubr.bf16.mxu0 0
    %2867 = vmatmul.mubr.bf16.gmra.mrb[0].mxu0 %v2832
    %v2868 = vpop.f32.mrb[0].mxu0
    %v2869 = vadd.f32 0.0, %v2868
    %v2870 = vpop.f32.mrb[0].mxu0
    %v2871 = vpop.f32.mrb[0].mxu0
    %v2872 = vadd.f32 0.0, %v2871
    %v2873 = vpop.f32.mrb[0].mxu0
    %2874 = vdwg.mxu0
    %v2875 = vrcp.pop %v2823
    %v2876 = vrcp.pop %v2826
    %v2877 = vmul.f32 %v2869, %v2875
    %v2878 = vmul.f32 %v2872, %v2876
    %v2879 = vpack.c.bf16 %v2878, %v2877
    %v2880 = vld [vmem:[%s4 + $0x30] sm:$0xf]
    %v2881 = vld [vmem:[%s4 + $0x34] sm:$0xf]
    %v2884 = vunpack.c.l.b16 %v2880
    %v2885 = vunpack.c.l.b16 %v2881
    %v2886 = vpack.c.b16 %v2885, %v2884
    %v2889 = vsel %vm344, %v2879, 0
    %2891 = vmatprep.subr.bf16.mxu0 0
    %2892 = vmatpush1.bf16.msra.mxu0 %v2886
    %2893 = vmatprep.subr.bf16.mxu0 0
    %2894 = vmatpush1.bf16.msra.mxu0 0
    %2895 = vmatprep.subr.bf16.mxu0 0
    %2896 = vmatpush1.bf16.msra.mxu0 0
    %2897 = vmatprep.subr.bf16.mxu0 0
    %2898 = vmatpush1.bf16.msra.mxu0 0
    %2899 = vmatprep.subr.bf16.mxu0 0
    %2900 = vmatpush1.bf16.msra.mxu0 0
    %2901 = vmatprep.subr.bf16.mxu0 0
    %2902 = vmatpush1.bf16.msra.mxu0 0
    %2903 = vmatprep.subr.bf16.mxu0 0
    %2904 = vmatpush1.bf16.msra.mxu0 0
    %2905 = vmatprep.subr.bf16.mxu0 0
    %2906 = vmatpush1.bf16.msra.mxu0 0
    %2907 = vmatprep.subr.bf16.mxu0 0
    %2908 = vmatpush1.bf16.msra.mxu0 0
    %2909 = vmatprep.subr.bf16.mxu0 0
    %2910 = vmatpush1.bf16.msra.mxu0 0
    %2911 = vmatprep.subr.bf16.mxu0 0
    %2912 = vmatpush1.bf16.msra.mxu0 0
    %2913 = vmatprep.subr.bf16.mxu0 0
    %2914 = vmatpush1.bf16.msra.mxu0 0
    %2915 = vmatprep.subr.bf16.mxu0 0
    %2916 = vmatpush1.bf16.msra.mxu0 0
    %2917 = vmatprep.subr.bf16.mxu0 0
    %2918 = vmatpush1.bf16.msra.mxu0 0
    %2919 = vmatprep.subr.bf16.mxu0 0
    %2920 = vmatpush1.bf16.msra.mxu0 0
    %2921 = vmatprep.subr.bf16.mxu0 0
    %2922 = vmatpush1.bf16.msra.mxu0 0
    %2923 = vmatprep.mubr.bf16.mxu0 0
    %2924 = vmatmul.mubr.bf16.gmra.mrb[0].mxu0 %v2889
    %v2925 = vpop.f32.mrb[0].mxu0
    %v2926 = vadd.f32 0.0, %v2925
    %v2927 = vpop.f32.mrb[0].mxu0
    %v2928 = vpop.f32.mrb[0].mxu0
    %v2929 = vadd.f32 0.0, %v2928
    %v2930 = vpop.f32.mrb[0].mxu0
    %2931 = vdwg.mxu0
    %v2932 = vadd.f32 %v2757, %v2926
    %v2933 = vadd.f32 %v2758, %v2929
    %2934 = vrot.lane.b32.xlu0 %v300, 16
    %v2935 = vpop.permute.xlu0 %2934
    %2937 = vrot.lane.b32.xlu0 %v340, 112
    %v2938 = vpop.permute.xlu0 %2937
    %v2941 = vsel %vm344, %v2935, 0
    %2943 = vmatprep.subr.bf16.mxu0 0
    %2944 = vmatpush1.bf16.msra.mxu0 %v2938
    %2945 = vmatprep.subr.bf16.mxu0 0
    %2946 = vmatpush1.bf16.msra.mxu0 0
    %2947 = vmatprep.subr.bf16.mxu0 0
    %2948 = vmatpush1.bf16.msra.mxu0 0
    %2949 = vmatprep.subr.bf16.mxu0 0
    %2950 = vmatpush1.bf16.msra.mxu0 0
    %2951 = vmatprep.subr.bf16.mxu0 0
    %2952 = vmatpush1.bf16.msra.mxu0 0
    %2953 = vmatprep.subr.bf16.mxu0 0
    %2954 = vmatpush1.bf16.msra.mxu0 0
    %2955 = vmatprep.subr.bf16.mxu0 0
    %2956 = vmatpush1.bf16.msra.mxu0 0
    %2957 = vmatprep.subr.bf16.mxu0 0
    %2958 = vmatpush1.bf16.msra.mxu0 0
    %2959 = vmatprep.subr.bf16.mxu0 0
    %2960 = vmatpush1.bf16.msra.mxu0 0
    %2961 = vmatprep.subr.bf16.mxu0 0
    %2962 = vmatpush1.bf16.msra.mxu0 0
    %2963 = vmatprep.subr.bf16.mxu0 0
    %2964 = vmatpush1.bf16.msra.mxu0 0
    %2965 = vmatprep.subr.bf16.mxu0 0
    %2966 = vmatpush1.bf16.msra.mxu0 0
    %2967 = vmatprep.subr.bf16.mxu0 0
    %2968 = vmatpush1.bf16.msra.mxu0 0
    %2969 = vmatprep.subr.bf16.mxu0 0
    %2970 = vmatpush1.bf16.msra.mxu0 0
    %2971 = vmatprep.subr.bf16.mxu0 0
    %2972 = vmatpush1.bf16.msra.mxu0 0
    %2973 = vmatprep.subr.bf16.mxu0 0
    %2974 = vmatpush1.bf16.msra.mxu0 0
    %2975 = vmatprep.mubr.bf16.mxu0 0
    %2976 = vmatmul.mubr.bf16.gmra.mrb[0].mxu0 %v2941
    %v2977 = vpop.f32.mrb[0].mxu0
    %v2978 = vadd.f32 0.0, %v2977
    %v2979 = vpop.f32.mrb[0].mxu0
    %v2980 = vpop.f32.mrb[0].mxu0
    %v2981 = vadd.f32 0.0, %v2980
    %v2982 = vpop.f32.mrb[0].mxu0
    %2983 = vdwg.mxu0
    %v2984 = vsel %vm344, %v2978, -inf
    %2985 = vmax.xlane.f32.xlu0 %v2984
    %v2986 = vpop.xlane.xlu0 %2985
    %v2987 = vsel %vm344, %v2981, -inf
    %2988 = vmax.xlane.f32.xlu0 %v2987
    %v2989 = vpop.xlane.xlu0 %2988
    %v2990 = vsub.f32 %v2978, %v2986
    %v2991 = vsub.f32 %v2981, %v2989
    %v2992 = vmul.f32 %v2990, 1.442695
    %v2993 = vpow.pop %v2992
    %v2994 = vmul.f32 %v2991, 1.442695
    %v2995 = vpow.pop %v2994
    %v2996 = vsel %vm344, %v2993, 0.0
    %2997 = vadd.xlane.f32.xlu0 %v2996
    %v2998 = vpop.xlane.xlu0 %2997
    %v2999 = vsel %vm344, %v2995, 0.0
    %3000 = vadd.xlane.f32.xlu0 %v2999
    %v3001 = vpop.xlane.xlu0 %3000
    %v3002 = vpack.c.bf16 %v2995, %v2993
    %3003 = vrot.lane.b32.xlu0 %v342, 16
    %v3004 = vpop.permute.xlu0 %3003
    %v3007 = vsel %vm344, %v3002, 0
    %3009 = vmatprep.subr.bf16.mxu0 0
    %3010 = vmatpush1.bf16.msra.mxu0 %v3004
    %3011 = vmatprep.subr.bf16.mxu0 0
    %3012 = vmatpush1.bf16.msra.mxu0 0
    %3013 = vmatprep.subr.bf16.mxu0 0
    %3014 = vmatpush1.bf16.msra.mxu0 0
    %3015 = vmatprep.subr.bf16.mxu0 0
    %3016 = vmatpush1.bf16.msra.mxu0 0
    %3017 = vmatprep.subr.bf16.mxu0 0
    %3018 = vmatpush1.bf16.msra.mxu0 0
    %3019 = vmatprep.subr.bf16.mxu0 0
    %3020 = vmatpush1.bf16.msra.mxu0 0
    %3021 = vmatprep.subr.bf16.mxu0 0
    %3022 = vmatpush1.bf16.msra.mxu0 0
    %3023 = vmatprep.subr.bf16.mxu0 0
    %3024 = vmatpush1.bf16.msra.mxu0 0
    %3025 = vmatprep.subr.bf16.mxu0 0
    %3026 = vmatpush1.bf16.msra.mxu0 0
    %3027 = vmatprep.subr.bf16.mxu0 0
    %3028 = vmatpush1.bf16.msra.mxu0 0
    %3029 = vmatprep.subr.bf16.mxu0 0
    %3030 = vmatpush1.bf16.msra.mxu0 0
    %3031 = vmatprep.subr.bf16.mxu0 0
    %3032 = vmatpush1.bf16.msra.mxu0 0
    %3033 = vmatprep.subr.bf16.mxu0 0
    %3034 = vmatpush1.bf16.msra.mxu0 0
    %3035 = vmatprep.subr.bf16.mxu0 0
    %3036 = vmatpush1.bf16.msra.mxu0 0
    %3037 = vmatprep.subr.bf16.mxu0 0
    %3038 = vmatpush1.bf16.msra.mxu0 0
    %3039 = vmatprep.subr.bf16.mxu0 0
    %3040 = vmatpush1.bf16.msra.mxu0 0
    %3041 = vmatprep.mubr.bf16.mxu0 0
    %3042 = vmatmul.mubr.bf16.gmra.mrb[0].mxu0 %v3007
    %v3043 = vpop.f32.mrb[0].mxu0
    %v3044 = vadd.f32 0.0, %v3043
    %v3045 = vpop.f32.mrb[0].mxu0
    %v3046 = vpop.f32.mrb[0].mxu0
    %v3047 = vadd.f32 0.0, %v3046
    %v3048 = vpop.f32.mrb[0].mxu0
    %3049 = vdwg.mxu0
    %v3050 = vrcp.pop %v2998
    %v3051 = vrcp.pop %v3001
    %v3052 = vmul.f32 %v3044, %v3050
    %v3053 = vmul.f32 %v3047, %v3051
    %v3054 = vpack.c.bf16 %v3053, %v3052
    %v3055 = vld [vmem:[%s4 + $0x38] sm:$0xf]
    %v3056 = vld [vmem:[%s4 + $0x3c] sm:$0xf]
    %v3059 = vunpack.c.l.b16 %v3055
    %v3060 = vunpack.c.l.b16 %v3056
    %v3061 = vpack.c.b16 %v3060, %v3059
    %v3064 = vsel %vm344, %v3054, 0
    %3066 = vmatprep.subr.bf16.mxu0 0
    %3067 = vmatpush1.bf16.msra.mxu0 %v3061
    %3068 = vmatprep.subr.bf16.mxu0 0
    %3069 = vmatpush1.bf16.msra.mxu0 0
    %3070 = vmatprep.subr.bf16.mxu0 0
    %3071 = vmatpush1.bf16.msra.mxu0 0
    %3072 = vmatprep.subr.bf16.mxu0 0
    %3073 = vmatpush1.bf16.msra.mxu0 0
    %3074 = vmatprep.subr.bf16.mxu0 0
    %3075 = vmatpush1.bf16.msra.mxu0 0
    %3076 = vmatprep.subr.bf16.mxu0 0
    %3077 = vmatpush1.bf16.msra.mxu0 0
    %3078 = vmatprep.subr.bf16.mxu0 0
    %3079 = vmatpush1.bf16.msra.mxu0 0
    %3080 = vmatprep.subr.bf16.mxu0 0
    %3081 = vmatpush1.bf16.msra.mxu0 0
    %3082 = vmatprep.subr.bf16.mxu0 0
    %3083 = vmatpush1.bf16.msra.mxu0 0
    %3084 = vmatprep.subr.bf16.mxu0 0
    %3085 = vmatpush1.bf16.msra.mxu0 0
    %3086 = vmatprep.subr.bf16.mxu0 0
    %3087 = vmatpush1.bf16.msra.mxu0 0
    %3088 = vmatprep.subr.bf16.mxu0 0
    %3089 = vmatpush1.bf16.msra.mxu0 0
    %3090 = vmatprep.subr.bf16.mxu0 0
    %3091 = vmatpush1.bf16.msra.mxu0 0
    %3092 = vmatprep.subr.bf16.mxu0 0
    %3093 = vmatpush1.bf16.msra.mxu0 0
    %3094 = vmatprep.subr.bf16.mxu0 0
    %3095 = vmatpush1.bf16.msra.mxu0 0
    %3096 = vmatprep.subr.bf16.mxu0 0
    %3097 = vmatpush1.bf16.msra.mxu0 0
    %3098 = vmatprep.mubr.bf16.mxu0 0
    %3099 = vmatmul.mubr.bf16.gmra.mrb[0].mxu0 %v3064
    %v3100 = vpop.f32.mrb[0].mxu0
    %v3101 = vadd.f32 0.0, %v3100
    %v3102 = vpop.f32.mrb[0].mxu0
    %v3103 = vpop.f32.mrb[0].mxu0
    %v3104 = vadd.f32 0.0, %v3103
    %v3105 = vpop.f32.mrb[0].mxu0
    %3106 = vdwg.mxu0
    %v3107 = vadd.f32 %v2932, %v3101
    %v3108 = vadd.f32 %v2933, %v3104
    %v3109 = vadd.f32 %v3107, %v1710
    %v3110 = vadd.f32 %v3108, %v1710
    %s3111 = scalar_lea.vmem [#allocation2], 16
    %3112 = vst [vmem:[%s3111] sm:$0xff] %v3109
    %3113 = vst [vmem:[%s3111 + $0x8] sm:$0xff] %v3110
    // Predicated region
    $region26: #{cross_attention.1} parent=1 // pred_check
      _
    $region27: #{cross_attention.1} parent=1 // pred_check_branch
      %3115 = sbr.rel (0) target = $region29
    $region28: #{cross_attention.1} parent=1 // pred_region
      %s3117 = ssub.s32 512, 512
      %3118 = vsyncadd [#allocation3], %s3117
      %s3119 = sshll.u32 [#allocation2], 4
      %s3120 = int_to_ptr.vmem [resolvable:$true] %s3119
      %3125 = dma.vmem_to_hbm [thread:$0]  %s3120, 512, %s6, [#allocation3], 128, 128, 8
    $region29: #{cross_attention.1} parent=1 // pred_fallthru
      _
    // Predicated region
    $region30: #{cross_attention.1} parent=1 // pred_check
      _
    $region31: #{cross_attention.1} parent=1 // pred_check_branch
      %3127 = sbr.rel (0) target = $region33
    $region32: #{cross_attention.1} parent=1 // pred_region
      %3128 = dma.done [#allocation3], 512
    $region33: #{cross_attention.1} parent=1 // pred_fallthru
      _
    %3129 = vsyncpa [#allocation3], 1

</llo_original>
